<compile_context>
chip_gen: v7x
topology: tpu7x:2x2x1
jax: 0.10.0
libtpu: 0.0.40
codegen_flags: <defaults>
</compile_context>

<pallas_src>
import jax
import jax.numpy as jnp
from jax.experimental import pallas as pl
from jax.experimental.pallas import tpu as pltpu

# ----------------------------- config ---------------------------------------
B = 2            # batch
S_ENC = 8        # encoder sequence length
S_DEC = 8        # decoder sequence length
H = 32           # hidden size
N_HEADS = 2
D_HEAD = H // N_HEADS
FFN = 4 * H
VOCAB_ENC = 64
VOCAB_DEC = 64
NUM_LABELS = 4
SCALE = 1.0 / (D_HEAD ** 0.5)


# ----------------------------- kernel helpers --------------------------------


def _full_spec(shape):
    """Whole-array block for a grid=(1,) pallas_call."""
    return pl.BlockSpec(shape, lambda *_: (0,) * len(shape))


def _ln(x, g, b, eps=1e-5):
    mu = jnp.mean(x, axis=-1, keepdims=True)
    var = jnp.mean((x - mu) * (x - mu), axis=-1, keepdims=True)
    return (x - mu) * jax.lax.rsqrt(var + eps) * g + b


def _mha_attend(q2, k2, v2, wo, bo, mask_rows, scr_ref, nb, sq, sk):
    """Multi-head attention on flattened activations.

    q2: [nb*sq, H]; k2, v2: [nb*sk, H]; mask_rows[b]: additive mask
    broadcastable to [sq, sk].  Per-head outputs are stored into scr_ref
    ([nb*sq, H]) so the output projection runs on one dense slab.
    Returns the projected attention output [nb*sq, H].
    """
    for b in range(nb):
        qb = q2[b * sq:(b + 1) * sq, :]
        kb = k2[b * sk:(b + 1) * sk, :]
        vb = v2[b * sk:(b + 1) * sk, :]
        for h in range(N_HEADS):
            lo = h * D_HEAD
            hi = lo + D_HEAD
            qh = qb[:, lo:hi]
            kh = kb[:, lo:hi]
            vh = vb[:, lo:hi]
            s = jax.lax.dot_general(                    # q @ k.T on the MXU
                qh, kh, dimension_numbers=(((1,), (1,)), ((), ())),
                preferred_element_type=jnp.float32) * SCALE
            s = s + mask_rows[b]
            m = jnp.max(s, axis=-1, keepdims=True)
            p = jnp.exp(s - m)
            p = p * pl.reciprocal(jnp.sum(p, axis=-1, keepdims=True), approx=True)
            scr_ref[b * sq:(b + 1) * sq, lo:hi] = jnp.dot(
                p, vh, preferred_element_type=jnp.float32)
    return jnp.dot(scr_ref[...], wo, preferred_element_type=jnp.float32) + bo


# ----------------------------- fused Pallas kernels ---------------------------


def _encoder_kernel(x_ref, mask_ref,
                    emb_g_ref, emb_b_ref,
                    wqkv_ref, bqkv_ref, wo_ref, bo_ref,
                    ln1_g_ref, ln1_b_ref,
                    w1_ref, b1_ref, w2_ref, b2_ref,
                    ln2_g_ref, ln2_b_ref,
                    o_ref, scr_ref):
    # embedding layernorm (post-LN BERT style)
    x = _ln(x_ref[...], emb_g_ref[...], emb_b_ref[...])          # [B*S, H]
    # fused QKV projection
    qkv = jnp.dot(x, wqkv_ref[...], preferred_element_type=jnp.float32) + bqkv_ref[...]
    q, k, v = qkv[:, 0:H], qkv[:, H:2 * H], qkv[:, 2 * H:3 * H]
    # additive key mask built in-kernel from the [B, S] mask
    maskv = mask_ref[...]
    mask_rows = [(1.0 - maskv[b:b + 1, :]) * -1e9 for b in range(B)]
    attn = _mha_attend(q, k, v, wo_ref[...], bo_ref[...], mask_rows,
                       scr_ref, B, S_ENC, S_ENC)
    x = _ln(x + attn, ln1_g_ref[...], ln1_b_ref[...])
    # FFN
    h = jnp.dot(x, w1_ref[...], preferred_element_type=jnp.float32) + b1_ref[...]
    # TODO(synk): HF BERT uses exact (erf) GELU; tanh approximation used here.
    h = jax.nn.gelu(h, approximate=True)
    h = jnp.dot(h, w2_ref[...], preferred_element_type=jnp.float32) + b2_ref[...]
    o_ref[...] = _ln(x + h, ln2_g_ref[...], ln2_b_ref[...])


def _decoder_kernel(x_ref, dmask_ref, enc_ref, emask_ref,
                    ln1_g_ref, ln1_b_ref,
                    wqkv_s_ref, bqkv_s_ref, wo_s_ref, bo_s_ref,
                    lnx_g_ref, lnx_b_ref,
                    wq_c_ref, bq_c_ref, wkv_c_ref, bkv_c_ref, wo_c_ref, bo_c_ref,
                    ln2_g_ref, ln2_b_ref,
                    w1_ref, b1_ref, w2_ref, b2_ref,
                    lnf_g_ref, lnf_b_ref,
                    tok_emb_ref, labels_ref,
                    logits_ref, loss_ref, scr_ref):
    x = x_ref[...]                                                # [B*S, H]
    # ---- masked causal self-attention (pre-LN GPT2 style) ----
    xn = _ln(x, ln1_g_ref[...], ln1_b_ref[...])
    qkv = jnp.dot(xn, wqkv_s_ref[...], preferred_element_type=jnp.float32) + bqkv_s_ref[...]
    q, k, v = qkv[:, 0:H], qkv[:, H:2 * H], qkv[:, 2 * H:3 * H]
    dmask = dmask_ref[...]
    row_i = jax.lax.broadcasted_iota(jnp.int32, (S_DEC, S_DEC), 0)
    col_i = jax.lax.broadcasted_iota(jnp.int32, (S_DEC, S_DEC), 1)
    causal_ok = col_i <= row_i
    self_masks = [
        jnp.where(jnp.logical_and(causal_ok, dmask[b:b + 1, :] > 0.5), 0.0, -1e9)
        for b in range(B)]
    x = x + _mha_attend(q, k, v, wo_s_ref[...], bo_s_ref[...], self_masks,
                        scr_ref, B, S_DEC, S_DEC)
    # ---- cross-attention over encoder hidden states ----
    xn = _ln(x, lnx_g_ref[...], lnx_b_ref[...])
    qc = jnp.dot(xn, wq_c_ref[...], preferred_element_type=jnp.float32) + bq_c_ref[...]
    kvc = jnp.dot(enc_ref[...], wkv_c_ref[...], preferred_element_type=jnp.float32) + bkv_c_ref[...]
    kc, vc = kvc[:, 0:H], kvc[:, H:2 * H]
    emask = emask_ref[...]
    cross_masks = [(1.0 - emask[b:b + 1, :]) * -1e9 for b in range(B)]
    x = x + _mha_attend(qc, kc, vc, wo_c_ref[...], bo_c_ref[...], cross_masks,
                        scr_ref, B, S_DEC, S_ENC)
    # ---- FFN (pre-LN) ----
    xn = _ln(x, ln2_g_ref[...], ln2_b_ref[...])
    h = jnp.dot(xn, w1_ref[...], preferred_element_type=jnp.float32) + b1_ref[...]
    h = jax.nn.gelu(h, approximate=True)      # GPT2 gelu_new == tanh approx
    x = x + jnp.dot(h, w2_ref[...], preferred_element_type=jnp.float32) + b2_ref[...]
    # ---- final LN + tied lm_head (transposed contraction on the MXU) ----
    xn = _ln(x, lnf_g_ref[...], lnf_b_ref[...])
    logits = jax.lax.dot_general(
        xn, tok_emb_ref[...], dimension_numbers=(((1,), (1,)), ((), ())),
        preferred_element_type=jnp.float32)                       # [B*S, V]
    logits_ref[...] = logits
    # ---- shifted hard cross-entropy (label == -1 -> ignored) ----
    m = jnp.max(logits, axis=-1, keepdims=True)
    lse = jnp.log(jnp.sum(jnp.exp(logits - m), axis=-1, keepdims=True)) + m
    logp = logits - lse
    labels = labels_ref[...]                                      # [B*S, 1] int32
    iota = jax.lax.broadcasted_iota(jnp.int32, logits.shape, 1)
    sel = jnp.where(jnp.logical_and(iota == labels, labels >= 0), 1.0, 0.0)
    loss_ref[...] = (jnp.sum(sel * (-logp)) / float(B * (S_DEC - 1))).reshape(1, 1)


def _cls_kernel(x_ref, w_ref, b_ref, tgt_ref, logits_ref, loss_ref):
    lg = jnp.dot(x_ref[...], w_ref[...], preferred_element_type=jnp.float32) + b_ref[...]
    logits_ref[...] = lg
    m = jnp.max(lg, axis=-1, keepdims=True)
    lse = jnp.log(jnp.sum(jnp.exp(lg - m), axis=-1, keepdims=True)) + m
    logp = lg - lse
    loss = -jnp.sum(tgt_ref[...] * logp, axis=-1, keepdims=True)  # [B, 1]
    loss_ref[...] = jnp.mean(loss).reshape(1, 1)


# ----------------------------- pallas_call wrappers ---------------------------


def encoder_forward(p, x2d, enc_mask_f):
    M = B * S_ENC
    inputs = [
        x2d, enc_mask_f,
        p['enc_emb_ln_g'], p['enc_emb_ln_b'],
        p['enc_attn_wqkv'], p['enc_attn_bqkv'],
        p['enc_attn_wo'], p['enc_attn_bo'],
        p['enc_ln1_g'], p['enc_ln1_b'],
        p['enc_ffn_w1'], p['enc_ffn_b1'],
        p['enc_ffn_w2'], p['enc_ffn_b2'],
        p['enc_ln2_g'], p['enc_ln2_b'],
    ]
    return pl.pallas_call(
        _encoder_kernel,
        out_shape=jax.ShapeDtypeStruct((M, H), jnp.float32),
        grid=(1,),
        in_specs=[_full_spec(t.shape) for t in inputs],
        out_specs=_full_spec((M, H)),
        scratch_shapes=[pltpu.VMEM((M, H), jnp.float32)],
    )(*inputs)


def decoder_forward(p, x2d, dec_mask_f, enc2d, enc_mask_f, shift_labels):
    M = B * S_DEC
    inputs = [
        x2d, dec_mask_f, enc2d, enc_mask_f,
        p['dec_ln1_g'], p['dec_ln1_b'],
        p['dec_self_wqkv'], p['dec_self_bqkv'],
        p['dec_self_wo'], p['dec_self_bo'],
        p['dec_lnx_g'], p['dec_lnx_b'],
        p['dec_cross_wq'], p['dec_cross_bq'],
        p['dec_cross_wkv'], p['dec_cross_bkv'],
        p['dec_cross_wo'], p['dec_cross_bo'],
        p['dec_ln2_g'], p['dec_ln2_b'],
        p['dec_ffn_w1'], p['dec_ffn_b1'],
        p['dec_ffn_w2'], p['dec_ffn_b2'],
        p['dec_lnf_g'], p['dec_lnf_b'],
        p['dec_tok_emb'], shift_labels,
    ]
    return pl.pallas_call(
        _decoder_kernel,
        out_shape=(jax.ShapeDtypeStruct((M, VOCAB_DEC), jnp.float32),
                   jax.ShapeDtypeStruct((1, 1), jnp.float32)),
        grid=(1,),
        in_specs=[_full_spec(t.shape) for t in inputs],
        out_specs=(_full_spec((M, VOCAB_DEC)), _full_spec((1, 1))),
        scratch_shapes=[pltpu.VMEM((M, H), jnp.float32)],
    )(*inputs)


def classifier_forward(p, cls_x, dep_labels_f):
    inputs = [cls_x, p['cls_w'], p['cls_b'], dep_labels_f]
    return pl.pallas_call(
        _cls_kernel,
        out_shape=(jax.ShapeDtypeStruct((B, NUM_LABELS), jnp.float32),
                   jax.ShapeDtypeStruct((1, 1), jnp.float32)),
        grid=(1,),
        in_specs=[_full_spec(t.shape) for t in inputs],
        out_specs=(_full_spec((B, NUM_LABELS)), _full_spec((1, 1))),
    )(*inputs)


# ----------------------------- params ----------------------------------------


def init_params(key):
    keys = jax.random.split(key, 40)
    it = iter(keys)

    def nrm(shape):
        return jax.random.normal(next(it), shape, dtype=jnp.float32) * 0.02

    z = lambda s: jnp.zeros(s, jnp.float32)
    o = lambda s: jnp.ones(s, jnp.float32)
    p = {}
    # ---- encoder (BERT-style, 1 layer, post-LN) ----
    p['enc_tok_emb'] = nrm((VOCAB_ENC, H))
    p['enc_pos_emb'] = nrm((S_ENC, H))
    p['enc_emb_ln_g'], p['enc_emb_ln_b'] = o((1, H)), z((1, H))
    p['enc_attn_wqkv'], p['enc_attn_bqkv'] = nrm((H, 3 * H)), z((1, 3 * H))   # fused Q|K|V
    p['enc_attn_wo'], p['enc_attn_bo'] = nrm((H, H)), z((1, H))
    p['enc_ln1_g'], p['enc_ln1_b'] = o((1, H)), z((1, H))
    p['enc_ffn_w1'], p['enc_ffn_b1'] = nrm((H, FFN)), z((1, FFN))
    p['enc_ffn_w2'], p['enc_ffn_b2'] = nrm((FFN, H)), z((1, H))
    p['enc_ln2_g'], p['enc_ln2_b'] = o((1, H)), z((1, H))
    # ---- decoder (GPT2-style, 1 layer, pre-LN, with cross-attention) ----
    p['dec_tok_emb'] = nrm((VOCAB_DEC, H))
    p['dec_pos_emb'] = nrm((S_DEC, H))
    p['dec_ln1_g'], p['dec_ln1_b'] = o((1, H)), z((1, H))
    p['dec_self_wqkv'], p['dec_self_bqkv'] = nrm((H, 3 * H)), z((1, 3 * H))
    p['dec_self_wo'], p['dec_self_bo'] = nrm((H, H)), z((1, H))
    p['dec_lnx_g'], p['dec_lnx_b'] = o((1, H)), z((1, H))
    p['dec_cross_wq'], p['dec_cross_bq'] = nrm((H, H)), z((1, H))
    p['dec_cross_wkv'], p['dec_cross_bkv'] = nrm((H, 2 * H)), z((1, 2 * H))   # fused K|V
    p['dec_cross_wo'], p['dec_cross_bo'] = nrm((H, H)), z((1, H))
    p['dec_ln2_g'], p['dec_ln2_b'] = o((1, H)), z((1, H))
    p['dec_ffn_w1'], p['dec_ffn_b1'] = nrm((H, FFN)), z((1, FFN))
    p['dec_ffn_w2'], p['dec_ffn_b2'] = nrm((FFN, H)), z((1, H))
    p['dec_lnf_g'], p['dec_lnf_b'] = o((1, H)), z((1, H))
    # ---- classifier head ----
    p['cls_w'], p['cls_b'] = nrm((H, NUM_LABELS)), z((1, NUM_LABELS))
    return p


# ----------------------------- jitted forward --------------------------------


@jax.jit
def custom_model_forward(params, encoder_input_ids, encoder_attention_mask,
                         decoder_input_ids, decoder_attention_mask, departmentlabels):
    # --- encoder embeddings (gather in plain JAX, fused inside jit) ---
    enc_x = params['enc_tok_emb'][encoder_input_ids] + params['enc_pos_emb'][None, :, :]
    enc_mask_f = encoder_attention_mask.astype(jnp.float32)
    hidden2d = encoder_forward(params, enc_x.reshape(B * S_ENC, H), enc_mask_f)
    hidden_states = hidden2d.reshape(B, S_ENC, H)

    # --- decoder embeddings + shifted LM labels (-1 = ignore) ---
    dec_x = params['dec_tok_emb'][decoder_input_ids] + params['dec_pos_emb'][None, :, :]
    dec_mask_f = decoder_attention_mask.astype(jnp.float32)
    shift_labels = jnp.concatenate(
        [decoder_input_ids[:, 1:],
         jnp.full((B, 1), -1, decoder_input_ids.dtype)], axis=1
    ).reshape(B * S_DEC, 1).astype(jnp.int32)

    lm_logits2d, lm_loss = decoder_forward(
        params, dec_x.reshape(B * S_DEC, H), dec_mask_f, hidden2d, enc_mask_f, shift_labels)
    lm_logits = lm_logits2d.reshape(B, S_DEC, VOCAB_DEC)
    lm_loss = lm_loss[0, 0]

    # --- classification head on CLS token ---
    # TODO(synk): dropout treated as identity (inference-mode), no RNG masking.
    cls_logits, cls_loss = classifier_forward(
        params, hidden_states[:, 0, :], departmentlabels.astype(jnp.float32))
    cls_loss = cls_loss[0, 0]
    dep_idx = jnp.argmax(departmentlabels, axis=1)
    cls_acc = jnp.mean((dep_idx == jnp.argmax(cls_logits, axis=1)).astype(jnp.float32))

    seqoutputs = {'logits': lm_logits, 'loss': lm_loss}
    return hidden_states, seqoutputs, cls_loss, cls_acc


# ----------------------------- main -------------------------------------------

if __name__ == "__main__":
    key = jax.random.PRNGKey(0)
    pkey, k1, k2, k3 = jax.random.split(key, 4)
    params = init_params(pkey)

    encoder_input_ids = jax.random.randint(k1, (B, S_ENC), 0, VOCAB_ENC, dtype=jnp.int32)
    encoder_attention_mask = jnp.ones((B, S_ENC), jnp.int32).at[:, -2:].set(0)
    decoder_input_ids = jax.random.randint(k2, (B, S_DEC), 0, VOCAB_DEC, dtype=jnp.int32)
    decoder_attention_mask = jnp.ones((B, S_DEC), jnp.int32)
    departmentlabels = jax.nn.one_hot(
        jax.random.randint(k3, (B,), 0, NUM_LABELS), NUM_LABELS).astype(jnp.int32)

    hidden_states, seqoutputs, cls_loss, cls_acc = custom_model_forward(
        params, encoder_input_ids, encoder_attention_mask,
        decoder_input_ids, decoder_attention_mask, departmentlabels)

    jax.block_until_ready((hidden_states, seqoutputs['logits'], seqoutputs['loss'],
                           cls_loss, cls_acc))
    assert hidden_states.shape == (B, S_ENC, H)
    assert seqoutputs['logits'].shape == (B, S_DEC, VOCAB_DEC)
    assert bool(jnp.isfinite(seqoutputs['loss']))
    assert bool(jnp.isfinite(cls_loss))
    print("KERNEL_OK")
</pallas_src>

<mosaic_0001>
module attributes {stable_mosaic.version = 11 : i64} {
  func.func @_encoder_kernel(%arg0: i32, %arg1: memref<16x32xf32, #tpu.memory_space<vmem>>, %arg2: memref<2x8xf32, #tpu.memory_space<vmem>>, %arg3: memref<1x32xf32, #tpu.memory_space<vmem>>, %arg4: memref<1x32xf32, #tpu.memory_space<vmem>>, %arg5: memref<32x96xf32, #tpu.memory_space<vmem>>, %arg6: memref<1x96xf32, #tpu.memory_space<vmem>>, %arg7: memref<32x32xf32, #tpu.memory_space<vmem>>, %arg8: memref<1x32xf32, #tpu.memory_space<vmem>>, %arg9: memref<1x32xf32, #tpu.memory_space<vmem>>, %arg10: memref<1x32xf32, #tpu.memory_space<vmem>>, %arg11: memref<32x128xf32, #tpu.memory_space<vmem>>, %arg12: memref<1x128xf32, #tpu.memory_space<vmem>>, %arg13: memref<128x32xf32, #tpu.memory_space<vmem>>, %arg14: memref<1x32xf32, #tpu.memory_space<vmem>>, %arg15: memref<1x32xf32, #tpu.memory_space<vmem>>, %arg16: memref<1x32xf32, #tpu.memory_space<vmem>>, %arg17: memref<16x32xf32, #tpu.memory_space<vmem>>, %arg18: memref<16x32xf32, #tpu.memory_space<vmem>>) attributes {dimension_semantics = [#tpu.dimension_semantics<arbitrary>], iteration_bounds = array<i64: 1>, scalar_prefetch = 0 : i64, scratch_operands = 1 : i64, tpu.core_type = #tpu.core_type<tc>, window_params = [{pipeline_mode = #tpu.pipeline_mode<synchronous>, transform_indices = @transform_0, window_bounds = array<i64: 16, 32>}, {pipeline_mode = #tpu.pipeline_mode<synchronous>, transform_indices = @transform_1, window_bounds = array<i64: 2, 8>}, {pipeline_mode = #tpu.pipeline_mode<synchronous>, transform_indices = @transform_2, window_bounds = array<i64: 1, 32>}, {pipeline_mode = #tpu.pipeline_mode<synchronous>, transform_indices = @transform_3, window_bounds = array<i64: 1, 32>}, {pipeline_mode = #tpu.pipeline_mode<synchronous>, transform_indices = @transform_4, window_bounds = array<i64: 32, 96>}, {pipeline_mode = #tpu.pipeline_mode<synchronous>, transform_indices = @transform_5, window_bounds = array<i64: 1, 96>}, {pipeline_mode = #tpu.pipeline_mode<synchronous>, transform_indices = @transform_6, window_bounds = array<i64: 32, 32>}, {pipeline_mode = #tpu.pipeline_mode<synchronous>, transform_indices = @transform_7, window_bounds = array<i64: 1, 32>}, {pipeline_mode = #tpu.pipeline_mode<synchronous>, transform_indices = @transform_8, window_bounds = array<i64: 1, 32>}, {pipeline_mode = #tpu.pipeline_mode<synchronous>, transform_indices = @transform_9, window_bounds = array<i64: 1, 32>}, {pipeline_mode = #tpu.pipeline_mode<synchronous>, transform_indices = @transform_10, window_bounds = array<i64: 32, 128>}, {pipeline_mode = #tpu.pipeline_mode<synchronous>, transform_indices = @transform_11, window_bounds = array<i64: 1, 128>}, {pipeline_mode = #tpu.pipeline_mode<synchronous>, transform_indices = @transform_12, window_bounds = array<i64: 128, 32>}, {pipeline_mode = #tpu.pipeline_mode<synchronous>, transform_indices = @transform_13, window_bounds = array<i64: 1, 32>}, {pipeline_mode = #tpu.pipeline_mode<synchronous>, transform_indices = @transform_14, window_bounds = array<i64: 1, 32>}, {pipeline_mode = #tpu.pipeline_mode<synchronous>, transform_indices = @transform_15, window_bounds = array<i64: 1, 32>}, {pipeline_mode = #tpu.pipeline_mode<synchronous>, transform_indices = @transform_16, window_bounds = array<i64: 16, 32>}]} {
    %c0 = arith.constant 0 : index
    %c0_0 = arith.constant 0 : index
    %0 = vector.load %arg1[%c0, %c0_0] : memref<16x32xf32, #tpu.memory_space<vmem>>, vector<16x32xf32>
    %c0_1 = arith.constant 0 : index
    %c0_2 = arith.constant 0 : index
    %1 = vector.load %arg3[%c0_1, %c0_2] : memref<1x32xf32, #tpu.memory_space<vmem>>, vector<1x32xf32>
    %c0_3 = arith.constant 0 : index
    %c0_4 = arith.constant 0 : index
    %2 = vector.load %arg4[%c0_3, %c0_4] : memref<1x32xf32, #tpu.memory_space<vmem>>, vector<1x32xf32>
    %cst = arith.constant dense<0.000000e+00> : vector<16xf32>
    %3 = vector.multi_reduction <add>, %0, %cst [1] : vector<16x32xf32> to vector<16xf32>
    %4 = vector.shape_cast %3 : vector<16xf32> to vector<16x1xf32>
    %cst_5 = arith.constant 3.200000e+01 : f32
    %5 = vector.broadcast %cst_5 : f32 to vector<16x1xf32>
    %6 = arith.divf %4, %5 : vector<16x1xf32>
    %7 = vector.broadcast %6 : vector<16x1xf32> to vector<16x32xf32>
    %8 = arith.subf %0, %7 : vector<16x32xf32>
    %9 = vector.broadcast %6 : vector<16x1xf32> to vector<16x32xf32>
    %10 = arith.subf %0, %9 : vector<16x32xf32>
    %11 = arith.mulf %8, %10 : vector<16x32xf32>
    %cst_6 = arith.constant dense<0.000000e+00> : vector<16xf32>
    %12 = vector.multi_reduction <add>, %11, %cst_6 [1] : vector<16x32xf32> to vector<16xf32>
    %13 = vector.shape_cast %12 : vector<16xf32> to vector<16x1xf32>
    %cst_7 = arith.constant 3.200000e+01 : f32
    %14 = vector.broadcast %cst_7 : f32 to vector<16x1xf32>
    %15 = arith.divf %13, %14 : vector<16x1xf32>
    %16 = vector.broadcast %6 : vector<16x1xf32> to vector<16x32xf32>
    %17 = arith.subf %0, %16 : vector<16x32xf32>
    %cst_8 = arith.constant 9.99999974E-6 : f32
    %18 = vector.broadcast %cst_8 : f32 to vector<16x1xf32>
    %19 = arith.addf %15, %18 : vector<16x1xf32>
    %20 = math.rsqrt %19 : vector<16x1xf32>
    %21 = vector.broadcast %20 : vector<16x1xf32> to vector<16x32xf32>
    %22 = arith.mulf %17, %21 : vector<16x32xf32>
    %23 = vector.broadcast %1 : vector<1x32xf32> to vector<16x32xf32>
    %24 = arith.mulf %22, %23 : vector<16x32xf32>
    %25 = vector.broadcast %2 : vector<1x32xf32> to vector<16x32xf32>
    %26 = arith.addf %24, %25 : vector<16x32xf32>
    %c0_9 = arith.constant 0 : index
    %c0_10 = arith.constant 0 : index
    %27 = vector.load %arg5[%c0_9, %c0_10] : memref<32x96xf32, #tpu.memory_space<vmem>>, vector<32x96xf32>
    %cst_11 = arith.constant dense<0.000000e+00> : vector<16x96xf32>
    %28 = tpu.matmul %26, %27, %cst_11 {dimension_numbers = #tpu.dot_dimension_numbers<[1], [0], [0], [1], [0, 0, 1, 1], [], []>} : vector<16x32xf32>, vector<32x96xf32>, vector<16x96xf32> -> vector<16x96xf32>
    %c0_12 = arith.constant 0 : index
    %c0_13 = arith.constant 0 : index
    %29 = vector.load %arg6[%c0_12, %c0_13] : memref<1x96xf32, #tpu.memory_space<vmem>>, vector<1x96xf32>
    %30 = vector.broadcast %29 : vector<1x96xf32> to vector<16x96xf32>
    %31 = arith.addf %28, %30 : vector<16x96xf32>
    %32 = vector.extract_strided_slice %31 {offsets = [0, 0], sizes = [16, 32], strides = [1, 1]} : vector<16x96xf32> to vector<16x32xf32>
    %33 = vector.extract_strided_slice %31 {offsets = [0, 32], sizes = [16, 32], strides = [1, 1]} : vector<16x96xf32> to vector<16x32xf32>
    %34 = vector.extract_strided_slice %31 {offsets = [0, 64], sizes = [16, 32], strides = [1, 1]} : vector<16x96xf32> to vector<16x32xf32>
    %c0_14 = arith.constant 0 : index
    %c0_15 = arith.constant 0 : index
    %35 = vector.load %arg2[%c0_14, %c0_15] : memref<2x8xf32, #tpu.memory_space<vmem>>, vector<2x8xf32>
    %36 = vector.extract_strided_slice %35 {offsets = [0, 0], sizes = [1, 8], strides = [1, 1]} : vector<2x8xf32> to vector<1x8xf32>
    %cst_16 = arith.constant 1.000000e+00 : f32
    %37 = vector.broadcast %cst_16 : f32 to vector<1x8xf32>
    %38 = arith.subf %37, %36 : vector<1x8xf32>
    %cst_17 = arith.constant -1.000000e+09 : f32
    %39 = vector.broadcast %cst_17 : f32 to vector<1x8xf32>
    %40 = arith.mulf %38, %39 : vector<1x8xf32>
    %41 = vector.extract_strided_slice %35 {offsets = [1, 0], sizes = [1, 8], strides = [1, 1]} : vector<2x8xf32> to vector<1x8xf32>
    %cst_18 = arith.constant 1.000000e+00 : f32
    %42 = vector.broadcast %cst_18 : f32 to vector<1x8xf32>
    %43 = arith.subf %42, %41 : vector<1x8xf32>
    %cst_19 = arith.constant -1.000000e+09 : f32
    %44 = vector.broadcast %cst_19 : f32 to vector<1x8xf32>
    %45 = arith.mulf %43, %44 : vector<1x8xf32>
    %c0_20 = arith.constant 0 : index
    %c0_21 = arith.constant 0 : index
    %46 = vector.load %arg7[%c0_20, %c0_21] : memref<32x32xf32, #tpu.memory_space<vmem>>, vector<32x32xf32>
    %c0_22 = arith.constant 0 : index
    %c0_23 = arith.constant 0 : index
    %47 = vector.load %arg8[%c0_22, %c0_23] : memref<1x32xf32, #tpu.memory_space<vmem>>, vector<1x32xf32>
    %48 = vector.extract_strided_slice %32 {offsets = [0, 0], sizes = [8, 32], strides = [1, 1]} : vector<16x32xf32> to vector<8x32xf32>
    %49 = vector.extract_strided_slice %33 {offsets = [0, 0], sizes = [8, 32], strides = [1, 1]} : vector<16x32xf32> to vector<8x32xf32>
    %50 = vector.extract_strided_slice %34 {offsets = [0, 0], sizes = [8, 32], strides = [1, 1]} : vector<16x32xf32> to vector<8x32xf32>
    %51 = vector.extract_strided_slice %48 {offsets = [0, 0], sizes = [8, 16], strides = [1, 1]} : vector<8x32xf32> to vector<8x16xf32>
    %52 = vector.extract_strided_slice %49 {offsets = [0, 0], sizes = [8, 16], strides = [1, 1]} : vector<8x32xf32> to vector<8x16xf32>
    %53 = vector.extract_strided_slice %50 {offsets = [0, 0], sizes = [8, 16], strides = [1, 1]} : vector<8x32xf32> to vector<8x16xf32>
    %cst_24 = arith.constant dense<0.000000e+00> : vector<8x8xf32>
    %54 = tpu.matmul %51, %52, %cst_24 {dimension_numbers = #tpu.dot_dimension_numbers<[1], [1], [0], [0], [0, 0, 1, 0], [], []>} : vector<8x16xf32>, vector<8x16xf32>, vector<8x8xf32> -> vector<8x8xf32>
    %cst_25 = arith.constant 2.500000e-01 : f32
    %55 = vector.broadcast %cst_25 : f32 to vector<8x8xf32>
    %56 = arith.mulf %54, %55 : vector<8x8xf32>
    %57 = vector.broadcast %40 : vector<1x8xf32> to vector<8x8xf32>
    %58 = arith.addf %56, %57 : vector<8x8xf32>
    %cst_26 = arith.constant dense<0xFF800000> : vector<8xf32>
    %59 = vector.multi_reduction <maximumf>, %58, %cst_26 [1] : vector<8x8xf32> to vector<8xf32>
    %60 = vector.shape_cast %59 : vector<8xf32> to vector<8x1xf32>
    %61 = vector.broadcast %60 : vector<8x1xf32> to vector<8x8xf32>
    %62 = arith.subf %58, %61 : vector<8x8xf32>
    %63 = math.exp %62 : vector<8x8xf32>
    %cst_27 = arith.constant dense<0.000000e+00> : vector<8xf32>
    %64 = vector.multi_reduction <add>, %63, %cst_27 [1] : vector<8x8xf32> to vector<8xf32>
    %65 = vector.shape_cast %64 : vector<8xf32> to vector<8x1xf32>
    %66 = tpu.reciprocal %65 {approx = true} : vector<8x1xf32> -> vector<8x1xf32>
    %67 = vector.broadcast %66 : vector<8x1xf32> to vector<8x8xf32>
    %68 = arith.mulf %63, %67 : vector<8x8xf32>
    %cst_28 = arith.constant dense<0.000000e+00> : vector<8x16xf32>
    %69 = tpu.matmul %68, %53, %cst_28 {dimension_numbers = #tpu.dot_dimension_numbers<[1], [0], [0], [1], [0, 0, 1, 1], [], []>} : vector<8x8xf32>, vector<8x16xf32>, vector<8x16xf32> -> vector<8x16xf32>
    %c0_29 = arith.constant 0 : index
    %c0_30 = arith.constant 0 : index
    %70 = vector.load %arg18[%c0_29, %c0_30] : memref<16x32xf32, #tpu.memory_space<vmem>>, vector<8x16xf32>
    tpu.vector_store %arg18[%c0_29, %c0_30], %69 {strides = array<i32>} : memref<16x32xf32, #tpu.memory_space<vmem>>, vector<8x16xf32>,
    %71 = vector.extract_strided_slice %48 {offsets = [0, 16], sizes = [8, 16], strides = [1, 1]} : vector<8x32xf32> to vector<8x16xf32>
    %72 = vector.extract_strided_slice %49 {offsets = [0, 16], sizes = [8, 16], strides = [1, 1]} : vector<8x32xf32> to vector<8x16xf32>
    %73 = vector.extract_strided_slice %50 {offsets = [0, 16], sizes = [8, 16], strides = [1, 1]} : vector<8x32xf32> to vector<8x16xf32>
    %cst_31 = arith.constant dense<0.000000e+00> : vector<8x8xf32>
    %74 = tpu.matmul %71, %72, %cst_31 {dimension_numbers = #tpu.dot_dimension_numbers<[1], [1], [0], [0], [0, 0, 1, 0], [], []>} : vector<8x16xf32>, vector<8x16xf32>, vector<8x8xf32> -> vector<8x8xf32>
    %cst_32 = arith.constant 2.500000e-01 : f32
    %75 = vector.broadcast %cst_32 : f32 to vector<8x8xf32>
    %76 = arith.mulf %74, %75 : vector<8x8xf32>
    %77 = vector.broadcast %40 : vector<1x8xf32> to vector<8x8xf32>
    %78 = arith.addf %76, %77 : vector<8x8xf32>
    %cst_33 = arith.constant dense<0xFF800000> : vector<8xf32>
    %79 = vector.multi_reduction <maximumf>, %78, %cst_33 [1] : vector<8x8xf32> to vector<8xf32>
    %80 = vector.shape_cast %79 : vector<8xf32> to vector<8x1xf32>
    %81 = vector.broadcast %80 : vector<8x1xf32> to vector<8x8xf32>
    %82 = arith.subf %78, %81 : vector<8x8xf32>
    %83 = math.exp %82 : vector<8x8xf32>
    %cst_34 = arith.constant dense<0.000000e+00> : vector<8xf32>
    %84 = vector.multi_reduction <add>, %83, %cst_34 [1] : vector<8x8xf32> to vector<8xf32>
    %85 = vector.shape_cast %84 : vector<8xf32> to vector<8x1xf32>
    %86 = tpu.reciprocal %85 {approx = true} : vector<8x1xf32> -> vector<8x1xf32>
    %87 = vector.broadcast %86 : vector<8x1xf32> to vector<8x8xf32>
    %88 = arith.mulf %83, %87 : vector<8x8xf32>
    %cst_35 = arith.constant dense<0.000000e+00> : vector<8x16xf32>
    %89 = tpu.matmul %88, %73, %cst_35 {dimension_numbers = #tpu.dot_dimension_numbers<[1], [0], [0], [1], [0, 0, 1, 1], [], []>} : vector<8x8xf32>, vector<8x16xf32>, vector<8x16xf32> -> vector<8x16xf32>
    %c0_36 = arith.constant 0 : index
    %c16 = arith.constant 16 : index
    %90 = vector.load %arg18[%c0_36, %c16] : memref<16x32xf32, #tpu.memory_space<vmem>>, vector<8x16xf32>
    tpu.vector_store %arg18[%c0_36, %c16], %89 {strides = array<i32>} : memref<16x32xf32, #tpu.memory_space<vmem>>, vector<8x16xf32>,
    %91 = vector.extract_strided_slice %32 {offsets = [8, 0], sizes = [8, 32], strides = [1, 1]} : vector<16x32xf32> to vector<8x32xf32>
    %92 = vector.extract_strided_slice %33 {offsets = [8, 0], sizes = [8, 32], strides = [1, 1]} : vector<16x32xf32> to vector<8x32xf32>
    %93 = vector.extract_strided_slice %34 {offsets = [8, 0], sizes = [8, 32], strides = [1, 1]} : vector<16x32xf32> to vector<8x32xf32>
    %94 = vector.extract_strided_slice %91 {offsets = [0, 0], sizes = [8, 16], strides = [1, 1]} : vector<8x32xf32> to vector<8x16xf32>
    %95 = vector.extract_strided_slice %92 {offsets = [0, 0], sizes = [8, 16], strides = [1, 1]} : vector<8x32xf32> to vector<8x16xf32>
    %96 = vector.extract_strided_slice %93 {offsets = [0, 0], sizes = [8, 16], strides = [1, 1]} : vector<8x32xf32> to vector<8x16xf32>
    %cst_37 = arith.constant dense<0.000000e+00> : vector<8x8xf32>
    %97 = tpu.matmul %94, %95, %cst_37 {dimension_numbers = #tpu.dot_dimension_numbers<[1], [1], [0], [0], [0, 0, 1, 0], [], []>} : vector<8x16xf32>, vector<8x16xf32>, vector<8x8xf32> -> vector<8x8xf32>
    %cst_38 = arith.constant 2.500000e-01 : f32
    %98 = vector.broadcast %cst_38 : f32 to vector<8x8xf32>
    %99 = arith.mulf %97, %98 : vector<8x8xf32>
    %100 = vector.broadcast %45 : vector<1x8xf32> to vector<8x8xf32>
    %101 = arith.addf %99, %100 : vector<8x8xf32>
    %cst_39 = arith.constant dense<0xFF800000> : vector<8xf32>
    %102 = vector.multi_reduction <maximumf>, %101, %cst_39 [1] : vector<8x8xf32> to vector<8xf32>
    %103 = vector.shape_cast %102 : vector<8xf32> to vector<8x1xf32>
    %104 = vector.broadcast %103 : vector<8x1xf32> to vector<8x8xf32>
    %105 = arith.subf %101, %104 : vector<8x8xf32>
    %106 = math.exp %105 : vector<8x8xf32>
    %cst_40 = arith.constant dense<0.000000e+00> : vector<8xf32>
    %107 = vector.multi_reduction <add>, %106, %cst_40 [1] : vector<8x8xf32> to vector<8xf32>
    %108 = vector.shape_cast %107 : vector<8xf32> to vector<8x1xf32>
    %109 = tpu.reciprocal %108 {approx = true} : vector<8x1xf32> -> vector<8x1xf32>
    %110 = vector.broadcast %109 : vector<8x1xf32> to vector<8x8xf32>
    %111 = arith.mulf %106, %110 : vector<8x8xf32>
    %cst_41 = arith.constant dense<0.000000e+00> : vector<8x16xf32>
    %112 = tpu.matmul %111, %96, %cst_41 {dimension_numbers = #tpu.dot_dimension_numbers<[1], [0], [0], [1], [0, 0, 1, 1], [], []>} : vector<8x8xf32>, vector<8x16xf32>, vector<8x16xf32> -> vector<8x16xf32>
    %c8 = arith.constant 8 : index
    %c0_42 = arith.constant 0 : index
    %113 = vector.load %arg18[%c8, %c0_42] : memref<16x32xf32, #tpu.memory_space<vmem>>, vector<8x16xf32>
    tpu.vector_store %arg18[%c8, %c0_42], %112 {strides = array<i32>} : memref<16x32xf32, #tpu.memory_space<vmem>>, vector<8x16xf32>,
    %114 = vector.extract_strided_slice %91 {offsets = [0, 16], sizes = [8, 16], strides = [1, 1]} : vector<8x32xf32> to vector<8x16xf32>
    %115 = vector.extract_strided_slice %92 {offsets = [0, 16], sizes = [8, 16], strides = [1, 1]} : vector<8x32xf32> to vector<8x16xf32>
    %116 = vector.extract_strided_slice %93 {offsets = [0, 16], sizes = [8, 16], strides = [1, 1]} : vector<8x32xf32> to vector<8x16xf32>
    %cst_43 = arith.constant dense<0.000000e+00> : vector<8x8xf32>
    %117 = tpu.matmul %114, %115, %cst_43 {dimension_numbers = #tpu.dot_dimension_numbers<[1], [1], [0], [0], [0, 0, 1, 0], [], []>} : vector<8x16xf32>, vector<8x16xf32>, vector<8x8xf32> -> vector<8x8xf32>
    %cst_44 = arith.constant 2.500000e-01 : f32
    %118 = vector.broadcast %cst_44 : f32 to vector<8x8xf32>
    %119 = arith.mulf %117, %118 : vector<8x8xf32>
    %120 = vector.broadcast %45 : vector<1x8xf32> to vector<8x8xf32>
    %121 = arith.addf %119, %120 : vector<8x8xf32>
    %cst_45 = arith.constant dense<0xFF800000> : vector<8xf32>
    %122 = vector.multi_reduction <maximumf>, %121, %cst_45 [1] : vector<8x8xf32> to vector<8xf32>
    %123 = vector.shape_cast %122 : vector<8xf32> to vector<8x1xf32>
    %124 = vector.broadcast %123 : vector<8x1xf32> to vector<8x8xf32>
    %125 = arith.subf %121, %124 : vector<8x8xf32>
    %126 = math.exp %125 : vector<8x8xf32>
    %cst_46 = arith.constant dense<0.000000e+00> : vector<8xf32>
    %127 = vector.multi_reduction <add>, %126, %cst_46 [1] : vector<8x8xf32> to vector<8xf32>
    %128 = vector.shape_cast %127 : vector<8xf32> to vector<8x1xf32>
    %129 = tpu.reciprocal %128 {approx = true} : vector<8x1xf32> -> vector<8x1xf32>
    %130 = vector.broadcast %129 : vector<8x1xf32> to vector<8x8xf32>
    %131 = arith.mulf %126, %130 : vector<8x8xf32>
    %cst_47 = arith.constant dense<0.000000e+00> : vector<8x16xf32>
    %132 = tpu.matmul %131, %116, %cst_47 {dimension_numbers = #tpu.dot_dimension_numbers<[1], [0], [0], [1], [0, 0, 1, 1], [], []>} : vector<8x8xf32>, vector<8x16xf32>, vector<8x16xf32> -> vector<8x16xf32>
    %c8_48 = arith.constant 8 : index
    %c16_49 = arith.constant 16 : index
    %133 = vector.load %arg18[%c8_48, %c16_49] : memref<16x32xf32, #tpu.memory_space<vmem>>, vector<8x16xf32>
    tpu.vector_store %arg18[%c8_48, %c16_49], %132 {strides = array<i32>} : memref<16x32xf32, #tpu.memory_space<vmem>>, vector<8x16xf32>,
    %c0_50 = arith.constant 0 : index
    %c0_51 = arith.constant 0 : index
    %134 = vector.load %arg18[%c0_50, %c0_51] : memref<16x32xf32, #tpu.memory_space<vmem>>, vector<16x32xf32>
    %cst_52 = arith.constant dense<0.000000e+00> : vector<16x32xf32>
    %135 = tpu.matmul %134, %46, %cst_52 {dimension_numbers = #tpu.dot_dimension_numbers<[1], [0], [0], [1], [0, 0, 1, 1], [], []>} : vector<16x32xf32>, vector<32x32xf32>, vector<16x32xf32> -> vector<16x32xf32>
    %136 = vector.broadcast %47 : vector<1x32xf32> to vector<16x32xf32>
    %137 = arith.addf %135, %136 : vector<16x32xf32>
    %138 = arith.addf %26, %137 : vector<16x32xf32>
    %c0_53 = arith.constant 0 : index
    %c0_54 = arith.constant 0 : index
    %139 = vector.load %arg9[%c0_53, %c0_54] : memref<1x32xf32, #tpu.memory_space<vmem>>, vector<1x32xf32>
    %c0_55 = arith.constant 0 : index
    %c0_56 = arith.constant 0 : index
    %140 = vector.load %arg10[%c0_55, %c0_56] : memref<1x32xf32, #tpu.memory_space<vmem>>, vector<1x32xf32>
    %cst_57 = arith.constant dense<0.000000e+00> : vector<16xf32>
    %141 = vector.multi_reduction <add>, %138, %cst_57 [1] : vector<16x32xf32> to vector<16xf32>
    %142 = vector.shape_cast %141 : vector<16xf32> to vector<16x1xf32>
    %cst_58 = arith.constant 3.200000e+01 : f32
    %143 = vector.broadcast %cst_58 : f32 to vector<16x1xf32>
    %144 = arith.divf %142, %143 : vector<16x1xf32>
    %145 = vector.broadcast %144 : vector<16x1xf32> to vector<16x32xf32>
    %146 = arith.subf %138, %145 : vector<16x32xf32>
    %147 = vector.broadcast %144 : vector<16x1xf32> to vector<16x32xf32>
    %148 = arith.subf %138, %147 : vector<16x32xf32>
    %149 = arith.mulf %146, %148 : vector<16x32xf32>
    %cst_59 = arith.constant dense<0.000000e+00> : vector<16xf32>
    %150 = vector.multi_reduction <add>, %149, %cst_59 [1] : vector<16x32xf32> to vector<16xf32>
    %151 = vector.shape_cast %150 : vector<16xf32> to vector<16x1xf32>
    %cst_60 = arith.constant 3.200000e+01 : f32
    %152 = vector.broadcast %cst_60 : f32 to vector<16x1xf32>
    %153 = arith.divf %151, %152 : vector<16x1xf32>
    %154 = vector.broadcast %144 : vector<16x1xf32> to vector<16x32xf32>
    %155 = arith.subf %138, %154 : vector<16x32xf32>
    %cst_61 = arith.constant 9.99999974E-6 : f32
    %156 = vector.broadcast %cst_61 : f32 to vector<16x1xf32>
    %157 = arith.addf %153, %156 : vector<16x1xf32>
    %158 = math.rsqrt %157 : vector<16x1xf32>
    %159 = vector.broadcast %158 : vector<16x1xf32> to vector<16x32xf32>
    %160 = arith.mulf %155, %159 : vector<16x32xf32>
    %161 = vector.broadcast %139 : vector<1x32xf32> to vector<16x32xf32>
    %162 = arith.mulf %160, %161 : vector<16x32xf32>
    %163 = vector.broadcast %140 : vector<1x32xf32> to vector<16x32xf32>
    %164 = arith.addf %162, %163 : vector<16x32xf32>
    %c0_62 = arith.constant 0 : index
    %c0_63 = arith.constant 0 : index
    %165 = vector.load %arg11[%c0_62, %c0_63] : memref<32x128xf32, #tpu.memory_space<vmem>>, vector<32x128xf32>
    %cst_64 = arith.constant dense<0.000000e+00> : vector<16x128xf32>
    %166 = tpu.matmul %164, %165, %cst_64 {dimension_numbers = #tpu.dot_dimension_numbers<[1], [0], [0], [1], [0, 0, 1, 1], [], []>} : vector<16x32xf32>, vector<32x128xf32>, vector<16x128xf32> -> vector<16x128xf32>
    %c0_65 = arith.constant 0 : index
    %c0_66 = arith.constant 0 : index
    %167 = vector.load %arg12[%c0_65, %c0_66] : memref<1x128xf32, #tpu.memory_space<vmem>>, vector<1x128xf32>
    %168 = vector.broadcast %167 : vector<1x128xf32> to vector<16x128xf32>
    %169 = arith.addf %166, %168 : vector<16x128xf32>
    %170 = arith.mulf %169, %169 : vector<16x128xf32>
    %171 = arith.mulf %169, %170 : vector<16x128xf32>
    %cst_67 = arith.constant 4.471500e-02 : f32
    %172 = vector.broadcast %cst_67 : f32 to vector<16x128xf32>
    %173 = arith.mulf %172, %171 : vector<16x128xf32>
    %174 = arith.addf %169, %173 : vector<16x128xf32>
    %cst_68 = arith.constant 0.797884583 : f32
    %175 = vector.broadcast %cst_68 : f32 to vector<16x128xf32>
    %176 = arith.mulf %175, %174 : vector<16x128xf32>
    %177 = math.tanh %176 : vector<16x128xf32>
    %cst_69 = arith.constant 1.000000e+00 : f32
    %178 = vector.broadcast %cst_69 : f32 to vector<16x128xf32>
    %179 = arith.addf %178, %177 : vector<16x128xf32>
    %cst_70 = arith.constant 5.000000e-01 : f32
    %180 = vector.broadcast %cst_70 : f32 to vector<16x128xf32>
    %181 = arith.mulf %180, %179 : vector<16x128xf32>
    %182 = arith.mulf %169, %181 : vector<16x128xf32>
    %c0_71 = arith.constant 0 : index
    %c0_72 = arith.constant 0 : index
    %183 = vector.load %arg13[%c0_71, %c0_72] : memref<128x32xf32, #tpu.memory_space<vmem>>, vector<128x32xf32>
    %cst_73 = arith.constant dense<0.000000e+00> : vector<16x32xf32>
    %184 = tpu.matmul %182, %183, %cst_73 {dimension_numbers = #tpu.dot_dimension_numbers<[1], [0], [0], [1], [0, 0, 1, 1], [], []>} : vector<16x128xf32>, vector<128x32xf32>, vector<16x32xf32> -> vector<16x32xf32>
    %c0_74 = arith.constant 0 : index
    %c0_75 = arith.constant 0 : index
    %185 = vector.load %arg14[%c0_74, %c0_75] : memref<1x32xf32, #tpu.memory_space<vmem>>, vector<1x32xf32>
    %186 = vector.broadcast %185 : vector<1x32xf32> to vector<16x32xf32>
    %187 = arith.addf %184, %186 : vector<16x32xf32>
    %188 = arith.addf %164, %187 : vector<16x32xf32>
    %c0_76 = arith.constant 0 : index
    %c0_77 = arith.constant 0 : index
    %189 = vector.load %arg15[%c0_76, %c0_77] : memref<1x32xf32, #tpu.memory_space<vmem>>, vector<1x32xf32>
    %c0_78 = arith.constant 0 : index
    %c0_79 = arith.constant 0 : index
    %190 = vector.load %arg16[%c0_78, %c0_79] : memref<1x32xf32, #tpu.memory_space<vmem>>, vector<1x32xf32>
    %cst_80 = arith.constant dense<0.000000e+00> : vector<16xf32>
    %191 = vector.multi_reduction <add>, %188, %cst_80 [1] : vector<16x32xf32> to vector<16xf32>
    %192 = vector.shape_cast %191 : vector<16xf32> to vector<16x1xf32>
    %cst_81 = arith.constant 3.200000e+01 : f32
    %193 = vector.broadcast %cst_81 : f32 to vector<16x1xf32>
    %194 = arith.divf %192, %193 : vector<16x1xf32>
    %195 = vector.broadcast %194 : vector<16x1xf32> to vector<16x32xf32>
    %196 = arith.subf %188, %195 : vector<16x32xf32>
    %197 = vector.broadcast %194 : vector<16x1xf32> to vector<16x32xf32>
    %198 = arith.subf %188, %197 : vector<16x32xf32>
    %199 = arith.mulf %196, %198 : vector<16x32xf32>
    %cst_82 = arith.constant dense<0.000000e+00> : vector<16xf32>
    %200 = vector.multi_reduction <add>, %199, %cst_82 [1] : vector<16x32xf32> to vector<16xf32>
    %201 = vector.shape_cast %200 : vector<16xf32> to vector<16x1xf32>
    %cst_83 = arith.constant 3.200000e+01 : f32
    %202 = vector.broadcast %cst_83 : f32 to vector<16x1xf32>
    %203 = arith.divf %201, %202 : vector<16x1xf32>
    %204 = vector.broadcast %194 : vector<16x1xf32> to vector<16x32xf32>
    %205 = arith.subf %188, %204 : vector<16x32xf32>
    %cst_84 = arith.constant 9.99999974E-6 : f32
    %206 = vector.broadcast %cst_84 : f32 to vector<16x1xf32>
    %207 = arith.addf %203, %206 : vector<16x1xf32>
    %208 = math.rsqrt %207 : vector<16x1xf32>
    %209 = vector.broadcast %208 : vector<16x1xf32> to vector<16x32xf32>
    %210 = arith.mulf %205, %209 : vector<16x32xf32>
    %211 = vector.broadcast %189 : vector<1x32xf32> to vector<16x32xf32>
    %212 = arith.mulf %210, %211 : vector<16x32xf32>
    %213 = vector.broadcast %190 : vector<1x32xf32> to vector<16x32xf32>
    %214 = arith.addf %212, %213 : vector<16x32xf32>
    %c0_85 = arith.constant 0 : index
    %c0_86 = arith.constant 0 : index
    %215 = vector.load %arg17[%c0_85, %c0_86] : memref<16x32xf32, #tpu.memory_space<vmem>>, vector<16x32xf32>
    tpu.vector_store %arg17[%c0_85, %c0_86], %214 {strides = array<i32>} : memref<16x32xf32, #tpu.memory_space<vmem>>, vector<16x32xf32>,
    return
  }
  func.func @transform_0(%arg0: i32) -> (i32, i32) {
    %c0_i32 = arith.constant 0 : i32
    %c0_i32_0 = arith.constant 0 : i32
    %c0_i32_1 = arith.constant 0 : i32
    return %c0_i32, %c0_i32_0 : i32, i32
  }
  func.func @transform_1(%arg0: i32) -> (i32, i32) {
    %c0_i32 = arith.constant 0 : i32
    %c0_i32_0 = arith.constant 0 : i32
    %c0_i32_1 = arith.constant 0 : i32
    return %c0_i32, %c0_i32_0 : i32, i32
  }
  func.func @transform_2(%arg0: i32) -> (i32, i32) {
    %c0_i32 = arith.constant 0 : i32
    %c0_i32_0 = arith.constant 0 : i32
    %c0_i32_1 = arith.constant 0 : i32
    return %c0_i32, %c0_i32_0 : i32, i32
  }
  func.func @transform_3(%arg0: i32) -> (i32, i32) {
    %c0_i32 = arith.constant 0 : i32
    %c0_i32_0 = arith.constant 0 : i32
    %c0_i32_1 = arith.constant 0 : i32
    return %c0_i32, %c0_i32_0 : i32, i32
  }
  func.func @transform_4(%arg0: i32) -> (i32, i32) {
    %c0_i32 = arith.constant 0 : i32
    %c0_i32_0 = arith.constant 0 : i32
    %c0_i32_1 = arith.constant 0 : i32
    return %c0_i32, %c0_i32_0 : i32, i32
  }
  func.func @transform_5(%arg0: i32) -> (i32, i32) {
    %c0_i32 = arith.constant 0 : i32
    %c0_i32_0 = arith.constant 0 : i32
    %c0_i32_1 = arith.constant 0 : i32
    return %c0_i32, %c0_i32_0 : i32, i32
  }
  func.func @transform_6(%arg0: i32) -> (i32, i32) {
    %c0_i32 = arith.constant 0 : i32
    %c0_i32_0 = arith.constant 0 : i32
    %c0_i32_1 = arith.constant 0 : i32
    return %c0_i32, %c0_i32_0 : i32, i32
  }
  func.func @transform_7(%arg0: i32) -> (i32, i32) {
    %c0_i32 = arith.constant 0 : i32
    %c0_i32_0 = arith.constant 0 : i32
    %c0_i32_1 = arith.constant 0 : i32
    return %c0_i32, %c0_i32_0 : i32, i32
  }
  func.func @transform_8(%arg0: i32) -> (i32, i32) {
    %c0_i32 = arith.constant 0 : i32
    %c0_i32_0 = arith.constant 0 : i32
    %c0_i32_1 = arith.constant 0 : i32
    return %c0_i32, %c0_i32_0 : i32, i32
  }
  func.func @transform_9(%arg0: i32) -> (i32, i32) {
    %c0_i32 = arith.constant 0 : i32
    %c0_i32_0 = arith.constant 0 : i32
    %c0_i32_1 = arith.constant 0 : i32
    return %c0_i32, %c0_i32_0 : i32, i32
  }
  func.func @transform_10(%arg0: i32) -> (i32, i32) {
    %c0_i32 = arith.constant 0 : i32
    %c0_i32_0 = arith.constant 0 : i32
    %c0_i32_1 = arith.constant 0 : i32
    return %c0_i32, %c0_i32_0 : i32, i32
  }
  func.func @transform_11(%arg0: i32) -> (i32, i32) {
    %c0_i32 = arith.constant 0 : i32
    %c0_i32_0 = arith.constant 0 : i32
    %c0_i32_1 = arith.constant 0 : i32
    return %c0_i32, %c0_i32_0 : i32, i32
  }
  func.func @transform_12(%arg0: i32) -> (i32, i32) {
    %c0_i32 = arith.constant 0 : i32
    %c0_i32_0 = arith.constant 0 : i32
    %c0_i32_1 = arith.constant 0 : i32
    return %c0_i32, %c0_i32_0 : i32, i32
  }
  func.func @transform_13(%arg0: i32) -> (i32, i32) {
    %c0_i32 = arith.constant 0 : i32
    %c0_i32_0 = arith.constant 0 : i32
    %c0_i32_1 = arith.constant 0 : i32
    return %c0_i32, %c0_i32_0 : i32, i32
  }
  func.func @transform_14(%arg0: i32) -> (i32, i32) {
    %c0_i32 = arith.constant 0 : i32
    %c0_i32_0 = arith.constant 0 : i32
    %c0_i32_1 = arith.constant 0 : i32
    return %c0_i32, %c0_i32_0 : i32, i32
  }
  func.func @transform_15(%arg0: i32) -> (i32, i32) {
    %c0_i32 = arith.constant 0 : i32
    %c0_i32_0 = arith.constant 0 : i32
    %c0_i32_1 = arith.constant 0 : i32
    return %c0_i32, %c0_i32_0 : i32, i32
  }
  func.func @transform_16(%arg0: i32) -> (i32, i32) {
    %c0_i32 = arith.constant 0 : i32
    %c0_i32_0 = arith.constant 0 : i32
    %c0_i32_1 = arith.constant 0 : i32
    return %c0_i32, %c0_i32_0 : i32, i32
  }
}

module attributes {stable_mosaic.version = 11 : i64} {
  func.func @_decoder_kernel(%arg0: i32, %arg1: memref<16x32xf32, #tpu.memory_space<vmem>>, %arg2: memref<2x8xf32, #tpu.memory_space<vmem>>, %arg3: memref<16x32xf32, #tpu.memory_space<vmem>>, %arg4: memref<2x8xf32, #tpu.memory_space<vmem>>, %arg5: memref<1x32xf32, #tpu.memory_space<vmem>>, %arg6: memref<1x32xf32, #tpu.memory_space<vmem>>, %arg7: memref<32x96xf32, #tpu.memory_space<vmem>>, %arg8: memref<1x96xf32, #tpu.memory_space<vmem>>, %arg9: memref<32x32xf32, #tpu.memory_space<vmem>>, %arg10: memref<1x32xf32, #tpu.memory_space<vmem>>, %arg11: memref<1x32xf32, #tpu.memory_space<vmem>>, %arg12: memref<1x32xf32, #tpu.memory_space<vmem>>, %arg13: memref<32x32xf32, #tpu.memory_space<vmem>>, %arg14: memref<1x32xf32, #tpu.memory_space<vmem>>, %arg15: memref<32x64xf32, #tpu.memory_space<vmem>>, %arg16: memref<1x64xf32, #tpu.memory_space<vmem>>, %arg17: memref<32x32xf32, #tpu.memory_space<vmem>>, %arg18: memref<1x32xf32, #tpu.memory_space<vmem>>, %arg19: memref<1x32xf32, #tpu.memory_space<vmem>>, %arg20: memref<1x32xf32, #tpu.memory_space<vmem>>, %arg21: memref<32x128xf32, #tpu.memory_space<vmem>>, %arg22: memref<1x128xf32, #tpu.memory_space<vmem>>, %arg23: memref<128x32xf32, #tpu.memory_space<vmem>>, %arg24: memref<1x32xf32, #tpu.memory_space<vmem>>, %arg25: memref<1x32xf32, #tpu.memory_space<vmem>>, %arg26: memref<1x32xf32, #tpu.memory_space<vmem>>, %arg27: memref<64x32xf32, #tpu.memory_space<vmem>>, %arg28: memref<16x1xi32, #tpu.memory_space<vmem>>, %arg29: memref<16x64xf32, #tpu.memory_space<vmem>>, %arg30: memref<1x1xf32, #tpu.memory_space<vmem>>, %arg31: memref<16x32xf32, #tpu.memory_space<vmem>>) attributes {dimension_semantics = [#tpu.dimension_semantics<arbitrary>], iteration_bounds = array<i64: 1>, scalar_prefetch = 0 : i64, scratch_operands = 1 : i64, tpu.core_type = #tpu.core_type<tc>, window_params = [{pipeline_mode = #tpu.pipeline_mode<synchronous>, transform_indices = @transform_0, window_bounds = array<i64: 16, 32>}, {pipeline_mode = #tpu.pipeline_mode<synchronous>, transform_indices = @transform_1, window_bounds = array<i64: 2, 8>}, {pipeline_mode = #tpu.pipeline_mode<synchronous>, transform_indices = @transform_2, window_bounds = array<i64: 16, 32>}, {pipeline_mode = #tpu.pipeline_mode<synchronous>, transform_indices = @transform_3, window_bounds = array<i64: 2, 8>}, {pipeline_mode = #tpu.pipeline_mode<synchronous>, transform_indices = @transform_4, window_bounds = array<i64: 1, 32>}, {pipeline_mode = #tpu.pipeline_mode<synchronous>, transform_indices = @transform_5, window_bounds = array<i64: 1, 32>}, {pipeline_mode = #tpu.pipeline_mode<synchronous>, transform_indices = @transform_6, window_bounds = array<i64: 32, 96>}, {pipeline_mode = #tpu.pipeline_mode<synchronous>, transform_indices = @transform_7, window_bounds = array<i64: 1, 96>}, {pipeline_mode = #tpu.pipeline_mode<synchronous>, transform_indices = @transform_8, window_bounds = array<i64: 32, 32>}, {pipeline_mode = #tpu.pipeline_mode<synchronous>, transform_indices = @transform_9, window_bounds = array<i64: 1, 32>}, {pipeline_mode = #tpu.pipeline_mode<synchronous>, transform_indices = @transform_10, window_bounds = array<i64: 1, 32>}, {pipeline_mode = #tpu.pipeline_mode<synchronous>, transform_indices = @transform_11, window_bounds = array<i64: 1, 32>}, {pipeline_mode = #tpu.pipeline_mode<synchronous>, transform_indices = @transform_12, window_bounds = array<i64: 32, 32>}, {pipeline_mode = #tpu.pipeline_mode<synchronous>, transform_indices = @transform_13, window_bounds = array<i64: 1, 32>}, {pipeline_mode = #tpu.pipeline_mode<synchronous>, transform_indices = @transform_14, window_bounds = array<i64: 32, 64>}, {pipeline_mode = #tpu.pipeline_mode<synchronous>, transform_indices = @transform_15, window_bounds = array<i64: 1, 64>}, {pipeline_mode = #tpu.pipeline_mode<synchronous>, transform_indices = @transform_16, window_bounds = array<i64: 32, 32>}, {pipeline_mode = #tpu.pipeline_mode<synchronous>, transform_indices = @transform_17, window_bounds = array<i64: 1, 32>}, {pipeline_mode = #tpu.pipeline_mode<synchronous>, transform_indices = @transform_18, window_bounds = array<i64: 1, 32>}, {pipeline_mode = #tpu.pipeline_mode<synchronous>, transform_indices = @transform_19, window_bounds = array<i64: 1, 32>}, {pipeline_mode = #tpu.pipeline_mode<synchronous>, transform_indices = @transform_20, window_bounds = array<i64: 32, 128>}, {pipeline_mode = #tpu.pipeline_mode<synchronous>, transform_indices = @transform_21, window_bounds = array<i64: 1, 128>}, {pipeline_mode = #tpu.pipeline_mode<synchronous>, transform_indices = @transform_22, window_bounds = array<i64: 128, 32>}, {pipeline_mode = #tpu.pipeline_mode<synchronous>, transform_indices = @transform_23, window_bounds = array<i64: 1, 32>}, {pipeline_mode = #tpu.pipeline_mode<synchronous>, transform_indices = @transform_24, window_bounds = array<i64: 1, 32>}, {pipeline_mode = #tpu.pipeline_mode<synchronous>, transform_indices = @transform_25, window_bounds = array<i64: 1, 32>}, {pipeline_mode = #tpu.pipeline_mode<synchronous>, transform_indices = @transform_26, window_bounds = array<i64: 64, 32>}, {pipeline_mode = #tpu.pipeline_mode<synchronous>, transform_indices = @transform_27, window_bounds = array<i64: 16, 1>}, {pipeline_mode = #tpu.pipeline_mode<synchronous>, transform_indices = @transform_28, window_bounds = array<i64: 16, 64>}, {pipeline_mode = #tpu.pipeline_mode<synchronous>, transform_indices = @transform_29, window_bounds = array<i64: 1, 1>}]} {
    %c0 = arith.constant 0 : index
    %c0_0 = arith.constant 0 : index
    %0 = vector.load %arg1[%c0, %c0_0] : memref<16x32xf32, #tpu.memory_space<vmem>>, vector<16x32xf32>
    %c0_1 = arith.constant 0 : index
    %c0_2 = arith.constant 0 : index
    %1 = vector.load %arg5[%c0_1, %c0_2] : memref<1x32xf32, #tpu.memory_space<vmem>>, vector<1x32xf32>
    %c0_3 = arith.constant 0 : index
    %c0_4 = arith.constant 0 : index
    %2 = vector.load %arg6[%c0_3, %c0_4] : memref<1x32xf32, #tpu.memory_space<vmem>>, vector<1x32xf32>
    %cst = arith.constant dense<0.000000e+00> : vector<16xf32>
    %3 = vector.multi_reduction <add>, %0, %cst [1] : vector<16x32xf32> to vector<16xf32>
    %4 = vector.shape_cast %3 : vector<16xf32> to vector<16x1xf32>
    %cst_5 = arith.constant 3.200000e+01 : f32
    %5 = vector.broadcast %cst_5 : f32 to vector<16x1xf32>
    %6 = arith.divf %4, %5 : vector<16x1xf32>
    %7 = vector.broadcast %6 : vector<16x1xf32> to vector<16x32xf32>
    %8 = arith.subf %0, %7 : vector<16x32xf32>
    %9 = vector.broadcast %6 : vector<16x1xf32> to vector<16x32xf32>
    %10 = arith.subf %0, %9 : vector<16x32xf32>
    %11 = arith.mulf %8, %10 : vector<16x32xf32>
    %cst_6 = arith.constant dense<0.000000e+00> : vector<16xf32>
    %12 = vector.multi_reduction <add>, %11, %cst_6 [1] : vector<16x32xf32> to vector<16xf32>
    %13 = vector.shape_cast %12 : vector<16xf32> to vector<16x1xf32>
    %cst_7 = arith.constant 3.200000e+01 : f32
    %14 = vector.broadcast %cst_7 : f32 to vector<16x1xf32>
    %15 = arith.divf %13, %14 : vector<16x1xf32>
    %16 = vector.broadcast %6 : vector<16x1xf32> to vector<16x32xf32>
    %17 = arith.subf %0, %16 : vector<16x32xf32>
    %cst_8 = arith.constant 9.99999974E-6 : f32
    %18 = vector.broadcast %cst_8 : f32 to vector<16x1xf32>
    %19 = arith.addf %15, %18 : vector<16x1xf32>
    %20 = math.rsqrt %19 : vector<16x1xf32>
    %21 = vector.broadcast %20 : vector<16x1xf32> to vector<16x32xf32>
    %22 = arith.mulf %17, %21 : vector<16x32xf32>
    %23 = vector.broadcast %1 : vector<1x32xf32> to vector<16x32xf32>
    %24 = arith.mulf %22, %23 : vector<16x32xf32>
    %25 = vector.broadcast %2 : vector<1x32xf32> to vector<16x32xf32>
    %26 = arith.addf %24, %25 : vector<16x32xf32>
    %c0_9 = arith.constant 0 : index
    %c0_10 = arith.constant 0 : index
    %27 = vector.load %arg7[%c0_9, %c0_10] : memref<32x96xf32, #tpu.memory_space<vmem>>, vector<32x96xf32>
    %cst_11 = arith.constant dense<0.000000e+00> : vector<16x96xf32>
    %28 = tpu.matmul %26, %27, %cst_11 {dimension_numbers = #tpu.dot_dimension_numbers<[1], [0], [0], [1], [0, 0, 1, 1], [], []>} : vector<16x32xf32>, vector<32x96xf32>, vector<16x96xf32> -> vector<16x96xf32>
    %c0_12 = arith.constant 0 : index
    %c0_13 = arith.constant 0 : index
    %29 = vector.load %arg8[%c0_12, %c0_13] : memref<1x96xf32, #tpu.memory_space<vmem>>, vector<1x96xf32>
    %30 = vector.broadcast %29 : vector<1x96xf32> to vector<16x96xf32>
    %31 = arith.addf %28, %30 : vector<16x96xf32>
    %32 = vector.extract_strided_slice %31 {offsets = [0, 0], sizes = [16, 32], strides = [1, 1]} : vector<16x96xf32> to vector<16x32xf32>
    %33 = vector.extract_strided_slice %31 {offsets = [0, 32], sizes = [16, 32], strides = [1, 1]} : vector<16x96xf32> to vector<16x32xf32>
    %34 = vector.extract_strided_slice %31 {offsets = [0, 64], sizes = [16, 32], strides = [1, 1]} : vector<16x96xf32> to vector<16x32xf32>
    %c0_14 = arith.constant 0 : index
    %c0_15 = arith.constant 0 : index
    %35 = vector.load %arg2[%c0_14, %c0_15] : memref<2x8xf32, #tpu.memory_space<vmem>>, vector<2x8xf32>
    %36 = tpu.iota {dimensions = array<i32: 0>} : vector<8x8xi32>
    %37 = tpu.iota {dimensions = array<i32: 1>} : vector<8x8xi32>
    %38 = arith.cmpi sle, %37, %36 : vector<8x8xi32>
    %39 = vector.extract_strided_slice %35 {offsets = [0, 0], sizes = [1, 8], strides = [1, 1]} : vector<2x8xf32> to vector<1x8xf32>
    %cst_16 = arith.constant 5.000000e-01 : f32
    %40 = vector.broadcast %cst_16 : f32 to vector<1x8xf32>
    %41 = arith.cmpf ogt, %39, %40 : vector<1x8xf32>
    %42 = vector.broadcast %41 : vector<1x8xi1> to vector<8x8xi1>
    %43 = arith.andi %38, %42 : vector<8x8xi1>
    %cst_17 = arith.constant 0.000000e+00 : f32
    %cst_18 = arith.constant -1.000000e+09 : f32
    %44 = vector.broadcast %cst_17 : f32 to vector<8x8xf32>
    %45 = vector.broadcast %cst_18 : f32 to vector<8x8xf32>
    %46 = arith.select %43, %44, %45 : vector<8x8xi1>, vector<8x8xf32>
    %47 = vector.extract_strided_slice %35 {offsets = [1, 0], sizes = [1, 8], strides = [1, 1]} : vector<2x8xf32> to vector<1x8xf32>
    %cst_19 = arith.constant 5.000000e-01 : f32
    %48 = vector.broadcast %cst_19 : f32 to vector<1x8xf32>
    %49 = arith.cmpf ogt, %47, %48 : vector<1x8xf32>
    %50 = vector.broadcast %49 : vector<1x8xi1> to vector<8x8xi1>
    %51 = arith.andi %38, %50 : vector<8x8xi1>
    %cst_20 = arith.constant 0.000000e+00 : f32
    %cst_21 = arith.constant -1.000000e+09 : f32
    %52 = vector.broadcast %cst_20 : f32 to vector<8x8xf32>
    %53 = vector.broadcast %cst_21 : f32 to vector<8x8xf32>
    %54 = arith.select %51, %52, %53 : vector<8x8xi1>, vector<8x8xf32>
    %c0_22 = arith.constant 0 : index
    %c0_23 = arith.constant 0 : index
    %55 = vector.load %arg9[%c0_22, %c0_23] : memref<32x32xf32, #tpu.memory_space<vmem>>, vector<32x32xf32>
    %c0_24 = arith.constant 0 : index
    %c0_25 = arith.constant 0 : index
    %56 = vector.load %arg10[%c0_24, %c0_25] : memref<1x32xf32, #tpu.memory_space<vmem>>, vector<1x32xf32>
    %57 = vector.extract_strided_slice %32 {offsets = [0, 0], sizes = [8, 32], strides = [1, 1]} : vector<16x32xf32> to vector<8x32xf32>
    %58 = vector.extract_strided_slice %33 {offsets = [0, 0], sizes = [8, 32], strides = [1, 1]} : vector<16x32xf32> to vector<8x32xf32>
    %59 = vector.extract_strided_slice %34 {offsets = [0, 0], sizes = [8, 32], strides = [1, 1]} : vector<16x32xf32> to vector<8x32xf32>
    %60 = vector.extract_strided_slice %57 {offsets = [0, 0], sizes = [8, 16], strides = [1, 1]} : vector<8x32xf32> to vector<8x16xf32>
    %61 = vector.extract_strided_slice %58 {offsets = [0, 0], sizes = [8, 16], strides = [1, 1]} : vector<8x32xf32> to vector<8x16xf32>
    %62 = vector.extract_strided_slice %59 {offsets = [0, 0], sizes = [8, 16], strides = [1, 1]} : vector<8x32xf32> to vector<8x16xf32>
    %cst_26 = arith.constant dense<0.000000e+00> : vector<8x8xf32>
    %63 = tpu.matmul %60, %61, %cst_26 {dimension_numbers = #tpu.dot_dimension_numbers<[1], [1], [0], [0], [0, 0, 1, 0], [], []>} : vector<8x16xf32>, vector<8x16xf32>, vector<8x8xf32> -> vector<8x8xf32>
    %cst_27 = arith.constant 2.500000e-01 : f32
    %64 = vector.broadcast %cst_27 : f32 to vector<8x8xf32>
    %65 = arith.mulf %63, %64 : vector<8x8xf32>
    %66 = arith.addf %65, %46 : vector<8x8xf32>
    %cst_28 = arith.constant dense<0xFF800000> : vector<8xf32>
    %67 = vector.multi_reduction <maximumf>, %66, %cst_28 [1] : vector<8x8xf32> to vector<8xf32>
    %68 = vector.shape_cast %67 : vector<8xf32> to vector<8x1xf32>
    %69 = vector.broadcast %68 : vector<8x1xf32> to vector<8x8xf32>
    %70 = arith.subf %66, %69 : vector<8x8xf32>
    %71 = math.exp %70 : vector<8x8xf32>
    %cst_29 = arith.constant dense<0.000000e+00> : vector<8xf32>
    %72 = vector.multi_reduction <add>, %71, %cst_29 [1] : vector<8x8xf32> to vector<8xf32>
    %73 = vector.shape_cast %72 : vector<8xf32> to vector<8x1xf32>
    %74 = tpu.reciprocal %73 {approx = true} : vector<8x1xf32> -> vector<8x1xf32>
    %75 = vector.broadcast %74 : vector<8x1xf32> to vector<8x8xf32>
    %76 = arith.mulf %71, %75 : vector<8x8xf32>
    %cst_30 = arith.constant dense<0.000000e+00> : vector<8x16xf32>
    %77 = tpu.matmul %76, %62, %cst_30 {dimension_numbers = #tpu.dot_dimension_numbers<[1], [0], [0], [1], [0, 0, 1, 1], [], []>} : vector<8x8xf32>, vector<8x16xf32>, vector<8x16xf32> -> vector<8x16xf32>
    %c0_31 = arith.constant 0 : index
    %c0_32 = arith.constant 0 : index
    %78 = vector.load %arg31[%c0_31, %c0_32] : memref<16x32xf32, #tpu.memory_space<vmem>>, vector<8x16xf32>
    tpu.vector_store %arg31[%c0_31, %c0_32], %77 {strides = array<i32>} : memref<16x32xf32, #tpu.memory_space<vmem>>, vector<8x16xf32>,
    %79 = vector.extract_strided_slice %57 {offsets = [0, 16], sizes = [8, 16], strides = [1, 1]} : vector<8x32xf32> to vector<8x16xf32>
    %80 = vector.extract_strided_slice %58 {offsets = [0, 16], sizes = [8, 16], strides = [1, 1]} : vector<8x32xf32> to vector<8x16xf32>
    %81 = vector.extract_strided_slice %59 {offsets = [0, 16], sizes = [8, 16], strides = [1, 1]} : vector<8x32xf32> to vector<8x16xf32>
    %cst_33 = arith.constant dense<0.000000e+00> : vector<8x8xf32>
    %82 = tpu.matmul %79, %80, %cst_33 {dimension_numbers = #tpu.dot_dimension_numbers<[1], [1], [0], [0], [0, 0, 1, 0], [], []>} : vector<8x16xf32>, vector<8x16xf32>, vector<8x8xf32> -> vector<8x8xf32>
    %cst_34 = arith.constant 2.500000e-01 : f32
    %83 = vector.broadcast %cst_34 : f32 to vector<8x8xf32>
    %84 = arith.mulf %82, %83 : vector<8x8xf32>
    %85 = arith.addf %84, %46 : vector<8x8xf32>
    %cst_35 = arith.constant dense<0xFF800000> : vector<8xf32>
    %86 = vector.multi_reduction <maximumf>, %85, %cst_35 [1] : vector<8x8xf32> to vector<8xf32>
    %87 = vector.shape_cast %86 : vector<8xf32> to vector<8x1xf32>
    %88 = vector.broadcast %87 : vector<8x1xf32> to vector<8x8xf32>
    %89 = arith.subf %85, %88 : vector<8x8xf32>
    %90 = math.exp %89 : vector<8x8xf32>
    %cst_36 = arith.constant dense<0.000000e+00> : vector<8xf32>
    %91 = vector.multi_reduction <add>, %90, %cst_36 [1] : vector<8x8xf32> to vector<8xf32>
    %92 = vector.shape_cast %91 : vector<8xf32> to vector<8x1xf32>
    %93 = tpu.reciprocal %92 {approx = true} : vector<8x1xf32> -> vector<8x1xf32>
    %94 = vector.broadcast %93 : vector<8x1xf32> to vector<8x8xf32>
    %95 = arith.mulf %90, %94 : vector<8x8xf32>
    %cst_37 = arith.constant dense<0.000000e+00> : vector<8x16xf32>
    %96 = tpu.matmul %95, %81, %cst_37 {dimension_numbers = #tpu.dot_dimension_numbers<[1], [0], [0], [1], [0, 0, 1, 1], [], []>} : vector<8x8xf32>, vector<8x16xf32>, vector<8x16xf32> -> vector<8x16xf32>
    %c0_38 = arith.constant 0 : index
    %c16 = arith.constant 16 : index
    %97 = vector.load %arg31[%c0_38, %c16] : memref<16x32xf32, #tpu.memory_space<vmem>>, vector<8x16xf32>
    tpu.vector_store %arg31[%c0_38, %c16], %96 {strides = array<i32>} : memref<16x32xf32, #tpu.memory_space<vmem>>, vector<8x16xf32>,
    %98 = vector.extract_strided_slice %32 {offsets = [8, 0], sizes = [8, 32], strides = [1, 1]} : vector<16x32xf32> to vector<8x32xf32>
    %99 = vector.extract_strided_slice %33 {offsets = [8, 0], sizes = [8, 32], strides = [1, 1]} : vector<16x32xf32> to vector<8x32xf32>
    %100 = vector.extract_strided_slice %34 {offsets = [8, 0], sizes = [8, 32], strides = [1, 1]} : vector<16x32xf32> to vector<8x32xf32>
    %101 = vector.extract_strided_slice %98 {offsets = [0, 0], sizes = [8, 16], strides = [1, 1]} : vector<8x32xf32> to vector<8x16xf32>
    %102 = vector.extract_strided_slice %99 {offsets = [0, 0], sizes = [8, 16], strides = [1, 1]} : vector<8x32xf32> to vector<8x16xf32>
    %103 = vector.extract_strided_slice %100 {offsets = [0, 0], sizes = [8, 16], strides = [1, 1]} : vector<8x32xf32> to vector<8x16xf32>
    %cst_39 = arith.constant dense<0.000000e+00> : vector<8x8xf32>
    %104 = tpu.matmul %101, %102, %cst_39 {dimension_numbers = #tpu.dot_dimension_numbers<[1], [1], [0], [0], [0, 0, 1, 0], [], []>} : vector<8x16xf32>, vector<8x16xf32>, vector<8x8xf32> -> vector<8x8xf32>
    %cst_40 = arith.constant 2.500000e-01 : f32
    %105 = vector.broadcast %cst_40 : f32 to vector<8x8xf32>
    %106 = arith.mulf %104, %105 : vector<8x8xf32>
    %107 = arith.addf %106, %54 : vector<8x8xf32>
    %cst_41 = arith.constant dense<0xFF800000> : vector<8xf32>
    %108 = vector.multi_reduction <maximumf>, %107, %cst_41 [1] : vector<8x8xf32> to vector<8xf32>
    %109 = vector.shape_cast %108 : vector<8xf32> to vector<8x1xf32>
    %110 = vector.broadcast %109 : vector<8x1xf32> to vector<8x8xf32>
    %111 = arith.subf %107, %110 : vector<8x8xf32>
    %112 = math.exp %111 : vector<8x8xf32>
    %cst_42 = arith.constant dense<0.000000e+00> : vector<8xf32>
    %113 = vector.multi_reduction <add>, %112, %cst_42 [1] : vector<8x8xf32> to vector<8xf32>
    %114 = vector.shape_cast %113 : vector<8xf32> to vector<8x1xf32>
    %115 = tpu.reciprocal %114 {approx = true} : vector<8x1xf32> -> vector<8x1xf32>
    %116 = vector.broadcast %115 : vector<8x1xf32> to vector<8x8xf32>
    %117 = arith.mulf %112, %116 : vector<8x8xf32>
    %cst_43 = arith.constant dense<0.000000e+00> : vector<8x16xf32>
    %118 = tpu.matmul %117, %103, %cst_43 {dimension_numbers = #tpu.dot_dimension_numbers<[1], [0], [0], [1], [0, 0, 1, 1], [], []>} : vector<8x8xf32>, vector<8x16xf32>, vector<8x16xf32> -> vector<8x16xf32>
    %c8 = arith.constant 8 : index
    %c0_44 = arith.constant 0 : index
    %119 = vector.load %arg31[%c8, %c0_44] : memref<16x32xf32, #tpu.memory_space<vmem>>, vector<8x16xf32>
    tpu.vector_store %arg31[%c8, %c0_44], %118 {strides = array<i32>} : memref<16x32xf32, #tpu.memory_space<vmem>>, vector<8x16xf32>,
    %120 = vector.extract_strided_slice %98 {offsets = [0, 16], sizes = [8, 16], strides = [1, 1]} : vector<8x32xf32> to vector<8x16xf32>
    %121 = vector.extract_strided_slice %99 {offsets = [0, 16], sizes = [8, 16], strides = [1, 1]} : vector<8x32xf32> to vector<8x16xf32>
    %122 = vector.extract_strided_slice %100 {offsets = [0, 16], sizes = [8, 16], strides = [1, 1]} : vector<8x32xf32> to vector<8x16xf32>
    %cst_45 = arith.constant dense<0.000000e+00> : vector<8x8xf32>
    %123 = tpu.matmul %120, %121, %cst_45 {dimension_numbers = #tpu.dot_dimension_numbers<[1], [1], [0], [0], [0, 0, 1, 0], [], []>} : vector<8x16xf32>, vector<8x16xf32>, vector<8x8xf32> -> vector<8x8xf32>
    %cst_46 = arith.constant 2.500000e-01 : f32
    %124 = vector.broadcast %cst_46 : f32 to vector<8x8xf32>
    %125 = arith.mulf %123, %124 : vector<8x8xf32>
    %126 = arith.addf %125, %54 : vector<8x8xf32>
    %cst_47 = arith.constant dense<0xFF800000> : vector<8xf32>
    %127 = vector.multi_reduction <maximumf>, %126, %cst_47 [1] : vector<8x8xf32> to vector<8xf32>
    %128 = vector.shape_cast %127 : vector<8xf32> to vector<8x1xf32>
    %129 = vector.broadcast %128 : vector<8x1xf32> to vector<8x8xf32>
    %130 = arith.subf %126, %129 : vector<8x8xf32>
    %131 = math.exp %130 : vector<8x8xf32>
    %cst_48 = arith.constant dense<0.000000e+00> : vector<8xf32>
    %132 = vector.multi_reduction <add>, %131, %cst_48 [1] : vector<8x8xf32> to vector<8xf32>
    %133 = vector.shape_cast %132 : vector<8xf32> to vector<8x1xf32>
    %134 = tpu.reciprocal %133 {approx = true} : vector<8x1xf32> -> vector<8x1xf32>
    %135 = vector.broadcast %134 : vector<8x1xf32> to vector<8x8xf32>
    %136 = arith.mulf %131, %135 : vector<8x8xf32>
    %cst_49 = arith.constant dense<0.000000e+00> : vector<8x16xf32>
    %137 = tpu.matmul %136, %122, %cst_49 {dimension_numbers = #tpu.dot_dimension_numbers<[1], [0], [0], [1], [0, 0, 1, 1], [], []>} : vector<8x8xf32>, vector<8x16xf32>, vector<8x16xf32> -> vector<8x16xf32>
    %c8_50 = arith.constant 8 : index
    %c16_51 = arith.constant 16 : index
    %138 = vector.load %arg31[%c8_50, %c16_51] : memref<16x32xf32, #tpu.memory_space<vmem>>, vector<8x16xf32>
    tpu.vector_store %arg31[%c8_50, %c16_51], %137 {strides = array<i32>} : memref<16x32xf32, #tpu.memory_space<vmem>>, vector<8x16xf32>,
    %c0_52 = arith.constant 0 : index
    %c0_53 = arith.constant 0 : index
    %139 = vector.load %arg31[%c0_52, %c0_53] : memref<16x32xf32, #tpu.memory_space<vmem>>, vector<16x32xf32>
    %cst_54 = arith.constant dense<0.000000e+00> : vector<16x32xf32>
    %140 = tpu.matmul %139, %55, %cst_54 {dimension_numbers = #tpu.dot_dimension_numbers<[1], [0], [0], [1], [0, 0, 1, 1], [], []>} : vector<16x32xf32>, vector<32x32xf32>, vector<16x32xf32> -> vector<16x32xf32>
    %141 = vector.broadcast %56 : vector<1x32xf32> to vector<16x32xf32>
    %142 = arith.addf %140, %141 : vector<16x32xf32>
    %143 = arith.addf %0, %142 : vector<16x32xf32>
    %c0_55 = arith.constant 0 : index
    %c0_56 = arith.constant 0 : index
    %144 = vector.load %arg11[%c0_55, %c0_56] : memref<1x32xf32, #tpu.memory_space<vmem>>, vector<1x32xf32>
    %c0_57 = arith.constant 0 : index
    %c0_58 = arith.constant 0 : index
    %145 = vector.load %arg12[%c0_57, %c0_58] : memref<1x32xf32, #tpu.memory_space<vmem>>, vector<1x32xf32>
    %cst_59 = arith.constant dense<0.000000e+00> : vector<16xf32>
    %146 = vector.multi_reduction <add>, %143, %cst_59 [1] : vector<16x32xf32> to vector<16xf32>
    %147 = vector.shape_cast %146 : vector<16xf32> to vector<16x1xf32>
    %cst_60 = arith.constant 3.200000e+01 : f32
    %148 = vector.broadcast %cst_60 : f32 to vector<16x1xf32>
    %149 = arith.divf %147, %148 : vector<16x1xf32>
    %150 = vector.broadcast %149 : vector<16x1xf32> to vector<16x32xf32>
    %151 = arith.subf %143, %150 : vector<16x32xf32>
    %152 = vector.broadcast %149 : vector<16x1xf32> to vector<16x32xf32>
    %153 = arith.subf %143, %152 : vector<16x32xf32>
    %154 = arith.mulf %151, %153 : vector<16x32xf32>
    %cst_61 = arith.constant dense<0.000000e+00> : vector<16xf32>
    %155 = vector.multi_reduction <add>, %154, %cst_61 [1] : vector<16x32xf32> to vector<16xf32>
    %156 = vector.shape_cast %155 : vector<16xf32> to vector<16x1xf32>
    %cst_62 = arith.constant 3.200000e+01 : f32
    %157 = vector.broadcast %cst_62 : f32 to vector<16x1xf32>
    %158 = arith.divf %156, %157 : vector<16x1xf32>
    %159 = vector.broadcast %149 : vector<16x1xf32> to vector<16x32xf32>
    %160 = arith.subf %143, %159 : vector<16x32xf32>
    %cst_63 = arith.constant 9.99999974E-6 : f32
    %161 = vector.broadcast %cst_63 : f32 to vector<16x1xf32>
    %162 = arith.addf %158, %161 : vector<16x1xf32>
    %163 = math.rsqrt %162 : vector<16x1xf32>
    %164 = vector.broadcast %163 : vector<16x1xf32> to vector<16x32xf32>
    %165 = arith.mulf %160, %164 : vector<16x32xf32>
    %166 = vector.broadcast %144 : vector<1x32xf32> to vector<16x32xf32>
    %167 = arith.mulf %165, %166 : vector<16x32xf32>
    %168 = vector.broadcast %145 : vector<1x32xf32> to vector<16x32xf32>
    %169 = arith.addf %167, %168 : vector<16x32xf32>
    %c0_64 = arith.constant 0 : index
    %c0_65 = arith.constant 0 : index
    %170 = vector.load %arg13[%c0_64, %c0_65] : memref<32x32xf32, #tpu.memory_space<vmem>>, vector<32x32xf32>
    %cst_66 = arith.constant dense<0.000000e+00> : vector<16x32xf32>
    %171 = tpu.matmul %169, %170, %cst_66 {dimension_numbers = #tpu.dot_dimension_numbers<[1], [0], [0], [1], [0, 0, 1, 1], [], []>} : vector<16x32xf32>, vector<32x32xf32>, vector<16x32xf32> -> vector<16x32xf32>
    %c0_67 = arith.constant 0 : index
    %c0_68 = arith.constant 0 : index
    %172 = vector.load %arg14[%c0_67, %c0_68] : memref<1x32xf32, #tpu.memory_space<vmem>>, vector<1x32xf32>
    %173 = vector.broadcast %172 : vector<1x32xf32> to vector<16x32xf32>
    %174 = arith.addf %171, %173 : vector<16x32xf32>
    %c0_69 = arith.constant 0 : index
    %c0_70 = arith.constant 0 : index
    %175 = vector.load %arg3[%c0_69, %c0_70] : memref<16x32xf32, #tpu.memory_space<vmem>>, vector<16x32xf32>
    %c0_71 = arith.constant 0 : index
    %c0_72 = arith.constant 0 : index
    %176 = vector.load %arg15[%c0_71, %c0_72] : memref<32x64xf32, #tpu.memory_space<vmem>>, vector<32x64xf32>
    %cst_73 = arith.constant dense<0.000000e+00> : vector<16x64xf32>
    %177 = tpu.matmul %175, %176, %cst_73 {dimension_numbers = #tpu.dot_dimension_numbers<[1], [0], [0], [1], [0, 0, 1, 1], [], []>} : vector<16x32xf32>, vector<32x64xf32>, vector<16x64xf32> -> vector<16x64xf32>
    %c0_74 = arith.constant 0 : index
    %c0_75 = arith.constant 0 : index
    %178 = vector.load %arg16[%c0_74, %c0_75] : memref<1x64xf32, #tpu.memory_space<vmem>>, vector<1x64xf32>
    %179 = vector.broadcast %178 : vector<1x64xf32> to vector<16x64xf32>
    %180 = arith.addf %177, %179 : vector<16x64xf32>
    %181 = vector.extract_strided_slice %180 {offsets = [0, 0], sizes = [16, 32], strides = [1, 1]} : vector<16x64xf32> to vector<16x32xf32>
    %182 = vector.extract_strided_slice %180 {offsets = [0, 32], sizes = [16, 32], strides = [1, 1]} : vector<16x64xf32> to vector<16x32xf32>
    %c0_76 = arith.constant 0 : index
    %c0_77 = arith.constant 0 : index
    %183 = vector.load %arg4[%c0_76, %c0_77] : memref<2x8xf32, #tpu.memory_space<vmem>>, vector<2x8xf32>
    %184 = vector.extract_strided_slice %183 {offsets = [0, 0], sizes = [1, 8], strides = [1, 1]} : vector<2x8xf32> to vector<1x8xf32>
    %cst_78 = arith.constant 1.000000e+00 : f32
    %185 = vector.broadcast %cst_78 : f32 to vector<1x8xf32>
    %186 = arith.subf %185, %184 : vector<1x8xf32>
    %cst_79 = arith.constant -1.000000e+09 : f32
    %187 = vector.broadcast %cst_79 : f32 to vector<1x8xf32>
    %188 = arith.mulf %186, %187 : vector<1x8xf32>
    %189 = vector.extract_strided_slice %183 {offsets = [1, 0], sizes = [1, 8], strides = [1, 1]} : vector<2x8xf32> to vector<1x8xf32>
    %cst_80 = arith.constant 1.000000e+00 : f32
    %190 = vector.broadcast %cst_80 : f32 to vector<1x8xf32>
    %191 = arith.subf %190, %189 : vector<1x8xf32>
    %cst_81 = arith.constant -1.000000e+09 : f32
    %192 = vector.broadcast %cst_81 : f32 to vector<1x8xf32>
    %193 = arith.mulf %191, %192 : vector<1x8xf32>
    %c0_82 = arith.constant 0 : index
    %c0_83 = arith.constant 0 : index
    %194 = vector.load %arg17[%c0_82, %c0_83] : memref<32x32xf32, #tpu.memory_space<vmem>>, vector<32x32xf32>
    %c0_84 = arith.constant 0 : index
    %c0_85 = arith.constant 0 : index
    %195 = vector.load %arg18[%c0_84, %c0_85] : memref<1x32xf32, #tpu.memory_space<vmem>>, vector<1x32xf32>
    %196 = vector.extract_strided_slice %174 {offsets = [0, 0], sizes = [8, 32], strides = [1, 1]} : vector<16x32xf32> to vector<8x32xf32>
    %197 = vector.extract_strided_slice %181 {offsets = [0, 0], sizes = [8, 32], strides = [1, 1]} : vector<16x32xf32> to vector<8x32xf32>
    %198 = vector.extract_strided_slice %182 {offsets = [0, 0], sizes = [8, 32], strides = [1, 1]} : vector<16x32xf32> to vector<8x32xf32>
    %199 = vector.extract_strided_slice %196 {offsets = [0, 0], sizes = [8, 16], strides = [1, 1]} : vector<8x32xf32> to vector<8x16xf32>
    %200 = vector.extract_strided_slice %197 {offsets = [0, 0], sizes = [8, 16], strides = [1, 1]} : vector<8x32xf32> to vector<8x16xf32>
    %201 = vector.extract_strided_slice %198 {offsets = [0, 0], sizes = [8, 16], strides = [1, 1]} : vector<8x32xf32> to vector<8x16xf32>
    %cst_86 = arith.constant dense<0.000000e+00> : vector<8x8xf32>
    %202 = tpu.matmul %199, %200, %cst_86 {dimension_numbers = #tpu.dot_dimension_numbers<[1], [1], [0], [0], [0, 0, 1, 0], [], []>} : vector<8x16xf32>, vector<8x16xf32>, vector<8x8xf32> -> vector<8x8xf32>
    %cst_87 = arith.constant 2.500000e-01 : f32
    %203 = vector.broadcast %cst_87 : f32 to vector<8x8xf32>
    %204 = arith.mulf %202, %203 : vector<8x8xf32>
    %205 = vector.broadcast %188 : vector<1x8xf32> to vector<8x8xf32>
    %206 = arith.addf %204, %205 : vector<8x8xf32>
    %cst_88 = arith.constant dense<0xFF800000> : vector<8xf32>
    %207 = vector.multi_reduction <maximumf>, %206, %cst_88 [1] : vector<8x8xf32> to vector<8xf32>
    %208 = vector.shape_cast %207 : vector<8xf32> to vector<8x1xf32>
    %209 = vector.broadcast %208 : vector<8x1xf32> to vector<8x8xf32>
    %210 = arith.subf %206, %209 : vector<8x8xf32>
    %211 = math.exp %210 : vector<8x8xf32>
    %cst_89 = arith.constant dense<0.000000e+00> : vector<8xf32>
    %212 = vector.multi_reduction <add>, %211, %cst_89 [1] : vector<8x8xf32> to vector<8xf32>
    %213 = vector.shape_cast %212 : vector<8xf32> to vector<8x1xf32>
    %214 = tpu.reciprocal %213 {approx = true} : vector<8x1xf32> -> vector<8x1xf32>
    %215 = vector.broadcast %214 : vector<8x1xf32> to vector<8x8xf32>
    %216 = arith.mulf %211, %215 : vector<8x8xf32>
    %cst_90 = arith.constant dense<0.000000e+00> : vector<8x16xf32>
    %217 = tpu.matmul %216, %201, %cst_90 {dimension_numbers = #tpu.dot_dimension_numbers<[1], [0], [0], [1], [0, 0, 1, 1], [], []>} : vector<8x8xf32>, vector<8x16xf32>, vector<8x16xf32> -> vector<8x16xf32>
    %c0_91 = arith.constant 0 : index
    %c0_92 = arith.constant 0 : index
    %218 = vector.load %arg31[%c0_91, %c0_92] : memref<16x32xf32, #tpu.memory_space<vmem>>, vector<8x16xf32>
    tpu.vector_store %arg31[%c0_91, %c0_92], %217 {strides = array<i32>} : memref<16x32xf32, #tpu.memory_space<vmem>>, vector<8x16xf32>,
    %219 = vector.extract_strided_slice %196 {offsets = [0, 16], sizes = [8, 16], strides = [1, 1]} : vector<8x32xf32> to vector<8x16xf32>
    %220 = vector.extract_strided_slice %197 {offsets = [0, 16], sizes = [8, 16], strides = [1, 1]} : vector<8x32xf32> to vector<8x16xf32>
    %221 = vector.extract_strided_slice %198 {offsets = [0, 16], sizes = [8, 16], strides = [1, 1]} : vector<8x32xf32> to vector<8x16xf32>
    %cst_93 = arith.constant dense<0.000000e+00> : vector<8x8xf32>
    %222 = tpu.matmul %219, %220, %cst_93 {dimension_numbers = #tpu.dot_dimension_numbers<[1], [1], [0], [0], [0, 0, 1, 0], [], []>} : vector<8x16xf32>, vector<8x16xf32>, vector<8x8xf32> -> vector<8x8xf32>
    %cst_94 = arith.constant 2.500000e-01 : f32
    %223 = vector.broadcast %cst_94 : f32 to vector<8x8xf32>
    %224 = arith.mulf %222, %223 : vector<8x8xf32>
    %225 = vector.broadcast %188 : vector<1x8xf32> to vector<8x8xf32>
    %226 = arith.addf %224, %225 : vector<8x8xf32>
    %cst_95 = arith.constant dense<0xFF800000> : vector<8xf32>
    %227 = vector.multi_reduction <maximumf>, %226, %cst_95 [1] : vector<8x8xf32> to vector<8xf32>
    %228 = vector.shape_cast %227 : vector<8xf32> to vector<8x1xf32>
    %229 = vector.broadcast %228 : vector<8x1xf32> to vector<8x8xf32>
    %230 = arith.subf %226, %229 : vector<8x8xf32>
    %231 = math.exp %230 : vector<8x8xf32>
    %cst_96 = arith.constant dense<0.000000e+00> : vector<8xf32>
    %232 = vector.multi_reduction <add>, %231, %cst_96 [1] : vector<8x8xf32> to vector<8xf32>
    %233 = vector.shape_cast %232 : vector<8xf32> to vector<8x1xf32>
    %234 = tpu.reciprocal %233 {approx = true} : vector<8x1xf32> -> vector<8x1xf32>
    %235 = vector.broadcast %234 : vector<8x1xf32> to vector<8x8xf32>
    %236 = arith.mulf %231, %235 : vector<8x8xf32>
    %cst_97 = arith.constant dense<0.000000e+00> : vector<8x16xf32>
    %237 = tpu.matmul %236, %221, %cst_97 {dimension_numbers = #tpu.dot_dimension_numbers<[1], [0], [0], [1], [0, 0, 1, 1], [], []>} : vector<8x8xf32>, vector<8x16xf32>, vector<8x16xf32> -> vector<8x16xf32>
    %c0_98 = arith.constant 0 : index
    %c16_99 = arith.constant 16 : index
    %238 = vector.load %arg31[%c0_98, %c16_99] : memref<16x32xf32, #tpu.memory_space<vmem>>, vector<8x16xf32>
    tpu.vector_store %arg31[%c0_98, %c16_99], %237 {strides = array<i32>} : memref<16x32xf32, #tpu.memory_space<vmem>>, vector<8x16xf32>,
    %239 = vector.extract_strided_slice %174 {offsets = [8, 0], sizes = [8, 32], strides = [1, 1]} : vector<16x32xf32> to vector<8x32xf32>
    %240 = vector.extract_strided_slice %181 {offsets = [8, 0], sizes = [8, 32], strides = [1, 1]} : vector<16x32xf32> to vector<8x32xf32>
    %241 = vector.extract_strided_slice %182 {offsets = [8, 0], sizes = [8, 32], strides = [1, 1]} : vector<16x32xf32> to vector<8x32xf32>
    %242 = vector.extract_strided_slice %239 {offsets = [0, 0], sizes = [8, 16], strides = [1, 1]} : vector<8x32xf32> to vector<8x16xf32>
    %243 = vector.extract_strided_slice %240 {offsets = [0, 0], sizes = [8, 16], strides = [1, 1]} : vector<8x32xf32> to vector<8x16xf32>
    %244 = vector.extract_strided_slice %241 {offsets = [0, 0], sizes = [8, 16], strides = [1, 1]} : vector<8x32xf32> to vector<8x16xf32>
    %cst_100 = arith.constant dense<0.000000e+00> : vector<8x8xf32>
    %245 = tpu.matmul %242, %243, %cst_100 {dimension_numbers = #tpu.dot_dimension_numbers<[1], [1], [0], [0], [0, 0, 1, 0], [], []>} : vector<8x16xf32>, vector<8x16xf32>, vector<8x8xf32> -> vector<8x8xf32>
    %cst_101 = arith.constant 2.500000e-01 : f32
    %246 = vector.broadcast %cst_101 : f32 to vector<8x8xf32>
    %247 = arith.mulf %245, %246 : vector<8x8xf32>
    %248 = vector.broadcast %193 : vector<1x8xf32> to vector<8x8xf32>
    %249 = arith.addf %247, %248 : vector<8x8xf32>
    %cst_102 = arith.constant dense<0xFF800000> : vector<8xf32>
    %250 = vector.multi_reduction <maximumf>, %249, %cst_102 [1] : vector<8x8xf32> to vector<8xf32>
    %251 = vector.shape_cast %250 : vector<8xf32> to vector<8x1xf32>
    %252 = vector.broadcast %251 : vector<8x1xf32> to vector<8x8xf32>
    %253 = arith.subf %249, %252 : vector<8x8xf32>
    %254 = math.exp %253 : vector<8x8xf32>
    %cst_103 = arith.constant dense<0.000000e+00> : vector<8xf32>
    %255 = vector.multi_reduction <add>, %254, %cst_103 [1] : vector<8x8xf32> to vector<8xf32>
    %256 = vector.shape_cast %255 : vector<8xf32> to vector<8x1xf32>
    %257 = tpu.reciprocal %256 {approx = true} : vector<8x1xf32> -> vector<8x1xf32>
    %258 = vector.broadcast %257 : vector<8x1xf32> to vector<8x8xf32>
    %259 = arith.mulf %254, %258 : vector<8x8xf32>
    %cst_104 = arith.constant dense<0.000000e+00> : vector<8x16xf32>
    %260 = tpu.matmul %259, %244, %cst_104 {dimension_numbers = #tpu.dot_dimension_numbers<[1], [0], [0], [1], [0, 0, 1, 1], [], []>} : vector<8x8xf32>, vector<8x16xf32>, vector<8x16xf32> -> vector<8x16xf32>
    %c8_105 = arith.constant 8 : index
    %c0_106 = arith.constant 0 : index
    %261 = vector.load %arg31[%c8_105, %c0_106] : memref<16x32xf32, #tpu.memory_space<vmem>>, vector<8x16xf32>
    tpu.vector_store %arg31[%c8_105, %c0_106], %260 {strides = array<i32>} : memref<16x32xf32, #tpu.memory_space<vmem>>, vector<8x16xf32>,
    %262 = vector.extract_strided_slice %239 {offsets = [0, 16], sizes = [8, 16], strides = [1, 1]} : vector<8x32xf32> to vector<8x16xf32>
    %263 = vector.extract_strided_slice %240 {offsets = [0, 16], sizes = [8, 16], strides = [1, 1]} : vector<8x32xf32> to vector<8x16xf32>
    %264 = vector.extract_strided_slice %241 {offsets = [0, 16], sizes = [8, 16], strides = [1, 1]} : vector<8x32xf32> to vector<8x16xf32>
    %cst_107 = arith.constant dense<0.000000e+00> : vector<8x8xf32>
    %265 = tpu.matmul %262, %263, %cst_107 {dimension_numbers = #tpu.dot_dimension_numbers<[1], [1], [0], [0], [0, 0, 1, 0], [], []>} : vector<8x16xf32>, vector<8x16xf32>, vector<8x8xf32> -> vector<8x8xf32>
    %cst_108 = arith.constant 2.500000e-01 : f32
    %266 = vector.broadcast %cst_108 : f32 to vector<8x8xf32>
    %267 = arith.mulf %265, %266 : vector<8x8xf32>
    %268 = vector.broadcast %193 : vector<1x8xf32> to vector<8x8xf32>
    %269 = arith.addf %267, %268 : vector<8x8xf32>
    %cst_109 = arith.constant dense<0xFF800000> : vector<8xf32>
    %270 = vector.multi_reduction <maximumf>, %269, %cst_109 [1] : vector<8x8xf32> to vector<8xf32>
    %271 = vector.shape_cast %270 : vector<8xf32> to vector<8x1xf32>
    %272 = vector.broadcast %271 : vector<8x1xf32> to vector<8x8xf32>
    %273 = arith.subf %269, %272 : vector<8x8xf32>
    %274 = math.exp %273 : vector<8x8xf32>
    %cst_110 = arith.constant dense<0.000000e+00> : vector<8xf32>
    %275 = vector.multi_reduction <add>, %274, %cst_110 [1] : vector<8x8xf32> to vector<8xf32>
    %276 = vector.shape_cast %275 : vector<8xf32> to vector<8x1xf32>
    %277 = tpu.reciprocal %276 {approx = true} : vector<8x1xf32> -> vector<8x1xf32>
    %278 = vector.broadcast %277 : vector<8x1xf32> to vector<8x8xf32>
    %279 = arith.mulf %274, %278 : vector<8x8xf32>
    %cst_111 = arith.constant dense<0.000000e+00> : vector<8x16xf32>
    %280 = tpu.matmul %279, %264, %cst_111 {dimension_numbers = #tpu.dot_dimension_numbers<[1], [0], [0], [1], [0, 0, 1, 1], [], []>} : vector<8x8xf32>, vector<8x16xf32>, vector<8x16xf32> -> vector<8x16xf32>
    %c8_112 = arith.constant 8 : index
    %c16_113 = arith.constant 16 : index
    %281 = vector.load %arg31[%c8_112, %c16_113] : memref<16x32xf32, #tpu.memory_space<vmem>>, vector<8x16xf32>
    tpu.vector_store %arg31[%c8_112, %c16_113], %280 {strides = array<i32>} : memref<16x32xf32, #tpu.memory_space<vmem>>, vector<8x16xf32>,
    %c0_114 = arith.constant 0 : index
    %c0_115 = arith.constant 0 : index
    %282 = vector.load %arg31[%c0_114, %c0_115] : memref<16x32xf32, #tpu.memory_space<vmem>>, vector<16x32xf32>
    %cst_116 = arith.constant dense<0.000000e+00> : vector<16x32xf32>
    %283 = tpu.matmul %282, %194, %cst_116 {dimension_numbers = #tpu.dot_dimension_numbers<[1], [0], [0], [1], [0, 0, 1, 1], [], []>} : vector<16x32xf32>, vector<32x32xf32>, vector<16x32xf32> -> vector<16x32xf32>
    %284 = vector.broadcast %195 : vector<1x32xf32> to vector<16x32xf32>
    %285 = arith.addf %283, %284 : vector<16x32xf32>
    %286 = arith.addf %143, %285 : vector<16x32xf32>
    %c0_117 = arith.constant 0 : index
    %c0_118 = arith.constant 0 : index
    %287 = vector.load %arg19[%c0_117, %c0_118] : memref<1x32xf32, #tpu.memory_space<vmem>>, vector<1x32xf32>
    %c0_119 = arith.constant 0 : index
    %c0_120 = arith.constant 0 : index
    %288 = vector.load %arg20[%c0_119, %c0_120] : memref<1x32xf32, #tpu.memory_space<vmem>>, vector<1x32xf32>
    %cst_121 = arith.constant dense<0.000000e+00> : vector<16xf32>
    %289 = vector.multi_reduction <add>, %286, %cst_121 [1] : vector<16x32xf32> to vector<16xf32>
    %290 = vector.shape_cast %289 : vector<16xf32> to vector<16x1xf32>
    %cst_122 = arith.constant 3.200000e+01 : f32
    %291 = vector.broadcast %cst_122 : f32 to vector<16x1xf32>
    %292 = arith.divf %290, %291 : vector<16x1xf32>
    %293 = vector.broadcast %292 : vector<16x1xf32> to vector<16x32xf32>
    %294 = arith.subf %286, %293 : vector<16x32xf32>
    %295 = vector.broadcast %292 : vector<16x1xf32> to vector<16x32xf32>
    %296 = arith.subf %286, %295 : vector<16x32xf32>
    %297 = arith.mulf %294, %296 : vector<16x32xf32>
    %cst_123 = arith.constant dense<0.000000e+00> : vector<16xf32>
    %298 = vector.multi_reduction <add>, %297, %cst_123 [1] : vector<16x32xf32> to vector<16xf32>
    %299 = vector.shape_cast %298 : vector<16xf32> to vector<16x1xf32>
    %cst_124 = arith.constant 3.200000e+01 : f32
    %300 = vector.broadcast %cst_124 : f32 to vector<16x1xf32>
    %301 = arith.divf %299, %300 : vector<16x1xf32>
    %302 = vector.broadcast %292 : vector<16x1xf32> to vector<16x32xf32>
    %303 = arith.subf %286, %302 : vector<16x32xf32>
    %cst_125 = arith.constant 9.99999974E-6 : f32
    %304 = vector.broadcast %cst_125 : f32 to vector<16x1xf32>
    %305 = arith.addf %301, %304 : vector<16x1xf32>
    %306 = math.rsqrt %305 : vector<16x1xf32>
    %307 = vector.broadcast %306 : vector<16x1xf32> to vector<16x32xf32>
    %308 = arith.mulf %303, %307 : vector<16x32xf32>
    %309 = vector.broadcast %287 : vector<1x32xf32> to vector<16x32xf32>
    %310 = arith.mulf %308, %309 : vector<16x32xf32>
    %311 = vector.broadcast %288 : vector<1x32xf32> to vector<16x32xf32>
    %312 = arith.addf %310, %311 : vector<16x32xf32>
    %c0_126 = arith.constant 0 : index
    %c0_127 = arith.constant 0 : index
    %313 = vector.load %arg21[%c0_126, %c0_127] : memref<32x128xf32, #tpu.memory_space<vmem>>, vector<32x128xf32>
    %cst_128 = arith.constant dense<0.000000e+00> : vector<16x128xf32>
    %314 = tpu.matmul %312, %313, %cst_128 {dimension_numbers = #tpu.dot_dimension_numbers<[1], [0], [0], [1], [0, 0, 1, 1], [], []>} : vector<16x32xf32>, vector<32x128xf32>, vector<16x128xf32> -> vector<16x128xf32>
    %c0_129 = arith.constant 0 : index
    %c0_130 = arith.constant 0 : index
    %315 = vector.load %arg22[%c0_129, %c0_130] : memref<1x128xf32, #tpu.memory_space<vmem>>, vector<1x128xf32>
    %316 = vector.broadcast %315 : vector<1x128xf32> to vector<16x128xf32>
    %317 = arith.addf %314, %316 : vector<16x128xf32>
    %318 = arith.mulf %317, %317 : vector<16x128xf32>
    %319 = arith.mulf %317, %318 : vector<16x128xf32>
    %cst_131 = arith.constant 4.471500e-02 : f32
    %320 = vector.broadcast %cst_131 : f32 to vector<16x128xf32>
    %321 = arith.mulf %320, %319 : vector<16x128xf32>
    %322 = arith.addf %317, %321 : vector<16x128xf32>
    %cst_132 = arith.constant 0.797884583 : f32
    %323 = vector.broadcast %cst_132 : f32 to vector<16x128xf32>
    %324 = arith.mulf %323, %322 : vector<16x128xf32>
    %325 = math.tanh %324 : vector<16x128xf32>
    %cst_133 = arith.constant 1.000000e+00 : f32
    %326 = vector.broadcast %cst_133 : f32 to vector<16x128xf32>
    %327 = arith.addf %326, %325 : vector<16x128xf32>
    %cst_134 = arith.constant 5.000000e-01 : f32
    %328 = vector.broadcast %cst_134 : f32 to vector<16x128xf32>
    %329 = arith.mulf %328, %327 : vector<16x128xf32>
    %330 = arith.mulf %317, %329 : vector<16x128xf32>
    %c0_135 = arith.constant 0 : index
    %c0_136 = arith.constant 0 : index
    %331 = vector.load %arg23[%c0_135, %c0_136] : memref<128x32xf32, #tpu.memory_space<vmem>>, vector<128x32xf32>
    %cst_137 = arith.constant dense<0.000000e+00> : vector<16x32xf32>
    %332 = tpu.matmul %330, %331, %cst_137 {dimension_numbers = #tpu.dot_dimension_numbers<[1], [0], [0], [1], [0, 0, 1, 1], [], []>} : vector<16x128xf32>, vector<128x32xf32>, vector<16x32xf32> -> vector<16x32xf32>
    %333 = arith.addf %286, %332 : vector<16x32xf32>
    %c0_138 = arith.constant 0 : index
    %c0_139 = arith.constant 0 : index
    %334 = vector.load %arg24[%c0_138, %c0_139] : memref<1x32xf32, #tpu.memory_space<vmem>>, vector<1x32xf32>
    %335 = vector.broadcast %334 : vector<1x32xf32> to vector<16x32xf32>
    %336 = arith.addf %333, %335 : vector<16x32xf32>
    %c0_140 = arith.constant 0 : index
    %c0_141 = arith.constant 0 : index
    %337 = vector.load %arg25[%c0_140, %c0_141] : memref<1x32xf32, #tpu.memory_space<vmem>>, vector<1x32xf32>
    %c0_142 = arith.constant 0 : index
    %c0_143 = arith.constant 0 : index
    %338 = vector.load %arg26[%c0_142, %c0_143] : memref<1x32xf32, #tpu.memory_space<vmem>>, vector<1x32xf32>
    %cst_144 = arith.constant dense<0.000000e+00> : vector<16xf32>
    %339 = vector.multi_reduction <add>, %336, %cst_144 [1] : vector<16x32xf32> to vector<16xf32>
    %340 = vector.shape_cast %339 : vector<16xf32> to vector<16x1xf32>
    %cst_145 = arith.constant 3.200000e+01 : f32
    %341 = vector.broadcast %cst_145 : f32 to vector<16x1xf32>
    %342 = arith.divf %340, %341 : vector<16x1xf32>
    %343 = vector.broadcast %342 : vector<16x1xf32> to vector<16x32xf32>
    %344 = arith.subf %336, %343 : vector<16x32xf32>
    %345 = vector.broadcast %342 : vector<16x1xf32> to vector<16x32xf32>
    %346 = arith.subf %336, %345 : vector<16x32xf32>
    %347 = arith.mulf %344, %346 : vector<16x32xf32>
    %cst_146 = arith.constant dense<0.000000e+00> : vector<16xf32>
    %348 = vector.multi_reduction <add>, %347, %cst_146 [1] : vector<16x32xf32> to vector<16xf32>
    %349 = vector.shape_cast %348 : vector<16xf32> to vector<16x1xf32>
    %cst_147 = arith.constant 3.200000e+01 : f32
    %350 = vector.broadcast %cst_147 : f32 to vector<16x1xf32>
    %351 = arith.divf %349, %350 : vector<16x1xf32>
    %352 = vector.broadcast %342 : vector<16x1xf32> to vector<16x32xf32>
    %353 = arith.subf %336, %352 : vector<16x32xf32>
    %cst_148 = arith.constant 9.99999974E-6 : f32
    %354 = vector.broadcast %cst_148 : f32 to vector<16x1xf32>
    %355 = arith.addf %351, %354 : vector<16x1xf32>
    %356 = math.rsqrt %355 : vector<16x1xf32>
    %357 = vector.broadcast %356 : vector<16x1xf32> to vector<16x32xf32>
    %358 = arith.mulf %353, %357 : vector<16x32xf32>
    %359 = vector.broadcast %337 : vector<1x32xf32> to vector<16x32xf32>
    %360 = arith.mulf %358, %359 : vector<16x32xf32>
    %361 = vector.broadcast %338 : vector<1x32xf32> to vector<16x32xf32>
    %362 = arith.addf %360, %361 : vector<16x32xf32>
    %c0_149 = arith.constant 0 : index
    %c0_150 = arith.constant 0 : index
    %363 = vector.load %arg27[%c0_149, %c0_150] : memref<64x32xf32, #tpu.memory_space<vmem>>, vector<64x32xf32>
    %cst_151 = arith.constant dense<0.000000e+00> : vector<16x64xf32>
    %364 = tpu.matmul %362, %363, %cst_151 {dimension_numbers = #tpu.dot_dimension_numbers<[1], [1], [0], [0], [0, 0, 1, 0], [], []>} : vector<16x32xf32>, vector<64x32xf32>, vector<16x64xf32> -> vector<16x64xf32>
    %c0_152 = arith.constant 0 : index
    %c0_153 = arith.constant 0 : index
    %365 = vector.load %arg29[%c0_152, %c0_153] : memref<16x64xf32, #tpu.memory_space<vmem>>, vector<16x64xf32>
    tpu.vector_store %arg29[%c0_152, %c0_153], %364 {strides = array<i32>} : memref<16x64xf32, #tpu.memory_space<vmem>>, vector<16x64xf32>,
    %cst_154 = arith.constant dense<0xFF800000> : vector<16xf32>
    %366 = vector.multi_reduction <maximumf>, %364, %cst_154 [1] : vector<16x64xf32> to vector<16xf32>
    %367 = vector.shape_cast %366 : vector<16xf32> to vector<16x1xf32>
    %368 = vector.broadcast %367 : vector<16x1xf32> to vector<16x64xf32>
    %369 = arith.subf %364, %368 : vector<16x64xf32>
    %370 = math.exp %369 : vector<16x64xf32>
    %cst_155 = arith.constant dense<0.000000e+00> : vector<16xf32>
    %371 = vector.multi_reduction <add>, %370, %cst_155 [1] : vector<16x64xf32> to vector<16xf32>
    %372 = vector.shape_cast %371 : vector<16xf32> to vector<16x1xf32>
    %373 = math.log %372 : vector<16x1xf32>
    %374 = arith.addf %373, %367 : vector<16x1xf32>
    %375 = vector.broadcast %374 : vector<16x1xf32> to vector<16x64xf32>
    %376 = arith.subf %364, %375 : vector<16x64xf32>
    %c0_156 = arith.constant 0 : index
    %c0_157 = arith.constant 0 : index
    %377 = vector.load %arg28[%c0_156, %c0_157] : memref<16x1xi32, #tpu.memory_space<vmem>>, vector<16x1xi32>
    %378 = tpu.iota {dimensions = array<i32: 1>} : vector<16x64xi32>
    %379 = vector.broadcast %377 : vector<16x1xi32> to vector<16x64xi32>
    %380 = arith.cmpi eq, %378, %379 : vector<16x64xi32>
    %c0_i32 = arith.constant 0 : i32
    %381 = vector.broadcast %c0_i32 : i32 to vector<16x1xi32>
    %382 = arith.cmpi sge, %377, %381 : vector<16x1xi32>
    %383 = vector.broadcast %382 : vector<16x1xi1> to vector<16x64xi1>
    %384 = arith.andi %380, %383 : vector<16x64xi1>
    %cst_158 = arith.constant 1.000000e+00 : f32
    %cst_159 = arith.constant 0.000000e+00 : f32
    %385 = vector.broadcast %cst_158 : f32 to vector<16x64xf32>
    %386 = vector.broadcast %cst_159 : f32 to vector<16x64xf32>
    %387 = arith.select %384, %385, %386 : vector<16x64xi1>, vector<16x64xf32>
    %cst_160 = arith.constant 0.000000e+00 : f32
    %388 = vector.broadcast %cst_160 : f32 to vector<16x64xf32>
    %389 = arith.subf %388, %376 : vector<16x64xf32>
    %390 = arith.mulf %387, %389 : vector<16x64xf32>
    %391 = vector.shape_cast %390 : vector<16x64xf32> to vector<1x16x64xf32>
    %cst_161 = arith.constant dense<0.000000e+00> : vector<1xf32>
    %392 = vector.multi_reduction <add>, %391, %cst_161 [1, 2] : vector<1x16x64xf32> to vector<1xf32>
    %393 = vector.shape_cast %392 : vector<1xf32> to vector<1x1x1xf32>
    %394 = vector.extract %393[0, 0, 0] : f32 from vector<1x1x1xf32>
    %cst_162 = arith.constant 1.400000e+01 : f32
    %395 = arith.divf %394, %cst_162 : f32
    %396 = vector.broadcast %395 : f32 to vector<1x1xf32>
    %c0_163 = arith.constant 0 : index
    %c0_164 = arith.constant 0 : index
    %397 = vector.load %arg30[%c0_163, %c0_164] : memref<1x1xf32, #tpu.memory_space<vmem>>, vector<1x1xf32>
    tpu.vector_store %arg30[%c0_163, %c0_164], %396 {strides = array<i32>} : memref<1x1xf32, #tpu.memory_space<vmem>>, vector<1x1xf32>,
    return
  }
  func.func @transform_0(%arg0: i32) -> (i32, i32) {
    %c0_i32 = arith.constant 0 : i32
    %c0_i32_0 = arith.constant 0 : i32
    %c0_i32_1 = arith.constant 0 : i32
    return %c0_i32, %c0_i32_0 : i32, i32
  }
  func.func @transform_1(%arg0: i32) -> (i32, i32) {
    %c0_i32 = arith.constant 0 : i32
    %c0_i32_0 = arith.constant 0 : i32
    %c0_i32_1 = arith.constant 0 : i32
    return %c0_i32, %c0_i32_0 : i32, i32
  }
  func.func @transform_2(%arg0: i32) -> (i32, i32) {
    %c0_i32 = arith.constant 0 : i32
    %c0_i32_0 = arith.constant 0 : i32
    %c0_i32_1 = arith.constant 0 : i32
    return %c0_i32, %c0_i32_0 : i32, i32
  }
  func.func @transform_3(%arg0: i32) -> (i32, i32) {
    %c0_i32 = arith.constant 0 : i32
    %c0_i32_0 = arith.constant 0 : i32
    %c0_i32_1 = arith.constant 0 : i32
    return %c0_i32, %c0_i32_0 : i32, i32
  }
  func.func @transform_4(%arg0: i32) -> (i32, i32) {
    %c0_i32 = arith.constant 0 : i32
    %c0_i32_0 = arith.constant 0 : i32
    %c0_i32_1 = arith.constant 0 : i32
    return %c0_i32, %c0_i32_0 : i32, i32
  }
  func.func @transform_5(%arg0: i32) -> (i32, i32) {
    %c0_i32 = arith.constant 0 : i32
    %c0_i32_0 = arith.constant 0 : i32
    %c0_i32_1 = arith.constant 0 : i32
    return %c0_i32, %c0_i32_0 : i32, i32
  }
  func.func @transform_6(%arg0: i32) -> (i32, i32) {
    %c0_i32 = arith.constant 0 : i32
    %c0_i32_0 = arith.constant 0 : i32
    %c0_i32_1 = arith.constant 0 : i32
    return %c0_i32, %c0_i32_0 : i32, i32
  }
  func.func @transform_7(%arg0: i32) -> (i32, i32) {
    %c0_i32 = arith.constant 0 : i32
    %c0_i32_0 = arith.constant 0 : i32
    %c0_i32_1 = arith.constant 0 : i32
    return %c0_i32, %c0_i32_0 : i32, i32
  }
  func.func @transform_8(%arg0: i32) -> (i32, i32) {
    %c0_i32 = arith.constant 0 : i32
    %c0_i32_0 = arith.constant 0 : i32
    %c0_i32_1 = arith.constant 0 : i32
    return %c0_i32, %c0_i32_0 : i32, i32
  }
  func.func @transform_9(%arg0: i32) -> (i32, i32) {
    %c0_i32 = arith.constant 0 : i32
    %c0_i32_0 = arith.constant 0 : i32
    %c0_i32_1 = arith.constant 0 : i32
    return %c0_i32, %c0_i32_0 : i32, i32
  }
  func.func @transform_10(%arg0: i32) -> (i32, i32) {
    %c0_i32 = arith.constant 0 : i32
    %c0_i32_0 = arith.constant 0 : i32
    %c0_i32_1 = arith.constant 0 : i32
    return %c0_i32, %c0_i32_0 : i32, i32
  }
  func.func @transform_11(%arg0: i32) -> (i32, i32) {
    %c0_i32 = arith.constant 0 : i32
    %c0_i32_0 = arith.constant 0 : i32
    %c0_i32_1 = arith.constant 0 : i32
    return %c0_i32, %c0_i32_0 : i32, i32
  }
  func.func @transform_12(%arg0: i32) -> (i32, i32) {
    %c0_i32 = arith.constant 0 : i32
    %c0_i32_0 = arith.constant 0 : i32
    %c0_i32_1 = arith.constant 0 : i32
    return %c0_i32, %c0_i32_0 : i32, i32
  }
  func.func @transform_13(%arg0: i32) -> (i32, i32) {
    %c0_i32 = arith.constant 0 : i32
    %c0_i32_0 = arith.constant 0 : i32
    %c0_i32_1 = arith.constant 0 : i32
    return %c0_i32, %c0_i32_0 : i32, i32
  }
  func.func @transform_14(%arg0: i32) -> (i32, i32) {
    %c0_i32 = arith.constant 0 : i32
    %c0_i32_0 = arith.constant 0 : i32
    %c0_i32_1 = arith.constant 0 : i32
    return %c0_i32, %c0_i32_0 : i32, i32
  }
  func.func @transform_15(%arg0: i32) -> (i32, i32) {
    %c0_i32 = arith.constant 0 : i32
    %c0_i32_0 = arith.constant 0 : i32
    %c0_i32_1 = arith.constant 0 : i32
    return %c0_i32, %c0_i32_0 : i32, i32
  }
  func.func @transform_16(%arg0: i32) -> (i32, i32) {
    %c0_i32 = arith.constant 0 : i32
    %c0_i32_0 = arith.constant 0 : i32
    %c0_i32_1 = arith.constant 0 : i32
    return %c0_i32, %c0_i32_0 : i32, i32
  }
  func.func @transform_17(%arg0: i32) -> (i32, i32) {
    %c0_i32 = arith.constant 0 : i32
    %c0_i32_0 = arith.constant 0 : i32
    %c0_i32_1 = arith.constant 0 : i32
    return %c0_i32, %c0_i32_0 : i32, i32
  }
  func.func @transform_18(%arg0: i32) -> (i32, i32) {
    %c0_i32 = arith.constant 0 : i32
    %c0_i32_0 = arith.constant 0 : i32
    %c0_i32_1 = arith.constant 0 : i32
    return %c0_i32, %c0_i32_0 : i32, i32
  }
  func.func @transform_19(%arg0: i32) -> (i32, i32) {
    %c0_i32 = arith.constant 0 : i32
    %c0_i32_0 = arith.constant 0 : i32
    %c0_i32_1 = arith.constant 0 : i32
    return %c0_i32, %c0_i32_0 : i32, i32
  }
  func.func @transform_20(%arg0: i32) -> (i32, i32) {
    %c0_i32 = arith.constant 0 : i32
    %c0_i32_0 = arith.constant 0 : i32
    %c0_i32_1 = arith.constant 0 : i32
    return %c0_i32, %c0_i32_0 : i32, i32
  }
  func.func @transform_21(%arg0: i32) -> (i32, i32) {
    %c0_i32 = arith.constant 0 : i32
    %c0_i32_0 = arith.constant 0 : i32
    %c0_i32_1 = arith.constant 0 : i32
    return %c0_i32, %c0_i32_0 : i32, i32
  }
  func.func @transform_22(%arg0: i32) -> (i32, i32) {
    %c0_i32 = arith.constant 0 : i32
    %c0_i32_0 = arith.constant 0 : i32
    %c0_i32_1 = arith.constant 0 : i32
    return %c0_i32, %c0_i32_0 : i32, i32
  }
  func.func @transform_23(%arg0: i32) -> (i32, i32) {
    %c0_i32 = arith.constant 0 : i32
    %c0_i32_0 = arith.constant 0 : i32
    %c0_i32_1 = arith.constant 0 : i32
    return %c0_i32, %c0_i32_0 : i32, i32
  }
  func.func @transform_24(%arg0: i32) -> (i32, i32) {
    %c0_i32 = arith.constant 0 : i32
    %c0_i32_0 = arith.constant 0 : i32
    %c0_i32_1 = arith.constant 0 : i32
    return %c0_i32, %c0_i32_0 : i32, i32
  }
  func.func @transform_25(%arg0: i32) -> (i32, i32) {
    %c0_i32 = arith.constant 0 : i32
    %c0_i32_0 = arith.constant 0 : i32
    %c0_i32_1 = arith.constant 0 : i32
    return %c0_i32, %c0_i32_0 : i32, i32
  }
  func.func @transform_26(%arg0: i32) -> (i32, i32) {
    %c0_i32 = arith.constant 0 : i32
    %c0_i32_0 = arith.constant 0 : i32
    %c0_i32_1 = arith.constant 0 : i32
    return %c0_i32, %c0_i32_0 : i32, i32
  }
  func.func @transform_27(%arg0: i32) -> (i32, i32) {
    %c0_i32 = arith.constant 0 : i32
    %c0_i32_0 = arith.constant 0 : i32
    %c0_i32_1 = arith.constant 0 : i32
    return %c0_i32, %c0_i32_0 : i32, i32
  }
  func.func @transform_28(%arg0: i32) -> (i32, i32) {
    %c0_i32 = arith.constant 0 : i32
    %c0_i32_0 = arith.constant 0 : i32
    %c0_i32_1 = arith.constant 0 : i32
    return %c0_i32, %c0_i32_0 : i32, i32
  }
  func.func @transform_29(%arg0: i32) -> (i32, i32) {
    %c0_i32 = arith.constant 0 : i32
    %c0_i32_0 = arith.constant 0 : i32
    %c0_i32_1 = arith.constant 0 : i32
    return %c0_i32, %c0_i32_0 : i32, i32
  }
}

module attributes {stable_mosaic.version = 11 : i64} {
  func.func @_cls_kernel(%arg0: i32, %arg1: memref<2x32xf32, #tpu.memory_space<vmem>>, %arg2: memref<32x4xf32, #tpu.memory_space<vmem>>, %arg3: memref<1x4xf32, #tpu.memory_space<vmem>>, %arg4: memref<2x4xf32, #tpu.memory_space<vmem>>, %arg5: memref<2x4xf32, #tpu.memory_space<vmem>>, %arg6: memref<1x1xf32, #tpu.memory_space<vmem>>) attributes {dimension_semantics = [#tpu.dimension_semantics<arbitrary>], iteration_bounds = array<i64: 1>, scalar_prefetch = 0 : i64, scratch_operands = 0 : i64, tpu.core_type = #tpu.core_type<tc>, window_params = [{pipeline_mode = #tpu.pipeline_mode<synchronous>, transform_indices = @transform_0, window_bounds = array<i64: 2, 32>}, {pipeline_mode = #tpu.pipeline_mode<synchronous>, transform_indices = @transform_1, window_bounds = array<i64: 32, 4>}, {pipeline_mode = #tpu.pipeline_mode<synchronous>, transform_indices = @transform_2, window_bounds = array<i64: 1, 4>}, {pipeline_mode = #tpu.pipeline_mode<synchronous>, transform_indices = @transform_3, window_bounds = array<i64: 2, 4>}, {pipeline_mode = #tpu.pipeline_mode<synchronous>, transform_indices = @transform_4, window_bounds = array<i64: 2, 4>}, {pipeline_mode = #tpu.pipeline_mode<synchronous>, transform_indices = @transform_5, window_bounds = array<i64: 1, 1>}]} {
    %c0 = arith.constant 0 : index
    %c0_0 = arith.constant 0 : index
    %0 = vector.load %arg1[%c0, %c0_0] : memref<2x32xf32, #tpu.memory_space<vmem>>, vector<2x32xf32>
    %c0_1 = arith.constant 0 : index
    %c0_2 = arith.constant 0 : index
    %1 = vector.load %arg2[%c0_1, %c0_2] : memref<32x4xf32, #tpu.memory_space<vmem>>, vector<32x4xf32>
    %cst = arith.constant dense<0.000000e+00> : vector<2x4xf32>
    %2 = tpu.matmul %0, %1, %cst {dimension_numbers = #tpu.dot_dimension_numbers<[1], [0], [0], [1], [0, 0, 1, 1], [], []>} : vector<2x32xf32>, vector<32x4xf32>, vector<2x4xf32> -> vector<2x4xf32>
    %c0_3 = arith.constant 0 : index
    %c0_4 = arith.constant 0 : index
    %3 = vector.load %arg3[%c0_3, %c0_4] : memref<1x4xf32, #tpu.memory_space<vmem>>, vector<1x4xf32>
    %4 = vector.broadcast %3 : vector<1x4xf32> to vector<2x4xf32>
    %5 = arith.addf %2, %4 : vector<2x4xf32>
    %c0_5 = arith.constant 0 : index
    %c0_6 = arith.constant 0 : index
    %6 = vector.load %arg5[%c0_5, %c0_6] : memref<2x4xf32, #tpu.memory_space<vmem>>, vector<2x4xf32>
    tpu.vector_store %arg5[%c0_5, %c0_6], %5 {strides = array<i32>} : memref<2x4xf32, #tpu.memory_space<vmem>>, vector<2x4xf32>,
    %cst_7 = arith.constant dense<0xFF800000> : vector<2xf32>
    %7 = vector.multi_reduction <maximumf>, %5, %cst_7 [1] : vector<2x4xf32> to vector<2xf32>
    %8 = vector.shape_cast %7 : vector<2xf32> to vector<2x1xf32>
    %9 = vector.broadcast %8 : vector<2x1xf32> to vector<2x4xf32>
    %10 = arith.subf %5, %9 : vector<2x4xf32>
    %11 = math.exp %10 : vector<2x4xf32>
    %cst_8 = arith.constant dense<0.000000e+00> : vector<2xf32>
    %12 = vector.multi_reduction <add>, %11, %cst_8 [1] : vector<2x4xf32> to vector<2xf32>
    %13 = vector.shape_cast %12 : vector<2xf32> to vector<2x1xf32>
    %14 = math.log %13 : vector<2x1xf32>
    %15 = arith.addf %14, %8 : vector<2x1xf32>
    %16 = vector.broadcast %15 : vector<2x1xf32> to vector<2x4xf32>
    %17 = arith.subf %5, %16 : vector<2x4xf32>
    %c0_9 = arith.constant 0 : index
    %c0_10 = arith.constant 0 : index
    %18 = vector.load %arg4[%c0_9, %c0_10] : memref<2x4xf32, #tpu.memory_space<vmem>>, vector<2x4xf32>
    %19 = arith.mulf %18, %17 : vector<2x4xf32>
    %cst_11 = arith.constant dense<0.000000e+00> : vector<2xf32>
    %20 = vector.multi_reduction <add>, %19, %cst_11 [1] : vector<2x4xf32> to vector<2xf32>
    %21 = vector.shape_cast %20 : vector<2xf32> to vector<2x1xf32>
    %cst_12 = arith.constant 0.000000e+00 : f32
    %22 = vector.broadcast %cst_12 : f32 to vector<2x1xf32>
    %23 = arith.subf %22, %21 : vector<2x1xf32>
    %24 = vector.shape_cast %23 : vector<2x1xf32> to vector<1x2x1xf32>
    %cst_13 = arith.constant dense<0.000000e+00> : vector<1xf32>
    %25 = vector.multi_reduction <add>, %24, %cst_13 [1, 2] : vector<1x2x1xf32> to vector<1xf32>
    %26 = vector.shape_cast %25 : vector<1xf32> to vector<1x1x1xf32>
    %27 = vector.extract %26[0, 0, 0] : f32 from vector<1x1x1xf32>
    %cst_14 = arith.constant 2.000000e+00 : f32
    %28 = arith.divf %27, %cst_14 : f32
    %29 = vector.broadcast %28 : f32 to vector<1x1xf32>
    %c0_15 = arith.constant 0 : index
    %c0_16 = arith.constant 0 : index
    %30 = vector.load %arg6[%c0_15, %c0_16] : memref<1x1xf32, #tpu.memory_space<vmem>>, vector<1x1xf32>
    tpu.vector_store %arg6[%c0_15, %c0_16], %29 {strides = array<i32>} : memref<1x1xf32, #tpu.memory_space<vmem>>, vector<1x1xf32>,
    return
  }
  func.func @transform_0(%arg0: i32) -> (i32, i32) {
    %c0_i32 = arith.constant 0 : i32
    %c0_i32_0 = arith.constant 0 : i32
    %c0_i32_1 = arith.constant 0 : i32
    return %c0_i32, %c0_i32_0 : i32, i32
  }
  func.func @transform_1(%arg0: i32) -> (i32, i32) {
    %c0_i32 = arith.constant 0 : i32
    %c0_i32_0 = arith.constant 0 : i32
    %c0_i32_1 = arith.constant 0 : i32
    return %c0_i32, %c0_i32_0 : i32, i32
  }
  func.func @transform_2(%arg0: i32) -> (i32, i32) {
    %c0_i32 = arith.constant 0 : i32
    %c0_i32_0 = arith.constant 0 : i32
    %c0_i32_1 = arith.constant 0 : i32
    return %c0_i32, %c0_i32_0 : i32, i32
  }
  func.func @transform_3(%arg0: i32) -> (i32, i32) {
    %c0_i32 = arith.constant 0 : i32
    %c0_i32_0 = arith.constant 0 : i32
    %c0_i32_1 = arith.constant 0 : i32
    return %c0_i32, %c0_i32_0 : i32, i32
  }
  func.func @transform_4(%arg0: i32) -> (i32, i32) {
    %c0_i32 = arith.constant 0 : i32
    %c0_i32_0 = arith.constant 0 : i32
    %c0_i32_1 = arith.constant 0 : i32
    return %c0_i32, %c0_i32_0 : i32, i32
  }
  func.func @transform_5(%arg0: i32) -> (i32, i32) {
    %c0_i32 = arith.constant 0 : i32
    %c0_i32_0 = arith.constant 0 : i32
    %c0_i32_1 = arith.constant 0 : i32
    return %c0_i32, %c0_i32_0 : i32, i32
  }
}

</mosaic_0001>

<llo_original>
// kernel: custom_model_forward.5
$region0: #{custom_model_forward.5}
  #allocation0 [shape = 'u32[]', space=smem, size = 0x4, offset = 0x4, fixed_abs, tag = 'smem constant byte address 0x4 - core index']
  #allocation1 [shape = 'u32[144,128]{1,0:T(1,128)}', space=vmem, size = 0x12000, scoped, tag = 'internal scratch']
  %s0 = inlined_call_operand.vmem [shape: f32[2,32], index: 0, kind: input, shape index: {}]
  %s1 = inlined_call_operand.vmem [shape: f32[32,4], index: 1, kind: input, shape index: {}]
  %s2 = inlined_call_operand.vmem [shape: f32[1,4], index: 2, kind: input, shape index: {}]
  %s3 = inlined_call_operand.vmem [shape: f32[2,4], index: 3, kind: input, shape index: {}]
  %s4 = inlined_call_operand.vmem [shape: f32[2,4], index: 4, kind: output, shape index: {0}]
  %s5 = inlined_call_operand.hbm [shape: f32[1,1], index: 5, kind: output, shape index: {1}]
  %6 = xla_tuple %s4, %s5
  %s7 = sld [smem:[#allocation0]]
  $region34: #{custom_model_forward.5} parent=0
    _
  %s9 = ssub.s32 1, %s7
  %s10 = scalar_select 0, %s9, %s7
  $region1: #{custom_model_forward.5} parent=0
    #allocation2 [shape = 'u8[512]{0}', space=vmem, size = 0x400, scoped, tag = 'output window, operand 1, single buffered']
    #allocation3 [shape = 's32[1]{0}', space=sflag, size = 0x4, scoped, tag = 'scoped memory for custom_model_forward.5']
    %11 = vsyncpa [#allocation3], 0
    // Predicated region
    $region2: #{custom_model_forward.5} parent=1 // pred_check
      _
    $region3: #{custom_model_forward.5} parent=1 // pred_check_branch
      %13 = sbr.rel (0) target = $region5
    $region4: #{custom_model_forward.5} parent=1 // pred_region
      _
    $region5: #{custom_model_forward.5} parent=1 // pred_fallthru
      _
    // Predicated region
    $region6: #{custom_model_forward.5} parent=1 // pred_check
      _
    $region7: #{custom_model_forward.5} parent=1 // pred_check_branch
      %15 = sbr.rel (0) target = $region9
    $region8: #{custom_model_forward.5} parent=1 // pred_region
      _
    $region9: #{custom_model_forward.5} parent=1 // pred_fallthru
      _
    // Predicated region
    $region10: #{custom_model_forward.5} parent=1 // pred_check
      _
    $region11: #{custom_model_forward.5} parent=1 // pred_check_branch
      %17 = sbr.rel (0) target = $region13
    $region12: #{custom_model_forward.5} parent=1 // pred_region
      _
    $region13: #{custom_model_forward.5} parent=1 // pred_fallthru
      _
    // Predicated region
    $region14: #{custom_model_forward.5} parent=1 // pred_check
      _
    $region15: #{custom_model_forward.5} parent=1 // pred_check_branch
      %19 = sbr.rel (0) target = $region17
    $region16: #{custom_model_forward.5} parent=1 // pred_region
      _
    $region17: #{custom_model_forward.5} parent=1 // pred_fallthru
      _
    %v20 = vld [vmem:[%s0] sm:$0x3]
    %v21 = vld [vmem:[%s1] sm:$0xff]
    %v22 = vld [vmem:[%s1 + $0x8] sm:$0xff]
    %v23 = vld [vmem:[%s1 + $0x10] sm:$0xff]
    %v24 = vld [vmem:[%s1 + $0x18] sm:$0xff]
    %v25 = vld [vmem:[%s2] sm:$0x1]
    %v27 = vlaneseq
    %v28 = vshrl.u32 %v27, 7
    %v29 = vsub.s32 0, %v28
    %v30 = vrot.slane %v25, %v29
    %vm32 = vcmask 261120
    %v34 = vsel %vm32, %v20, 0
    %36 = vmatprep.subr.mxu0 0.0
    %37 = vmatpush1.msra.mxu0 %v21
    %38 = vmatprep.subr.mxu0 0.0
    %39 = vmatpush1.msra.mxu0 %v22
    %40 = vmatprep.subr.mxu0 0.0
    %41 = vmatpush1.msra.mxu0 %v23
    %42 = vmatprep.subr.mxu0 0.0
    %43 = vmatpush1.msra.mxu0 %v24
    %44 = vmatprep.subr.mxu0 0.0
    %45 = vmatpush1.msra.mxu0 0.0
    %46 = vmatprep.subr.mxu0 0.0
    %47 = vmatpush1.msra.mxu0 0.0
    %48 = vmatprep.subr.mxu0 0.0
    %49 = vmatpush1.msra.mxu0 0.0
    %50 = vmatprep.subr.mxu0 0.0
    %51 = vmatpush1.msra.mxu0 0.0
    %52 = vmatprep.subr.mxu0 0.0
    %53 = vmatpush1.msra.mxu0 0.0
    %54 = vmatprep.subr.mxu0 0.0
    %55 = vmatpush1.msra.mxu0 0.0
    %56 = vmatprep.subr.mxu0 0.0
    %57 = vmatpush1.msra.mxu0 0.0
    %58 = vmatprep.subr.mxu0 0.0
    %59 = vmatpush1.msra.mxu0 0.0
    %60 = vmatprep.subr.mxu0 0.0
    %61 = vmatpush1.msra.mxu0 0.0
    %62 = vmatprep.subr.mxu0 0.0
    %63 = vmatpush1.msra.mxu0 0.0
    %64 = vmatprep.subr.mxu0 0.0
    %65 = vmatpush1.msra.mxu0 0.0
    %66 = vmatprep.subr.mxu0 0.0
    %67 = vmatpush1.msra.mxu0 0.0
    %68 = vmatprep.subr.mxu0 0.0
    %69 = vmatpush1.msra.mxu0 0.0
    %70 = vmatprep.subr.mxu0 0.0
    %71 = vmatpush1.msra.mxu0 0.0
    %72 = vmatprep.subr.mxu0 0.0
    %73 = vmatpush1.msra.mxu0 0.0
    %74 = vmatprep.subr.mxu0 0.0
    %75 = vmatpush1.msra.mxu0 0.0
    %76 = vmatprep.subr.mxu0 0.0
    %77 = vmatpush1.msra.mxu0 0.0
    %78 = vmatprep.subr.mxu0 0.0
    %79 = vmatpush1.msra.mxu0 0.0
    %80 = vmatprep.subr.mxu0 0.0
    %81 = vmatpush1.msra.mxu0 0.0
    %82 = vmatprep.subr.mxu0 0.0
    %83 = vmatpush1.msra.mxu0 0.0
    %84 = vmatprep.subr.mxu0 0.0
    %85 = vmatpush1.msra.mxu0 0.0
    %86 = vmatprep.subr.mxu0 0.0
    %87 = vmatpush1.msra.mxu0 0.0
    %88 = vmatprep.subr.mxu0 0.0
    %89 = vmatpush1.msra.mxu0 0.0
    %90 = vmatprep.subr.mxu0 0.0
    %91 = vmatpush1.msra.mxu0 0.0
    %92 = vmatprep.subr.mxu0 0.0
    %93 = vmatpush1.msra.mxu0 0.0
    %94 = vmatprep.subr.mxu0 0.0
    %95 = vmatpush1.msra.mxu0 0.0
    %96 = vmatprep.subr.mxu0 0.0
    %97 = vmatpush1.msra.mxu0 0.0
    %98 = vmatprep.subr.mxu0 0.0
    %99 = vmatpush1.msra.mxu0 0.0
    %100 = vmatprep.mubr.f32.mxu0 0.0
    %101 = vmatmul.mubr.f32.gmra.mrb[0].mxu0 %v34
    %v102 = vpop.f32.mrb[0].mxu0
    %v103 = vadd.f32 %v30, %v102
    %v104 = vpop.f32.mrb[0].mxu0
    %105 = vdwg.mxu0
    %vm106 = vcmask 25600
    %107 = vst.msk [vmem:[%s4] sm:$0x3] %vm106, %v103
    %v108 = vsel %vm106, %v103, -inf
    %109 = vmax.xlane.f32.xlu0 %v108
    %v110 = vpop.xlane.xlu0 %109
    %v111 = vsub.f32 %v103, %v110
    %v112 = vmul.f32 %v111, 1.442695
    %v113 = vpow.pop %v112
    %v114 = vsel %vm106, %v113, 0.0
    %115 = vadd.xlane.f32.xlu0 %v114
    %v116 = vpop.xlane.xlu0 %115
    %v117 = vlog2.pop %v116
    %v118 = vmul.f32 %v117, 0.6931472
    %v119 = vadd.f32 %v118, %v110
    %v120 = vsub.f32 %v103, %v119
    %v121 = vld [vmem:[%s3] sm:$0x3]
    %v122 = vmul.f32 %v121, %v120
    %v123 = vsel %vm106, %v122, 0.0
    %124 = vadd.xlane.f32.xlu0 %v123
    %v125 = vpop.xlane.xlu0 %124
    %v126 = vsub.f32 0.0, %v125
    %vm127 = vcmask 1024
    %v128 = vsel %vm127, %v126, 0.0
    %129 = vadd.xlane.f32.xlu0 %v128
    %v130 = vpop.xlane.xlu0 %129
    %v131 = vrot.slane %v130, 4
    %v132 = vadd.f32 %v130, %v131
    %v133 = vrot.slane %v132, 2
    %v134 = vadd.f32 %v132, %v133
    %v135 = vrot.slane %v134, 1
    %v136 = vadd.f32 %v134, %v135
    %s137 = vtos %v136
    %v138 = vrcp.pop 2.0
    %s139 = vtos %v138
    %s140 = smul.f32 %s137, %s139
    %v141 = vstv %s140
    %vm142 = vcmask 0
    %143 = vst.msk [vmem:[#allocation2] sm:$0x1] %vm142, %v141
    // Predicated region
    $region18: #{custom_model_forward.5} parent=1 // pred_check
      _
    $region19: #{custom_model_forward.5} parent=1 // pred_check_branch
      %145 = sbr.rel (0) target = $region21
    $region20: #{custom_model_forward.5} parent=1 // pred_region
      _
    $region21: #{custom_model_forward.5} parent=1 // pred_fallthru
      _
    // Predicated region
    $region22: #{custom_model_forward.5} parent=1 // pred_check
      _
    $region23: #{custom_model_forward.5} parent=1 // pred_check_branch
      %147 = sbr.rel (0) target = $region25
    $region24: #{custom_model_forward.5} parent=1 // pred_region
      %s149 = ssub.s32 16, 16
      %150 = vsyncadd [#allocation3], %s149
      %s152 = sshll.u32 [#allocation2], 4
      %s153 = int_to_ptr.vmem [resolvable:$true] %s152
      %155 = dma.vmem_to_hbm [thread:$0]  %s153, 16, %s5, [#allocation3]
    $region25: #{custom_model_forward.5} parent=1 // pred_fallthru
      _
    // Predicated region
    $region26: #{custom_model_forward.5} parent=1 // pred_check
      _
    $region27: #{custom_model_forward.5} parent=1 // pred_check_branch
      %157 = sbr.rel (0) target = $region29
    $region28: #{custom_model_forward.5} parent=1 // pred_region
      _
    $region29: #{custom_model_forward.5} parent=1 // pred_fallthru
      _
    // Predicated region
    $region30: #{custom_model_forward.5} parent=1 // pred_check
      _
    $region31: #{custom_model_forward.5} parent=1 // pred_check_branch
      %159 = sbr.rel (0) target = $region33
    $region32: #{custom_model_forward.5} parent=1 // pred_region
      %160 = dma.done [#allocation3], 16
    $region33: #{custom_model_forward.5} parent=1 // pred_fallthru
      _
    %161 = vsyncpa [#allocation3], 1

// kernel: custom_model_forward.3
$region0: #{custom_model_forward.3}
  #allocation0 [shape = 'u32[]', space=smem, size = 0x4, offset = 0x4, fixed_abs, tag = 'smem constant byte address 0x4 - core index']
  #allocation1 [shape = 'u32[144,128]{1,0:T(1,128)}', space=vmem, size = 0x12000, scoped, tag = 'internal scratch']
  #allocation2 [shape = 'f32[16,32]{1,0:T(8,128)}', space=vmem, size = 0x2000, scoped, tag = 'scratch operand']
  %s0 = inlined_call_operand.vmem [shape: f32[16,32], index: 0, kind: input, shape index: {}]
  %s1 = inlined_call_operand.vmem [shape: f32[2,8], index: 1, kind: input, shape index: {}]
  %s2 = inlined_call_operand.vmem [shape: f32[1,32], index: 2, kind: input, shape index: {}]
  %s3 = inlined_call_operand.vmem [shape: f32[1,32], index: 3, kind: input, shape index: {}]
  %s4 = inlined_call_operand.vmem [shape: f32[32,96], index: 4, kind: input, shape index: {}]
  %s5 = inlined_call_operand.vmem [shape: f32[1,96], index: 5, kind: input, shape index: {}]
  %s6 = inlined_call_operand.vmem [shape: f32[32,32], index: 6, kind: input, shape index: {}]
  %s7 = inlined_call_operand.vmem [shape: f32[1,32], index: 7, kind: input, shape index: {}]
  %s8 = inlined_call_operand.vmem [shape: f32[1,32], index: 8, kind: input, shape index: {}]
  %s9 = inlined_call_operand.vmem [shape: f32[1,32], index: 9, kind: input, shape index: {}]
  %s10 = inlined_call_operand.vmem [shape: f32[32,128], index: 10, kind: input, shape index: {}]
  %s11 = inlined_call_operand.vmem [shape: f32[1,128], index: 11, kind: input, shape index: {}]
  %s12 = inlined_call_operand.vmem [shape: f32[128,32], index: 12, kind: input, shape index: {}]
  %s13 = inlined_call_operand.vmem [shape: f32[1,32], index: 13, kind: input, shape index: {}]
  %s14 = inlined_call_operand.vmem [shape: f32[1,32], index: 14, kind: input, shape index: {}]
  %s15 = inlined_call_operand.vmem [shape: f32[1,32], index: 15, kind: input, shape index: {}]
  %s16 = inlined_call_operand.vmem [shape: f32[16,32], index: 16, kind: output, shape index: {}]
  %s17 = sld [smem:[#allocation0]]
  $region74: #{custom_model_forward.3} parent=0
    _
  %s19 = ssub.s32 1, %s17
  %s20 = scalar_select 0, %s19, %s17
  // Predicated region
  $region2: #{custom_model_forward.3} parent=0 // pred_check
    _
  $region3: #{custom_model_forward.3} parent=0 // pred_check_branch
    %22 = sbr.rel (0) target = $region5
  $region4: #{custom_model_forward.3} parent=0 // pred_region
    _
  $region5: #{custom_model_forward.3} parent=0 // pred_fallthru
    _
  // Predicated region
  $region6: #{custom_model_forward.3} parent=0 // pred_check
    _
  $region7: #{custom_model_forward.3} parent=0 // pred_check_branch
    %24 = sbr.rel (0) target = $region9
  $region8: #{custom_model_forward.3} parent=0 // pred_region
    _
  $region9: #{custom_model_forward.3} parent=0 // pred_fallthru
    _
  // Predicated region
  $region10: #{custom_model_forward.3} parent=0 // pred_check
    _
  $region11: #{custom_model_forward.3} parent=0 // pred_check_branch
    %26 = sbr.rel (0) target = $region13
  $region12: #{custom_model_forward.3} parent=0 // pred_region
    _
  $region13: #{custom_model_forward.3} parent=0 // pred_fallthru
    _
  // Predicated region
  $region14: #{custom_model_forward.3} parent=0 // pred_check
    _
  $region15: #{custom_model_forward.3} parent=0 // pred_check_branch
    %28 = sbr.rel (0) target = $region17
  $region16: #{custom_model_forward.3} parent=0 // pred_region
    _
  $region17: #{custom_model_forward.3} parent=0 // pred_fallthru
    _
  // Predicated region
  $region18: #{custom_model_forward.3} parent=0 // pred_check
    _
  $region19: #{custom_model_forward.3} parent=0 // pred_check_branch
    %30 = sbr.rel (0) target = $region21
  $region20: #{custom_model_forward.3} parent=0 // pred_region
    _
  $region21: #{custom_model_forward.3} parent=0 // pred_fallthru
    _
  // Predicated region
  $region22: #{custom_model_forward.3} parent=0 // pred_check
    _
  $region23: #{custom_model_forward.3} parent=0 // pred_check_branch
    %32 = sbr.rel (0) target = $region25
  $region24: #{custom_model_forward.3} parent=0 // pred_region
    _
  $region25: #{custom_model_forward.3} parent=0 // pred_fallthru
    _
  // Predicated region
  $region26: #{custom_model_forward.3} parent=0 // pred_check
    _
  $region27: #{custom_model_forward.3} parent=0 // pred_check_branch
    %34 = sbr.rel (0) target = $region29
  $region28: #{custom_model_forward.3} parent=0 // pred_region
    _
  $region29: #{custom_model_forward.3} parent=0 // pred_fallthru
    _
  // Predicated region
  $region30: #{custom_model_forward.3} parent=0 // pred_check
    _
  $region31: #{custom_model_forward.3} parent=0 // pred_check_branch
    %36 = sbr.rel (0) target = $region33
  $region32: #{custom_model_forward.3} parent=0 // pred_region
    _
  $region33: #{custom_model_forward.3} parent=0 // pred_fallthru
    _
  // Predicated region
  $region34: #{custom_model_forward.3} parent=0 // pred_check
    _
  $region35: #{custom_model_forward.3} parent=0 // pred_check_branch
    %38 = sbr.rel (0) target = $region37
  $region36: #{custom_model_forward.3} parent=0 // pred_region
    _
  $region37: #{custom_model_forward.3} parent=0 // pred_fallthru
    _
  // Predicated region
  $region38: #{custom_model_forward.3} parent=0 // pred_check
    _
  $region39: #{custom_model_forward.3} parent=0 // pred_check_branch
    %40 = sbr.rel (0) target = $region41
  $region40: #{custom_model_forward.3} parent=0 // pred_region
    _
  $region41: #{custom_model_forward.3} parent=0 // pred_fallthru
    _
  // Predicated region
  $region42: #{custom_model_forward.3} parent=0 // pred_check
    _
  $region43: #{custom_model_forward.3} parent=0 // pred_check_branch
    %42 = sbr.rel (0) target = $region45
  $region44: #{custom_model_forward.3} parent=0 // pred_region
    _
  $region45: #{custom_model_forward.3} parent=0 // pred_fallthru
    _
  // Predicated region
  $region46: #{custom_model_forward.3} parent=0 // pred_check
    _
  $region47: #{custom_model_forward.3} parent=0 // pred_check_branch
    %44 = sbr.rel (0) target = $region49
  $region48: #{custom_model_forward.3} parent=0 // pred_region
    _
  $region49: #{custom_model_forward.3} parent=0 // pred_fallthru
    _
  // Predicated region
  $region50: #{custom_model_forward.3} parent=0 // pred_check
    _
  $region51: #{custom_model_forward.3} parent=0 // pred_check_branch
    %46 = sbr.rel (0) target = $region53
  $region52: #{custom_model_forward.3} parent=0 // pred_region
    _
  $region53: #{custom_model_forward.3} parent=0 // pred_fallthru
    _
  // Predicated region
  $region54: #{custom_model_forward.3} parent=0 // pred_check
    _
  $region55: #{custom_model_forward.3} parent=0 // pred_check_branch
    %48 = sbr.rel (0) target = $region57
  $region56: #{custom_model_forward.3} parent=0 // pred_region
    _
  $region57: #{custom_model_forward.3} parent=0 // pred_fallthru
    _
  // Predicated region
  $region58: #{custom_model_forward.3} parent=0 // pred_check
    _
  $region59: #{custom_model_forward.3} parent=0 // pred_check_branch
    %50 = sbr.rel (0) target = $region61
  $region60: #{custom_model_forward.3} parent=0 // pred_region
    _
  $region61: #{custom_model_forward.3} parent=0 // pred_fallthru
    _
  // Predicated region
  $region62: #{custom_model_forward.3} parent=0 // pred_check
    _
  $region63: #{custom_model_forward.3} parent=0 // pred_check_branch
    %52 = sbr.rel (0) target = $region65
  $region64: #{custom_model_forward.3} parent=0 // pred_region
    _
  $region65: #{custom_model_forward.3} parent=0 // pred_fallthru
    _
  %v53 = vld [vmem:[%s0] sm:$0xff]
  %v54 = vld [vmem:[%s0 + $0x8] sm:$0xff]
  %v55 = vld [vmem:[%s2] sm:$0x1]
  %v56 = vld [vmem:[%s3] sm:$0x1]
  %vm57 = vcmask 261120
  %v58 = vsel %vm57, %v53, 0.0
  %59 = vadd.xlane.f32.xlu0 %v58
  %v60 = vpop.xlane.xlu0 %59
  %v61 = vsel %vm57, %v54, 0.0
  %62 = vadd.xlane.f32.xlu0 %v61
  %v63 = vpop.xlane.xlu0 %62
  %v64 = vrcp.pop 32.0
  %v65 = vmul.f32 %v60, %v64
  %v66 = vmul.f32 %v63, %v64
  %v67 = vsub.f32 %v53, %v65
  %v68 = vsub.f32 %v54, %v66
  %v69 = vmul.f32 %v67, %v67
  %v70 = vmul.f32 %v68, %v68
  %v71 = vsel %vm57, %v69, 0.0
  %72 = vadd.xlane.f32.xlu0 %v71
  %v73 = vpop.xlane.xlu0 %72
  %v74 = vsel %vm57, %v70, 0.0
  %75 = vadd.xlane.f32.xlu0 %v74
  %v76 = vpop.xlane.xlu0 %75
  %v77 = vmul.f32 %v73, %v64
  %v78 = vmul.f32 %v76, %v64
  %v79 = vadd.f32 %v77, 1e-05
  %v80 = vadd.f32 %v78, 1e-05
  %v81 = vrsqrt.pop %v79
  %v82 = vrsqrt.pop %v80
  %v83 = vmul.f32 %v67, %v81
  %v84 = vmul.f32 %v68, %v82
  %v86 = vlaneseq
  %v87 = vshrl.u32 %v86, 7
  %v88 = vsub.s32 0, %v87
  %v89 = vrot.slane %v55, %v88
  %v91 = vmul.f32 %v83, %v89
  %v92 = vmul.f32 %v84, %v89
  %v94 = vlaneseq
  %v95 = vshrl.u32 %v94, 7
  %v96 = vsub.s32 0, %v95
  %v97 = vrot.slane %v56, %v96
  %v99 = vadd.f32 %v91, %v97
  %v100 = vadd.f32 %v92, %v97
  %v101 = vld [vmem:[%s4] sm:$0xff]
  %v102 = vld [vmem:[%s4 + $0x8] sm:$0xff]
  %v103 = vld [vmem:[%s4 + $0x10] sm:$0xff]
  %v104 = vld [vmem:[%s4 + $0x18] sm:$0xff]
  %v105 = vld [vmem:[%s5] sm:$0x1]
  %v107 = vlaneseq
  %v108 = vshrl.u32 %v107, 7
  %v109 = vsub.s32 0, %v108
  %v110 = vrot.slane %v105, %v109
  %v113 = vsel %vm57, %v99, 0
  %v116 = vsel %vm57, %v100, 0
  %118 = vmatprep.subr.mxu0 0.0
  %119 = vmatpush1.msra.mxu0 %v101
  %120 = vmatprep.subr.mxu0 0.0
  %121 = vmatpush1.msra.mxu0 %v102
  %122 = vmatprep.subr.mxu0 0.0
  %123 = vmatpush1.msra.mxu0 %v103
  %124 = vmatprep.subr.mxu0 0.0
  %125 = vmatpush1.msra.mxu0 %v104
  %126 = vmatprep.subr.mxu0 0.0
  %127 = vmatpush1.msra.mxu0 0.0
  %128 = vmatprep.subr.mxu0 0.0
  %129 = vmatpush1.msra.mxu0 0.0
  %130 = vmatprep.subr.mxu0 0.0
  %131 = vmatpush1.msra.mxu0 0.0
  %132 = vmatprep.subr.mxu0 0.0
  %133 = vmatpush1.msra.mxu0 0.0
  %134 = vmatprep.subr.mxu0 0.0
  %135 = vmatpush1.msra.mxu0 0.0
  %136 = vmatprep.subr.mxu0 0.0
  %137 = vmatpush1.msra.mxu0 0.0
  %138 = vmatprep.subr.mxu0 0.0
  %139 = vmatpush1.msra.mxu0 0.0
  %140 = vmatprep.subr.mxu0 0.0
  %141 = vmatpush1.msra.mxu0 0.0
  %142 = vmatprep.subr.mxu0 0.0
  %143 = vmatpush1.msra.mxu0 0.0
  %144 = vmatprep.subr.mxu0 0.0
  %145 = vmatpush1.msra.mxu0 0.0
  %146 = vmatprep.subr.mxu0 0.0
  %147 = vmatpush1.msra.mxu0 0.0
  %148 = vmatprep.subr.mxu0 0.0
  %149 = vmatpush1.msra.mxu0 0.0
  %150 = vmatprep.subr.mxu0 0.0
  %151 = vmatpush1.msra.mxu0 0.0
  %152 = vmatprep.subr.mxu0 0.0
  %153 = vmatpush1.msra.mxu0 0.0
  %154 = vmatprep.subr.mxu0 0.0
  %155 = vmatpush1.msra.mxu0 0.0
  %156 = vmatprep.subr.mxu0 0.0
  %157 = vmatpush1.msra.mxu0 0.0
  %158 = vmatprep.subr.mxu0 0.0
  %159 = vmatpush1.msra.mxu0 0.0
  %160 = vmatprep.subr.mxu0 0.0
  %161 = vmatpush1.msra.mxu0 0.0
  %162 = vmatprep.subr.mxu0 0.0
  %163 = vmatpush1.msra.mxu0 0.0
  %164 = vmatprep.subr.mxu0 0.0
  %165 = vmatpush1.msra.mxu0 0.0
  %166 = vmatprep.subr.mxu0 0.0
  %167 = vmatpush1.msra.mxu0 0.0
  %168 = vmatprep.subr.mxu0 0.0
  %169 = vmatpush1.msra.mxu0 0.0
  %170 = vmatprep.subr.mxu0 0.0
  %171 = vmatpush1.msra.mxu0 0.0
  %172 = vmatprep.subr.mxu0 0.0
  %173 = vmatpush1.msra.mxu0 0.0
  %174 = vmatprep.subr.mxu0 0.0
  %175 = vmatpush1.msra.mxu0 0.0
  %176 = vmatprep.subr.mxu0 0.0
  %177 = vmatpush1.msra.mxu0 0.0
  %178 = vmatprep.subr.mxu0 0.0
  %179 = vmatpush1.msra.mxu0 0.0
  %180 = vmatprep.subr.mxu0 0.0
  %181 = vmatpush1.msra.mxu0 0.0
  %182 = vmatprep.mubr.f32.mxu0 0.0
  %183 = vmatmul.mubr.f32.gmra.mrb[0].mxu0 %v113
  %v184 = vpop.f32.mrb[0].mxu0
  %v185 = vadd.f32 %v110, %v184
  %v186 = vpop.f32.mrb[0].mxu0
  %187 = vmatprep.mubr.f32.mxu0 0.0
  %188 = vmatmul.mubr.f32.gmra.mrb[0].mxu0 %v116
  %v189 = vpop.f32.mrb[0].mxu0
  %v190 = vadd.f32 %v110, %v189
  %v191 = vpop.f32.mrb[0].mxu0
  %192 = vdwg.mxu0
  %v193 = vld [vmem:[%s1] sm:$0x3]
  %v194 = vsub.f32 1.0, %v193
  %v195 = vmul.f32 %v194, -1e+09
  %v196 = vld [vmem:[%s6] sm:$0xff]
  %v197 = vld [vmem:[%s6 + $0x8] sm:$0xff]
  %v198 = vld [vmem:[%s6 + $0x10] sm:$0xff]
  %v199 = vld [vmem:[%s6 + $0x18] sm:$0xff]
  %v200 = vld [vmem:[%s7] sm:$0x1]
  %202 = vrot.lane.b32.xlu0 %v185, 96
  %v203 = vpop.permute.xlu0 %202
  %vm204 = vcmask 130048
  %v205 = vsel %vm204, %v185, 0
  %v207 = vsel %vm204, %v203, 0
  %209 = vmatprep.subr.mxu0 0.0
  %210 = vmatpush1.xpose.msra.mxu0 %v207
  %211 = vmatprep.subr.mxu0 0.0
  %212 = vmatpush1.xpose.msra.mxu0 0.0
  %213 = vmatprep.subr.mxu0 0.0
  %214 = vmatpush1.xpose.msra.mxu0 0.0
  %215 = vmatprep.subr.mxu0 0.0
  %216 = vmatpush1.xpose.msra.mxu0 0.0
  %217 = vmatprep.subr.mxu0 0.0
  %218 = vmatpush1.xpose.msra.mxu0 0.0
  %219 = vmatprep.subr.mxu0 0.0
  %220 = vmatpush1.xpose.msra.mxu0 0.0
  %221 = vmatprep.subr.mxu0 0.0
  %222 = vmatpush1.xpose.msra.mxu0 0.0
  %223 = vmatprep.subr.mxu0 0.0
  %224 = vmatpush1.xpose.msra.mxu0 0.0
  %225 = vmatprep.subr.mxu0 0.0
  %226 = vmatpush1.xpose.msra.mxu0 0.0
  %227 = vmatprep.subr.mxu0 0.0
  %228 = vmatpush1.xpose.msra.mxu0 0.0
  %229 = vmatprep.subr.mxu0 0.0
  %230 = vmatpush1.xpose.msra.mxu0 0.0
  %231 = vmatprep.subr.mxu0 0.0
  %232 = vmatpush1.xpose.msra.mxu0 0.0
  %233 = vmatprep.subr.mxu0 0.0
  %234 = vmatpush1.xpose.msra.mxu0 0.0
  %235 = vmatprep.subr.mxu0 0.0
  %236 = vmatpush1.xpose.msra.mxu0 0.0
  %237 = vmatprep.subr.mxu0 0.0
  %238 = vmatpush1.xpose.msra.mxu0 0.0
  %239 = vmatprep.subr.mxu0 0.0
  %240 = vmatpush1.xpose.msra.mxu0 0.0
  %241 = vmatprep.subr.mxu0 0.0
  %242 = vmatpush1.xpose.msra.mxu0 0.0
  %243 = vmatprep.subr.mxu0 0.0
  %244 = vmatpush1.xpose.msra.mxu0 0.0
  %245 = vmatprep.subr.mxu0 0.0
  %246 = vmatpush1.xpose.msra.mxu0 0.0
  %247 = vmatprep.subr.mxu0 0.0
  %248 = vmatpush1.xpose.msra.mxu0 0.0
  %249 = vmatprep.subr.mxu0 0.0
  %250 = vmatpush1.xpose.msra.mxu0 0.0
  %251 = vmatprep.subr.mxu0 0.0
  %252 = vmatpush1.xpose.msra.mxu0 0.0
  %253 = vmatprep.subr.mxu0 0.0
  %254 = vmatpush1.xpose.msra.mxu0 0.0
  %255 = vmatprep.subr.mxu0 0.0
  %256 = vmatpush1.xpose.msra.mxu0 0.0
  %257 = vmatprep.subr.mxu0 0.0
  %258 = vmatpush1.xpose.msra.mxu0 0.0
  %259 = vmatprep.subr.mxu0 0.0
  %260 = vmatpush1.xpose.msra.mxu0 0.0
  %261 = vmatprep.subr.mxu0 0.0
  %262 = vmatpush1.xpose.msra.mxu0 0.0
  %263 = vmatprep.subr.mxu0 0.0
  %264 = vmatpush1.xpose.msra.mxu0 0.0
  %265 = vmatprep.subr.mxu0 0.0
  %266 = vmatpush1.xpose.msra.mxu0 0.0
  %267 = vmatprep.subr.mxu0 0.0
  %268 = vmatpush1.xpose.msra.mxu0 0.0
  %269 = vmatprep.subr.mxu0 0.0
  %270 = vmatpush1.xpose.msra.mxu0 0.0
  %271 = vmatprep.subr.mxu0 0.0
  %272 = vmatpush1.xpose.msra.mxu0 0.0
  %273 = vmatprep.mubr.f32.mxu0 0.0
  %274 = vmatmul.mubr.f32.gmra.mrb[0].mxu0 %v205
  %v275 = vpop.f32.mrb[0].mxu0
  %v276 = vadd.f32 0.0, %v275
  %v277 = vpop.f32.mrb[0].mxu0
  %278 = vdwg.mxu0
  %v279 = vmul.f32 %v276, 0.25
  %v280 = vlaneseq
  %v281 = vshrl.u32 %v280, 7
  %v282 = vsub.s32 0, %v281
  %v283 = vrot.slane %v195, %v282
  %v284 = vadd.f32 %v279, %v283
  %vm285 = vcmask 64512
  %v286 = vsel %vm285, %v284, -inf
  %287 = vmax.xlane.f32.xlu0 %v286
  %v288 = vpop.xlane.xlu0 %287
  %v289 = vsub.f32 %v284, %v288
  %v290 = vmul.f32 %v289, 1.442695
  %v291 = vpow.pop %v290
  %v292 = vsel %vm285, %v291, 0.0
  %293 = vadd.xlane.f32.xlu0 %v292
  %v294 = vpop.xlane.xlu0 %293
  %v295 = vrcp.pop %v294
  %v296 = vmul.f32 %v291, %v295
  %297 = vrot.lane.b32.xlu0 %v185, 64
  %v298 = vpop.permute.xlu0 %297
  %v301 = vsel %vm285, %v296, 0
  %303 = vmatprep.subr.mxu0 0.0
  %304 = vmatpush1.msra.mxu0 %v298
  %305 = vmatprep.subr.mxu0 0.0
  %306 = vmatpush1.msra.mxu0 0.0
  %307 = vmatprep.subr.mxu0 0.0
  %308 = vmatpush1.msra.mxu0 0.0
  %309 = vmatprep.subr.mxu0 0.0
  %310 = vmatpush1.msra.mxu0 0.0
  %311 = vmatprep.subr.mxu0 0.0
  %312 = vmatpush1.msra.mxu0 0.0
  %313 = vmatprep.subr.mxu0 0.0
  %314 = vmatpush1.msra.mxu0 0.0
  %315 = vmatprep.subr.mxu0 0.0
  %316 = vmatpush1.msra.mxu0 0.0
  %317 = vmatprep.subr.mxu0 0.0
  %318 = vmatpush1.msra.mxu0 0.0
  %319 = vmatprep.subr.mxu0 0.0
  %320 = vmatpush1.msra.mxu0 0.0
  %321 = vmatprep.subr.mxu0 0.0
  %322 = vmatpush1.msra.mxu0 0.0
  %323 = vmatprep.subr.mxu0 0.0
  %324 = vmatpush1.msra.mxu0 0.0
  %325 = vmatprep.subr.mxu0 0.0
  %326 = vmatpush1.msra.mxu0 0.0
  %327 = vmatprep.subr.mxu0 0.0
  %328 = vmatpush1.msra.mxu0 0.0
  %329 = vmatprep.subr.mxu0 0.0
  %330 = vmatpush1.msra.mxu0 0.0
  %331 = vmatprep.subr.mxu0 0.0
  %332 = vmatpush1.msra.mxu0 0.0
  %333 = vmatprep.subr.mxu0 0.0
  %334 = vmatpush1.msra.mxu0 0.0
  %335 = vmatprep.subr.mxu0 0.0
  %336 = vmatpush1.msra.mxu0 0.0
  %337 = vmatprep.subr.mxu0 0.0
  %338 = vmatpush1.msra.mxu0 0.0
  %339 = vmatprep.subr.mxu0 0.0
  %340 = vmatpush1.msra.mxu0 0.0
  %341 = vmatprep.subr.mxu0 0.0
  %342 = vmatpush1.msra.mxu0 0.0
  %343 = vmatprep.subr.mxu0 0.0
  %344 = vmatpush1.msra.mxu0 0.0
  %345 = vmatprep.subr.mxu0 0.0
  %346 = vmatpush1.msra.mxu0 0.0
  %347 = vmatprep.subr.mxu0 0.0
  %348 = vmatpush1.msra.mxu0 0.0
  %349 = vmatprep.subr.mxu0 0.0
  %350 = vmatpush1.msra.mxu0 0.0
  %351 = vmatprep.subr.mxu0 0.0
  %352 = vmatpush1.msra.mxu0 0.0
  %353 = vmatprep.subr.mxu0 0.0
  %354 = vmatpush1.msra.mxu0 0.0
  %355 = vmatprep.subr.mxu0 0.0
  %356 = vmatpush1.msra.mxu0 0.0
  %357 = vmatprep.subr.mxu0 0.0
  %358 = vmatpush1.msra.mxu0 0.0
  %359 = vmatprep.subr.mxu0 0.0
  %360 = vmatpush1.msra.mxu0 0.0
  %361 = vmatprep.subr.mxu0 0.0
  %362 = vmatpush1.msra.mxu0 0.0
  %363 = vmatprep.subr.mxu0 0.0
  %364 = vmatpush1.msra.mxu0 0.0
  %365 = vmatprep.subr.mxu0 0.0
  %366 = vmatpush1.msra.mxu0 0.0
  %367 = vmatprep.mubr.f32.mxu0 0.0
  %368 = vmatmul.mubr.f32.gmra.mrb[0].mxu0 %v301
  %v369 = vpop.f32.mrb[0].mxu0
  %v370 = vadd.f32 0.0, %v369
  %v371 = vpop.f32.mrb[0].mxu0
  %372 = vdwg.mxu0
  %373 = vst.msk [vmem:[#allocation2] sm:$0xff] %vm204, %v370
  %374 = vrot.lane.b32.xlu0 %v185, 112
  %v375 = vpop.permute.xlu0 %374
  %376 = vrot.lane.b32.xlu0 %v185, 80
  %v377 = vpop.permute.xlu0 %376
  %v378 = vsel %vm204, %v375, 0
  %v380 = vsel %vm204, %v377, 0
  %382 = vmatprep.subr.mxu0 0.0
  %383 = vmatpush1.xpose.msra.mxu0 %v380
  %384 = vmatprep.subr.mxu0 0.0
  %385 = vmatpush1.xpose.msra.mxu0 0.0
  %386 = vmatprep.subr.mxu0 0.0
  %387 = vmatpush1.xpose.msra.mxu0 0.0
  %388 = vmatprep.subr.mxu0 0.0
  %389 = vmatpush1.xpose.msra.mxu0 0.0
  %390 = vmatprep.subr.mxu0 0.0
  %391 = vmatpush1.xpose.msra.mxu0 0.0
  %392 = vmatprep.subr.mxu0 0.0
  %393 = vmatpush1.xpose.msra.mxu0 0.0
  %394 = vmatprep.subr.mxu0 0.0
  %395 = vmatpush1.xpose.msra.mxu0 0.0
  %396 = vmatprep.subr.mxu0 0.0
  %397 = vmatpush1.xpose.msra.mxu0 0.0
  %398 = vmatprep.subr.mxu0 0.0
  %399 = vmatpush1.xpose.msra.mxu0 0.0
  %400 = vmatprep.subr.mxu0 0.0
  %401 = vmatpush1.xpose.msra.mxu0 0.0
  %402 = vmatprep.subr.mxu0 0.0
  %403 = vmatpush1.xpose.msra.mxu0 0.0
  %404 = vmatprep.subr.mxu0 0.0
  %405 = vmatpush1.xpose.msra.mxu0 0.0
  %406 = vmatprep.subr.mxu0 0.0
  %407 = vmatpush1.xpose.msra.mxu0 0.0
  %408 = vmatprep.subr.mxu0 0.0
  %409 = vmatpush1.xpose.msra.mxu0 0.0
  %410 = vmatprep.subr.mxu0 0.0
  %411 = vmatpush1.xpose.msra.mxu0 0.0
  %412 = vmatprep.subr.mxu0 0.0
  %413 = vmatpush1.xpose.msra.mxu0 0.0
  %414 = vmatprep.subr.mxu0 0.0
  %415 = vmatpush1.xpose.msra.mxu0 0.0
  %416 = vmatprep.subr.mxu0 0.0
  %417 = vmatpush1.xpose.msra.mxu0 0.0
  %418 = vmatprep.subr.mxu0 0.0
  %419 = vmatpush1.xpose.msra.mxu0 0.0
  %420 = vmatprep.subr.mxu0 0.0
  %421 = vmatpush1.xpose.msra.mxu0 0.0
  %422 = vmatprep.subr.mxu0 0.0
  %423 = vmatpush1.xpose.msra.mxu0 0.0
  %424 = vmatprep.subr.mxu0 0.0
  %425 = vmatpush1.xpose.msra.mxu0 0.0
  %426 = vmatprep.subr.mxu0 0.0
  %427 = vmatpush1.xpose.msra.mxu0 0.0
  %428 = vmatprep.subr.mxu0 0.0
  %429 = vmatpush1.xpose.msra.mxu0 0.0
  %430 = vmatprep.subr.mxu0 0.0
  %431 = vmatpush1.xpose.msra.mxu0 0.0
  %432 = vmatprep.subr.mxu0 0.0
  %433 = vmatpush1.xpose.msra.mxu0 0.0
  %434 = vmatprep.subr.mxu0 0.0
  %435 = vmatpush1.xpose.msra.mxu0 0.0
  %436 = vmatprep.subr.mxu0 0.0
  %437 = vmatpush1.xpose.msra.mxu0 0.0
  %438 = vmatprep.subr.mxu0 0.0
  %439 = vmatpush1.xpose.msra.mxu0 0.0
  %440 = vmatprep.subr.mxu0 0.0
  %441 = vmatpush1.xpose.msra.mxu0 0.0
  %442 = vmatprep.subr.mxu0 0.0
  %443 = vmatpush1.xpose.msra.mxu0 0.0
  %444 = vmatprep.subr.mxu0 0.0
  %445 = vmatpush1.xpose.msra.mxu0 0.0
  %446 = vmatprep.mubr.f32.mxu0 0.0
  %447 = vmatmul.mubr.f32.gmra.mrb[0].mxu0 %v378
  %v448 = vpop.f32.mrb[0].mxu0
  %v449 = vadd.f32 0.0, %v448
  %v450 = vpop.f32.mrb[0].mxu0
  %451 = vdwg.mxu0
  %v452 = vmul.f32 %v449, 0.25
  %v453 = vadd.f32 %v452, %v283
  %v454 = vsel %vm285, %v453, -inf
  %455 = vmax.xlane.f32.xlu0 %v454
  %v456 = vpop.xlane.xlu0 %455
  %v457 = vsub.f32 %v453, %v456
  %v458 = vmul.f32 %v457, 1.442695
  %v459 = vpow.pop %v458
  %v460 = vsel %vm285, %v459, 0.0
  %461 = vadd.xlane.f32.xlu0 %v460
  %v462 = vpop.xlane.xlu0 %461
  %v463 = vrcp.pop %v462
  %v464 = vmul.f32 %v459, %v463
  %465 = vrot.lane.b32.xlu0 %v185, 48
  %v466 = vpop.permute.xlu0 %465
  %v469 = vsel %vm285, %v464, 0
  %471 = vmatprep.subr.mxu0 0.0
  %472 = vmatpush1.msra.mxu0 %v466
  %473 = vmatprep.subr.mxu0 0.0
  %474 = vmatpush1.msra.mxu0 0.0
  %475 = vmatprep.subr.mxu0 0.0
  %476 = vmatpush1.msra.mxu0 0.0
  %477 = vmatprep.subr.mxu0 0.0
  %478 = vmatpush1.msra.mxu0 0.0
  %479 = vmatprep.subr.mxu0 0.0
  %480 = vmatpush1.msra.mxu0 0.0
  %481 = vmatprep.subr.mxu0 0.0
  %482 = vmatpush1.msra.mxu0 0.0
  %483 = vmatprep.subr.mxu0 0.0
  %484 = vmatpush1.msra.mxu0 0.0
  %485 = vmatprep.subr.mxu0 0.0
  %486 = vmatpush1.msra.mxu0 0.0
  %487 = vmatprep.subr.mxu0 0.0
  %488 = vmatpush1.msra.mxu0 0.0
  %489 = vmatprep.subr.mxu0 0.0
  %490 = vmatpush1.msra.mxu0 0.0
  %491 = vmatprep.subr.mxu0 0.0
  %492 = vmatpush1.msra.mxu0 0.0
  %493 = vmatprep.subr.mxu0 0.0
  %494 = vmatpush1.msra.mxu0 0.0
  %495 = vmatprep.subr.mxu0 0.0
  %496 = vmatpush1.msra.mxu0 0.0
  %497 = vmatprep.subr.mxu0 0.0
  %498 = vmatpush1.msra.mxu0 0.0
  %499 = vmatprep.subr.mxu0 0.0
  %500 = vmatpush1.msra.mxu0 0.0
  %501 = vmatprep.subr.mxu0 0.0
  %502 = vmatpush1.msra.mxu0 0.0
  %503 = vmatprep.subr.mxu0 0.0
  %504 = vmatpush1.msra.mxu0 0.0
  %505 = vmatprep.subr.mxu0 0.0
  %506 = vmatpush1.msra.mxu0 0.0
  %507 = vmatprep.subr.mxu0 0.0
  %508 = vmatpush1.msra.mxu0 0.0
  %509 = vmatprep.subr.mxu0 0.0
  %510 = vmatpush1.msra.mxu0 0.0
  %511 = vmatprep.subr.mxu0 0.0
  %512 = vmatpush1.msra.mxu0 0.0
  %513 = vmatprep.subr.mxu0 0.0
  %514 = vmatpush1.msra.mxu0 0.0
  %515 = vmatprep.subr.mxu0 0.0
  %516 = vmatpush1.msra.mxu0 0.0
  %517 = vmatprep.subr.mxu0 0.0
  %518 = vmatpush1.msra.mxu0 0.0
  %519 = vmatprep.subr.mxu0 0.0
  %520 = vmatpush1.msra.mxu0 0.0
  %521 = vmatprep.subr.mxu0 0.0
  %522 = vmatpush1.msra.mxu0 0.0
  %523 = vmatprep.subr.mxu0 0.0
  %524 = vmatpush1.msra.mxu0 0.0
  %525 = vmatprep.subr.mxu0 0.0
  %526 = vmatpush1.msra.mxu0 0.0
  %527 = vmatprep.subr.mxu0 0.0
  %528 = vmatpush1.msra.mxu0 0.0
  %529 = vmatprep.subr.mxu0 0.0
  %530 = vmatpush1.msra.mxu0 0.0
  %531 = vmatprep.subr.mxu0 0.0
  %532 = vmatpush1.msra.mxu0 0.0
  %533 = vmatprep.subr.mxu0 0.0
  %534 = vmatpush1.msra.mxu0 0.0
  %535 = vmatprep.mubr.f32.mxu0 0.0
  %536 = vmatmul.mubr.f32.gmra.mrb[0].mxu0 %v469
  %v537 = vpop.f32.mrb[0].mxu0
  %v538 = vadd.f32 0.0, %v537
  %v539 = vpop.f32.mrb[0].mxu0
  %540 = vdwg.mxu0
  %542 = vrot.lane.b32.xlu0 %v538, 16
  %v543 = vpop.permute.xlu0 %542
  %vm545 = vcmask 261248
  %546 = vst.msk [vmem:[#allocation2] sm:$0xff] %vm545, %v543
  %548 = vrot.lane.b32.xlu0 %v190, 96
  %v549 = vpop.permute.xlu0 %548
  %v550 = vsel %vm204, %v190, 0
  %v552 = vsel %vm204, %v549, 0
  %554 = vmatprep.subr.mxu0 0.0
  %555 = vmatpush1.xpose.msra.mxu0 %v552
  %556 = vmatprep.subr.mxu0 0.0
  %557 = vmatpush1.xpose.msra.mxu0 0.0
  %558 = vmatprep.subr.mxu0 0.0
  %559 = vmatpush1.xpose.msra.mxu0 0.0
  %560 = vmatprep.subr.mxu0 0.0
  %561 = vmatpush1.xpose.msra.mxu0 0.0
  %562 = vmatprep.subr.mxu0 0.0
  %563 = vmatpush1.xpose.msra.mxu0 0.0
  %564 = vmatprep.subr.mxu0 0.0
  %565 = vmatpush1.xpose.msra.mxu0 0.0
  %566 = vmatprep.subr.mxu0 0.0
  %567 = vmatpush1.xpose.msra.mxu0 0.0
  %568 = vmatprep.subr.mxu0 0.0
  %569 = vmatpush1.xpose.msra.mxu0 0.0
  %570 = vmatprep.subr.mxu0 0.0
  %571 = vmatpush1.xpose.msra.mxu0 0.0
  %572 = vmatprep.subr.mxu0 0.0
  %573 = vmatpush1.xpose.msra.mxu0 0.0
  %574 = vmatprep.subr.mxu0 0.0
  %575 = vmatpush1.xpose.msra.mxu0 0.0
  %576 = vmatprep.subr.mxu0 0.0
  %577 = vmatpush1.xpose.msra.mxu0 0.0
  %578 = vmatprep.subr.mxu0 0.0
  %579 = vmatpush1.xpose.msra.mxu0 0.0
  %580 = vmatprep.subr.mxu0 0.0
  %581 = vmatpush1.xpose.msra.mxu0 0.0
  %582 = vmatprep.subr.mxu0 0.0
  %583 = vmatpush1.xpose.msra.mxu0 0.0
  %584 = vmatprep.subr.mxu0 0.0
  %585 = vmatpush1.xpose.msra.mxu0 0.0
  %586 = vmatprep.subr.mxu0 0.0
  %587 = vmatpush1.xpose.msra.mxu0 0.0
  %588 = vmatprep.subr.mxu0 0.0
  %589 = vmatpush1.xpose.msra.mxu0 0.0
  %590 = vmatprep.subr.mxu0 0.0
  %591 = vmatpush1.xpose.msra.mxu0 0.0
  %592 = vmatprep.subr.mxu0 0.0
  %593 = vmatpush1.xpose.msra.mxu0 0.0
  %594 = vmatprep.subr.mxu0 0.0
  %595 = vmatpush1.xpose.msra.mxu0 0.0
  %596 = vmatprep.subr.mxu0 0.0
  %597 = vmatpush1.xpose.msra.mxu0 0.0
  %598 = vmatprep.subr.mxu0 0.0
  %599 = vmatpush1.xpose.msra.mxu0 0.0
  %600 = vmatprep.subr.mxu0 0.0
  %601 = vmatpush1.xpose.msra.mxu0 0.0
  %602 = vmatprep.subr.mxu0 0.0
  %603 = vmatpush1.xpose.msra.mxu0 0.0
  %604 = vmatprep.subr.mxu0 0.0
  %605 = vmatpush1.xpose.msra.mxu0 0.0
  %606 = vmatprep.subr.mxu0 0.0
  %607 = vmatpush1.xpose.msra.mxu0 0.0
  %608 = vmatprep.subr.mxu0 0.0
  %609 = vmatpush1.xpose.msra.mxu0 0.0
  %610 = vmatprep.subr.mxu0 0.0
  %611 = vmatpush1.xpose.msra.mxu0 0.0
  %612 = vmatprep.subr.mxu0 0.0
  %613 = vmatpush1.xpose.msra.mxu0 0.0
  %614 = vmatprep.subr.mxu0 0.0
  %615 = vmatpush1.xpose.msra.mxu0 0.0
  %616 = vmatprep.subr.mxu0 0.0
  %617 = vmatpush1.xpose.msra.mxu0 0.0
  %618 = vmatprep.mubr.f32.mxu0 0.0
  %619 = vmatmul.mubr.f32.gmra.mrb[0].mxu0 %v550
  %v620 = vpop.f32.mrb[0].mxu0
  %v621 = vadd.f32 0.0, %v620
  %v622 = vpop.f32.mrb[0].mxu0
  %623 = vdwg.mxu0
  %v624 = vmul.f32 %v621, 0.25
  %v625 = vlaneseq
  %v626 = vshrl.u32 %v625, 7
  %v627 = vsub.s32 1, %v626
  %v628 = vrot.slane %v195, %v627
  %v629 = vadd.f32 %v624, %v628
  %v630 = vsel %vm285, %v629, -inf
  %631 = vmax.xlane.f32.xlu0 %v630
  %v632 = vpop.xlane.xlu0 %631
  %v633 = vsub.f32 %v629, %v632
  %v634 = vmul.f32 %v633, 1.442695
  %v635 = vpow.pop %v634
  %v636 = vsel %vm285, %v635, 0.0
  %637 = vadd.xlane.f32.xlu0 %v636
  %v638 = vpop.xlane.xlu0 %637
  %v639 = vrcp.pop %v638
  %v640 = vmul.f32 %v635, %v639
  %641 = vrot.lane.b32.xlu0 %v190, 64
  %v642 = vpop.permute.xlu0 %641
  %v645 = vsel %vm285, %v640, 0
  %647 = vmatprep.subr.mxu0 0.0
  %648 = vmatpush1.msra.mxu0 %v642
  %649 = vmatprep.subr.mxu0 0.0
  %650 = vmatpush1.msra.mxu0 0.0
  %651 = vmatprep.subr.mxu0 0.0
  %652 = vmatpush1.msra.mxu0 0.0
  %653 = vmatprep.subr.mxu0 0.0
  %654 = vmatpush1.msra.mxu0 0.0
  %655 = vmatprep.subr.mxu0 0.0
  %656 = vmatpush1.msra.mxu0 0.0
  %657 = vmatprep.subr.mxu0 0.0
  %658 = vmatpush1.msra.mxu0 0.0
  %659 = vmatprep.subr.mxu0 0.0
  %660 = vmatpush1.msra.mxu0 0.0
  %661 = vmatprep.subr.mxu0 0.0
  %662 = vmatpush1.msra.mxu0 0.0
  %663 = vmatprep.subr.mxu0 0.0
  %664 = vmatpush1.msra.mxu0 0.0
  %665 = vmatprep.subr.mxu0 0.0
  %666 = vmatpush1.msra.mxu0 0.0
  %667 = vmatprep.subr.mxu0 0.0
  %668 = vmatpush1.msra.mxu0 0.0
  %669 = vmatprep.subr.mxu0 0.0
  %670 = vmatpush1.msra.mxu0 0.0
  %671 = vmatprep.subr.mxu0 0.0
  %672 = vmatpush1.msra.mxu0 0.0
  %673 = vmatprep.subr.mxu0 0.0
  %674 = vmatpush1.msra.mxu0 0.0
  %675 = vmatprep.subr.mxu0 0.0
  %676 = vmatpush1.msra.mxu0 0.0
  %677 = vmatprep.subr.mxu0 0.0
  %678 = vmatpush1.msra.mxu0 0.0
  %679 = vmatprep.subr.mxu0 0.0
  %680 = vmatpush1.msra.mxu0 0.0
  %681 = vmatprep.subr.mxu0 0.0
  %682 = vmatpush1.msra.mxu0 0.0
  %683 = vmatprep.subr.mxu0 0.0
  %684 = vmatpush1.msra.mxu0 0.0
  %685 = vmatprep.subr.mxu0 0.0
  %686 = vmatpush1.msra.mxu0 0.0
  %687 = vmatprep.subr.mxu0 0.0
  %688 = vmatpush1.msra.mxu0 0.0
  %689 = vmatprep.subr.mxu0 0.0
  %690 = vmatpush1.msra.mxu0 0.0
  %691 = vmatprep.subr.mxu0 0.0
  %692 = vmatpush1.msra.mxu0 0.0
  %693 = vmatprep.subr.mxu0 0.0
  %694 = vmatpush1.msra.mxu0 0.0
  %695 = vmatprep.subr.mxu0 0.0
  %696 = vmatpush1.msra.mxu0 0.0
  %697 = vmatprep.subr.mxu0 0.0
  %698 = vmatpush1.msra.mxu0 0.0
  %699 = vmatprep.subr.mxu0 0.0
  %700 = vmatpush1.msra.mxu0 0.0
  %701 = vmatprep.subr.mxu0 0.0
  %702 = vmatpush1.msra.mxu0 0.0
  %703 = vmatprep.subr.mxu0 0.0
  %704 = vmatpush1.msra.mxu0 0.0
  %705 = vmatprep.subr.mxu0 0.0
  %706 = vmatpush1.msra.mxu0 0.0
  %707 = vmatprep.subr.mxu0 0.0
  %708 = vmatpush1.msra.mxu0 0.0
  %709 = vmatprep.subr.mxu0 0.0
  %710 = vmatpush1.msra.mxu0 0.0
  %711 = vmatprep.mubr.f32.mxu0 0.0
  %712 = vmatmul.mubr.f32.gmra.mrb[0].mxu0 %v645
  %v713 = vpop.f32.mrb[0].mxu0
  %v714 = vadd.f32 0.0, %v713
  %v715 = vpop.f32.mrb[0].mxu0
  %716 = vdwg.mxu0
  %717 = vst.msk [vmem:[#allocation2 + $0x8] sm:$0xff] %vm204, %v714
  %718 = vrot.lane.b32.xlu0 %v190, 112
  %v719 = vpop.permute.xlu0 %718
  %720 = vrot.lane.b32.xlu0 %v190, 80
  %v721 = vpop.permute.xlu0 %720
  %v722 = vsel %vm204, %v719, 0
  %v724 = vsel %vm204, %v721, 0
  %726 = vmatprep.subr.mxu0 0.0
  %727 = vmatpush1.xpose.msra.mxu0 %v724
  %728 = vmatprep.subr.mxu0 0.0
  %729 = vmatpush1.xpose.msra.mxu0 0.0
  %730 = vmatprep.subr.mxu0 0.0
  %731 = vmatpush1.xpose.msra.mxu0 0.0
  %732 = vmatprep.subr.mxu0 0.0
  %733 = vmatpush1.xpose.msra.mxu0 0.0
  %734 = vmatprep.subr.mxu0 0.0
  %735 = vmatpush1.xpose.msra.mxu0 0.0
  %736 = vmatprep.subr.mxu0 0.0
  %737 = vmatpush1.xpose.msra.mxu0 0.0
  %738 = vmatprep.subr.mxu0 0.0
  %739 = vmatpush1.xpose.msra.mxu0 0.0
  %740 = vmatprep.subr.mxu0 0.0
  %741 = vmatpush1.xpose.msra.mxu0 0.0
  %742 = vmatprep.subr.mxu0 0.0
  %743 = vmatpush1.xpose.msra.mxu0 0.0
  %744 = vmatprep.subr.mxu0 0.0
  %745 = vmatpush1.xpose.msra.mxu0 0.0
  %746 = vmatprep.subr.mxu0 0.0
  %747 = vmatpush1.xpose.msra.mxu0 0.0
  %748 = vmatprep.subr.mxu0 0.0
  %749 = vmatpush1.xpose.msra.mxu0 0.0
  %750 = vmatprep.subr.mxu0 0.0
  %751 = vmatpush1.xpose.msra.mxu0 0.0
  %752 = vmatprep.subr.mxu0 0.0
  %753 = vmatpush1.xpose.msra.mxu0 0.0
  %754 = vmatprep.subr.mxu0 0.0
  %755 = vmatpush1.xpose.msra.mxu0 0.0
  %756 = vmatprep.subr.mxu0 0.0
  %757 = vmatpush1.xpose.msra.mxu0 0.0
  %758 = vmatprep.subr.mxu0 0.0
  %759 = vmatpush1.xpose.msra.mxu0 0.0
  %760 = vmatprep.subr.mxu0 0.0
  %761 = vmatpush1.xpose.msra.mxu0 0.0
  %762 = vmatprep.subr.mxu0 0.0
  %763 = vmatpush1.xpose.msra.mxu0 0.0
  %764 = vmatprep.subr.mxu0 0.0
  %765 = vmatpush1.xpose.msra.mxu0 0.0
  %766 = vmatprep.subr.mxu0 0.0
  %767 = vmatpush1.xpose.msra.mxu0 0.0
  %768 = vmatprep.subr.mxu0 0.0
  %769 = vmatpush1.xpose.msra.mxu0 0.0
  %770 = vmatprep.subr.mxu0 0.0
  %771 = vmatpush1.xpose.msra.mxu0 0.0
  %772 = vmatprep.subr.mxu0 0.0
  %773 = vmatpush1.xpose.msra.mxu0 0.0
  %774 = vmatprep.subr.mxu0 0.0
  %775 = vmatpush1.xpose.msra.mxu0 0.0
  %776 = vmatprep.subr.mxu0 0.0
  %777 = vmatpush1.xpose.msra.mxu0 0.0
  %778 = vmatprep.subr.mxu0 0.0
  %779 = vmatpush1.xpose.msra.mxu0 0.0
  %780 = vmatprep.subr.mxu0 0.0
  %781 = vmatpush1.xpose.msra.mxu0 0.0
  %782 = vmatprep.subr.mxu0 0.0
  %783 = vmatpush1.xpose.msra.mxu0 0.0
  %784 = vmatprep.subr.mxu0 0.0
  %785 = vmatpush1.xpose.msra.mxu0 0.0
  %786 = vmatprep.subr.mxu0 0.0
  %787 = vmatpush1.xpose.msra.mxu0 0.0
  %788 = vmatprep.subr.mxu0 0.0
  %789 = vmatpush1.xpose.msra.mxu0 0.0
  %790 = vmatprep.mubr.f32.mxu0 0.0
  %791 = vmatmul.mubr.f32.gmra.mrb[0].mxu0 %v722
  %v792 = vpop.f32.mrb[0].mxu0
  %v793 = vadd.f32 0.0, %v792
  %v794 = vpop.f32.mrb[0].mxu0
  %795 = vdwg.mxu0
  %v796 = vmul.f32 %v793, 0.25
  %v797 = vadd.f32 %v796, %v628
  %v798 = vsel %vm285, %v797, -inf
  %799 = vmax.xlane.f32.xlu0 %v798
  %v800 = vpop.xlane.xlu0 %799
  %v801 = vsub.f32 %v797, %v800
  %v802 = vmul.f32 %v801, 1.442695
  %v803 = vpow.pop %v802
  %v804 = vsel %vm285, %v803, 0.0
  %805 = vadd.xlane.f32.xlu0 %v804
  %v806 = vpop.xlane.xlu0 %805
  %v807 = vrcp.pop %v806
  %v808 = vmul.f32 %v803, %v807
  %809 = vrot.lane.b32.xlu0 %v190, 48
  %v810 = vpop.permute.xlu0 %809
  %v813 = vsel %vm285, %v808, 0
  %815 = vmatprep.subr.mxu0 0.0
  %816 = vmatpush1.msra.mxu0 %v810
  %817 = vmatprep.subr.mxu0 0.0
  %818 = vmatpush1.msra.mxu0 0.0
  %819 = vmatprep.subr.mxu0 0.0
  %820 = vmatpush1.msra.mxu0 0.0
  %821 = vmatprep.subr.mxu0 0.0
  %822 = vmatpush1.msra.mxu0 0.0
  %823 = vmatprep.subr.mxu0 0.0
  %824 = vmatpush1.msra.mxu0 0.0
  %825 = vmatprep.subr.mxu0 0.0
  %826 = vmatpush1.msra.mxu0 0.0
  %827 = vmatprep.subr.mxu0 0.0
  %828 = vmatpush1.msra.mxu0 0.0
  %829 = vmatprep.subr.mxu0 0.0
  %830 = vmatpush1.msra.mxu0 0.0
  %831 = vmatprep.subr.mxu0 0.0
  %832 = vmatpush1.msra.mxu0 0.0
  %833 = vmatprep.subr.mxu0 0.0
  %834 = vmatpush1.msra.mxu0 0.0
  %835 = vmatprep.subr.mxu0 0.0
  %836 = vmatpush1.msra.mxu0 0.0
  %837 = vmatprep.subr.mxu0 0.0
  %838 = vmatpush1.msra.mxu0 0.0
  %839 = vmatprep.subr.mxu0 0.0
  %840 = vmatpush1.msra.mxu0 0.0
  %841 = vmatprep.subr.mxu0 0.0
  %842 = vmatpush1.msra.mxu0 0.0
  %843 = vmatprep.subr.mxu0 0.0
  %844 = vmatpush1.msra.mxu0 0.0
  %845 = vmatprep.subr.mxu0 0.0
  %846 = vmatpush1.msra.mxu0 0.0
  %847 = vmatprep.subr.mxu0 0.0
  %848 = vmatpush1.msra.mxu0 0.0
  %849 = vmatprep.subr.mxu0 0.0
  %850 = vmatpush1.msra.mxu0 0.0
  %851 = vmatprep.subr.mxu0 0.0
  %852 = vmatpush1.msra.mxu0 0.0
  %853 = vmatprep.subr.mxu0 0.0
  %854 = vmatpush1.msra.mxu0 0.0
  %855 = vmatprep.subr.mxu0 0.0
  %856 = vmatpush1.msra.mxu0 0.0
  %857 = vmatprep.subr.mxu0 0.0
  %858 = vmatpush1.msra.mxu0 0.0
  %859 = vmatprep.subr.mxu0 0.0
  %860 = vmatpush1.msra.mxu0 0.0
  %861 = vmatprep.subr.mxu0 0.0
  %862 = vmatpush1.msra.mxu0 0.0
  %863 = vmatprep.subr.mxu0 0.0
  %864 = vmatpush1.msra.mxu0 0.0
  %865 = vmatprep.subr.mxu0 0.0
  %866 = vmatpush1.msra.mxu0 0.0
  %867 = vmatprep.subr.mxu0 0.0
  %868 = vmatpush1.msra.mxu0 0.0
  %869 = vmatprep.subr.mxu0 0.0
  %870 = vmatpush1.msra.mxu0 0.0
  %871 = vmatprep.subr.mxu0 0.0
  %872 = vmatpush1.msra.mxu0 0.0
  %873 = vmatprep.subr.mxu0 0.0
  %874 = vmatpush1.msra.mxu0 0.0
  %875 = vmatprep.subr.mxu0 0.0
  %876 = vmatpush1.msra.mxu0 0.0
  %877 = vmatprep.subr.mxu0 0.0
  %878 = vmatpush1.msra.mxu0 0.0
  %879 = vmatprep.mubr.f32.mxu0 0.0
  %880 = vmatmul.mubr.f32.gmra.mrb[0].mxu0 %v813
  %v881 = vpop.f32.mrb[0].mxu0
  %v882 = vadd.f32 0.0, %v881
  %v883 = vpop.f32.mrb[0].mxu0
  %884 = vdwg.mxu0
  %886 = vrot.lane.b32.xlu0 %v882, 16
  %v887 = vpop.permute.xlu0 %886
  %889 = vst.msk [vmem:[#allocation2 + $0x8] sm:$0xff] %vm545, %v887
  %v890 = vld [vmem:[#allocation2] sm:$0xff]
  %v891 = vld [vmem:[#allocation2 + $0x8] sm:$0xff]
  %v893 = vlaneseq
  %v894 = vshrl.u32 %v893, 7
  %v895 = vsub.s32 0, %v894
  %v896 = vrot.slane %v200, %v895
  %v899 = vsel %vm57, %v890, 0
  %v902 = vsel %vm57, %v891, 0
  %904 = vmatprep.subr.mxu0 0.0
  %905 = vmatpush1.msra.mxu0 %v196
  %906 = vmatprep.subr.mxu0 0.0
  %907 = vmatpush1.msra.mxu0 %v197
  %908 = vmatprep.subr.mxu0 0.0
  %909 = vmatpush1.msra.mxu0 %v198
  %910 = vmatprep.subr.mxu0 0.0
  %911 = vmatpush1.msra.mxu0 %v199
  %912 = vmatprep.subr.mxu0 0.0
  %913 = vmatpush1.msra.mxu0 0.0
  %914 = vmatprep.subr.mxu0 0.0
  %915 = vmatpush1.msra.mxu0 0.0
  %916 = vmatprep.subr.mxu0 0.0
  %917 = vmatpush1.msra.mxu0 0.0
  %918 = vmatprep.subr.mxu0 0.0
  %919 = vmatpush1.msra.mxu0 0.0
  %920 = vmatprep.subr.mxu0 0.0
  %921 = vmatpush1.msra.mxu0 0.0
  %922 = vmatprep.subr.mxu0 0.0
  %923 = vmatpush1.msra.mxu0 0.0
  %924 = vmatprep.subr.mxu0 0.0
  %925 = vmatpush1.msra.mxu0 0.0
  %926 = vmatprep.subr.mxu0 0.0
  %927 = vmatpush1.msra.mxu0 0.0
  %928 = vmatprep.subr.mxu0 0.0
  %929 = vmatpush1.msra.mxu0 0.0
  %930 = vmatprep.subr.mxu0 0.0
  %931 = vmatpush1.msra.mxu0 0.0
  %932 = vmatprep.subr.mxu0 0.0
  %933 = vmatpush1.msra.mxu0 0.0
  %934 = vmatprep.subr.mxu0 0.0
  %935 = vmatpush1.msra.mxu0 0.0
  %936 = vmatprep.subr.mxu0 0.0
  %937 = vmatpush1.msra.mxu0 0.0
  %938 = vmatprep.subr.mxu0 0.0
  %939 = vmatpush1.msra.mxu0 0.0
  %940 = vmatprep.subr.mxu0 0.0
  %941 = vmatpush1.msra.mxu0 0.0
  %942 = vmatprep.subr.mxu0 0.0
  %943 = vmatpush1.msra.mxu0 0.0
  %944 = vmatprep.subr.mxu0 0.0
  %945 = vmatpush1.msra.mxu0 0.0
  %946 = vmatprep.subr.mxu0 0.0
  %947 = vmatpush1.msra.mxu0 0.0
  %948 = vmatprep.subr.mxu0 0.0
  %949 = vmatpush1.msra.mxu0 0.0
  %950 = vmatprep.subr.mxu0 0.0
  %951 = vmatpush1.msra.mxu0 0.0
  %952 = vmatprep.subr.mxu0 0.0
  %953 = vmatpush1.msra.mxu0 0.0
  %954 = vmatprep.subr.mxu0 0.0
  %955 = vmatpush1.msra.mxu0 0.0
  %956 = vmatprep.subr.mxu0 0.0
  %957 = vmatpush1.msra.mxu0 0.0
  %958 = vmatprep.subr.mxu0 0.0
  %959 = vmatpush1.msra.mxu0 0.0
  %960 = vmatprep.subr.mxu0 0.0
  %961 = vmatpush1.msra.mxu0 0.0
  %962 = vmatprep.subr.mxu0 0.0
  %963 = vmatpush1.msra.mxu0 0.0
  %964 = vmatprep.subr.mxu0 0.0
  %965 = vmatpush1.msra.mxu0 0.0
  %966 = vmatprep.subr.mxu0 0.0
  %967 = vmatpush1.msra.mxu0 0.0
  %968 = vmatprep.mubr.f32.mxu0 0.0
  %969 = vmatmul.mubr.f32.gmra.mrb[0].mxu0 %v899
  %v970 = vpop.f32.mrb[0].mxu0
  %v971 = vadd.f32 %v896, %v970
  %v972 = vpop.f32.mrb[0].mxu0
  %973 = vmatprep.mubr.f32.mxu0 0.0
  %974 = vmatmul.mubr.f32.gmra.mrb[0].mxu0 %v902
  %v975 = vpop.f32.mrb[0].mxu0
  %v976 = vadd.f32 %v896, %v975
  %v977 = vpop.f32.mrb[0].mxu0
  %978 = vdwg.mxu0
  %v979 = vadd.f32 %v99, %v971
  %v980 = vadd.f32 %v100, %v976
  %v981 = vld [vmem:[%s8] sm:$0x1]
  %v982 = vld [vmem:[%s9] sm:$0x1]
  %v983 = vsel %vm57, %v979, 0.0
  %984 = vadd.xlane.f32.xlu0 %v983
  %v985 = vpop.xlane.xlu0 %984
  %v986 = vsel %vm57, %v980, 0.0
  %987 = vadd.xlane.f32.xlu0 %v986
  %v988 = vpop.xlane.xlu0 %987
  %v989 = vmul.f32 %v985, %v64
  %v990 = vmul.f32 %v988, %v64
  %v991 = vsub.f32 %v979, %v989
  %v992 = vsub.f32 %v980, %v990
  %v993 = vmul.f32 %v991, %v991
  %v994 = vmul.f32 %v992, %v992
  %v995 = vsel %vm57, %v993, 0.0
  %996 = vadd.xlane.f32.xlu0 %v995
  %v997 = vpop.xlane.xlu0 %996
  %v998 = vsel %vm57, %v994, 0.0
  %999 = vadd.xlane.f32.xlu0 %v998
  %v1000 = vpop.xlane.xlu0 %999
  %v1001 = vmul.f32 %v997, %v64
  %v1002 = vmul.f32 %v1000, %v64
  %v1003 = vadd.f32 %v1001, 1e-05
  %v1004 = vadd.f32 %v1002, 1e-05
  %v1005 = vrsqrt.pop %v1003
  %v1006 = vrsqrt.pop %v1004
  %v1007 = vmul.f32 %v991, %v1005
  %v1008 = vmul.f32 %v992, %v1006
  %v1010 = vlaneseq
  %v1011 = vshrl.u32 %v1010, 7
  %v1012 = vsub.s32 0, %v1011
  %v1013 = vrot.slane %v981, %v1012
  %v1015 = vmul.f32 %v1007, %v1013
  %v1016 = vmul.f32 %v1008, %v1013
  %v1018 = vlaneseq
  %v1019 = vshrl.u32 %v1018, 7
  %v1020 = vsub.s32 0, %v1019
  %v1021 = vrot.slane %v982, %v1020
  %v1023 = vadd.f32 %v1015, %v1021
  %v1024 = vadd.f32 %v1016, %v1021
  %v1025 = vld [vmem:[%s10] sm:$0xff]
  %v1026 = vld [vmem:[%s10 + $0x8] sm:$0xff]
  %v1027 = vld [vmem:[%s10 + $0x10] sm:$0xff]
  %v1028 = vld [vmem:[%s10 + $0x18] sm:$0xff]
  %v1029 = vld [vmem:[%s11] sm:$0x1]
  %v1031 = vlaneseq
  %v1032 = vshrl.u32 %v1031, 7
  %v1033 = vsub.s32 0, %v1032
  %v1034 = vrot.slane %v1029, %v1033
  %v1037 = vsel %vm57, %v1023, 0
  %v1040 = vsel %vm57, %v1024, 0
  %1042 = vmatprep.subr.mxu0 0.0
  %1043 = vmatpush1.msra.mxu0 %v1025
  %1044 = vmatprep.subr.mxu0 0.0
  %1045 = vmatpush1.msra.mxu0 %v1026
  %1046 = vmatprep.subr.mxu0 0.0
  %1047 = vmatpush1.msra.mxu0 %v1027
  %1048 = vmatprep.subr.mxu0 0.0
  %1049 = vmatpush1.msra.mxu0 %v1028
  %1050 = vmatprep.subr.mxu0 0.0
  %1051 = vmatpush1.msra.mxu0 0.0
  %1052 = vmatprep.subr.mxu0 0.0
  %1053 = vmatpush1.msra.mxu0 0.0
  %1054 = vmatprep.subr.mxu0 0.0
  %1055 = vmatpush1.msra.mxu0 0.0
  %1056 = vmatprep.subr.mxu0 0.0
  %1057 = vmatpush1.msra.mxu0 0.0
  %1058 = vmatprep.subr.mxu0 0.0
  %1059 = vmatpush1.msra.mxu0 0.0
  %1060 = vmatprep.subr.mxu0 0.0
  %1061 = vmatpush1.msra.mxu0 0.0
  %1062 = vmatprep.subr.mxu0 0.0
  %1063 = vmatpush1.msra.mxu0 0.0
  %1064 = vmatprep.subr.mxu0 0.0
  %1065 = vmatpush1.msra.mxu0 0.0
  %1066 = vmatprep.subr.mxu0 0.0
  %1067 = vmatpush1.msra.mxu0 0.0
  %1068 = vmatprep.subr.mxu0 0.0
  %1069 = vmatpush1.msra.mxu0 0.0
  %1070 = vmatprep.subr.mxu0 0.0
  %1071 = vmatpush1.msra.mxu0 0.0
  %1072 = vmatprep.subr.mxu0 0.0
  %1073 = vmatpush1.msra.mxu0 0.0
  %1074 = vmatprep.subr.mxu0 0.0
  %1075 = vmatpush1.msra.mxu0 0.0
  %1076 = vmatprep.subr.mxu0 0.0
  %1077 = vmatpush1.msra.mxu0 0.0
  %1078 = vmatprep.subr.mxu0 0.0
  %1079 = vmatpush1.msra.mxu0 0.0
  %1080 = vmatprep.subr.mxu0 0.0
  %1081 = vmatpush1.msra.mxu0 0.0
  %1082 = vmatprep.subr.mxu0 0.0
  %1083 = vmatpush1.msra.mxu0 0.0
  %1084 = vmatprep.subr.mxu0 0.0
  %1085 = vmatpush1.msra.mxu0 0.0
  %1086 = vmatprep.subr.mxu0 0.0
  %1087 = vmatpush1.msra.mxu0 0.0
  %1088 = vmatprep.subr.mxu0 0.0
  %1089 = vmatpush1.msra.mxu0 0.0
  %1090 = vmatprep.subr.mxu0 0.0
  %1091 = vmatpush1.msra.mxu0 0.0
  %1092 = vmatprep.subr.mxu0 0.0
  %1093 = vmatpush1.msra.mxu0 0.0
  %1094 = vmatprep.subr.mxu0 0.0
  %1095 = vmatpush1.msra.mxu0 0.0
  %1096 = vmatprep.subr.mxu0 0.0
  %1097 = vmatpush1.msra.mxu0 0.0
  %1098 = vmatprep.subr.mxu0 0.0
  %1099 = vmatpush1.msra.mxu0 0.0
  %1100 = vmatprep.subr.mxu0 0.0
  %1101 = vmatpush1.msra.mxu0 0.0
  %1102 = vmatprep.subr.mxu0 0.0
  %1103 = vmatpush1.msra.mxu0 0.0
  %1104 = vmatprep.subr.mxu0 0.0
  %1105 = vmatpush1.msra.mxu0 0.0
  %1106 = vmatprep.mubr.f32.mxu0 0.0
  %1107 = vmatmul.mubr.f32.gmra.mrb[0].mxu0 %v1037
  %v1108 = vpop.f32.mrb[0].mxu0
  %v1109 = vadd.f32 %v1034, %v1108
  %v1110 = vpop.f32.mrb[0].mxu0
  %1111 = vmatprep.mubr.f32.mxu0 0.0
  %1112 = vmatmul.mubr.f32.gmra.mrb[0].mxu0 %v1040
  %v1113 = vpop.f32.mrb[0].mxu0
  %v1114 = vadd.f32 %v1034, %v1113
  %v1115 = vpop.f32.mrb[0].mxu0
  %1116 = vdwg.mxu0
  %v1117 = vmul.f32 %v1109, %v1109
  %v1118 = vmul.f32 %v1114, %v1114
  %v1119 = vmul.f32 %v1109, %v1117
  %v1120 = vmul.f32 %v1114, %v1118
  %v1121 = vmul.f32 %v1119, 0.044715
  %v1122 = vmul.f32 %v1120, 0.044715
  %v1123 = vadd.f32 %v1109, %v1121
  %v1124 = vadd.f32 %v1114, %v1122
  %v1125 = vmul.f32 %v1123, 0.7978846
  %v1126 = vmul.f32 %v1124, 0.7978846
  %v1127 = vtanh.pop %v1125
  %v1128 = vtanh.pop %v1126
  %v1129 = vadd.f32 %v1127, 1.0
  %v1130 = vadd.f32 %v1128, 1.0
  %v1131 = vmul.f32 %v1129, 0.5
  %v1132 = vmul.f32 %v1130, 0.5
  %v1133 = vmul.f32 %v1109, %v1131
  %v1134 = vmul.f32 %v1114, %v1132
  %v1135 = vld [vmem:[%s12] sm:$0xff]
  %v1136 = vld [vmem:[%s12 + $0x8] sm:$0xff]
  %v1137 = vld [vmem:[%s12 + $0x10] sm:$0xff]
  %v1138 = vld [vmem:[%s12 + $0x18] sm:$0xff]
  %v1139 = vld [vmem:[%s12 + $0x20] sm:$0xff]
  %v1140 = vld [vmem:[%s12 + $0x28] sm:$0xff]
  %v1141 = vld [vmem:[%s12 + $0x30] sm:$0xff]
  %v1142 = vld [vmem:[%s12 + $0x38] sm:$0xff]
  %v1143 = vld [vmem:[%s12 + $0x40] sm:$0xff]
  %v1144 = vld [vmem:[%s12 + $0x48] sm:$0xff]
  %v1145 = vld [vmem:[%s12 + $0x50] sm:$0xff]
  %v1146 = vld [vmem:[%s12 + $0x58] sm:$0xff]
  %v1147 = vld [vmem:[%s12 + $0x60] sm:$0xff]
  %v1148 = vld [vmem:[%s12 + $0x68] sm:$0xff]
  %v1149 = vld [vmem:[%s12 + $0x70] sm:$0xff]
  %v1150 = vld [vmem:[%s12 + $0x78] sm:$0xff]
  %v1151 = vld [vmem:[%s13] sm:$0x1]
  %v1153 = vlaneseq
  %v1154 = vshrl.u32 %v1153, 7
  %v1155 = vsub.s32 0, %v1154
  %v1156 = vrot.slane %v1151, %v1155
  %1158 = vmatprep.subr.mxu0 0.0
  %1159 = vmatpush1.msra.mxu0 %v1135
  %1160 = vmatprep.subr.mxu0 0.0
  %1161 = vmatpush1.msra.mxu0 %v1136
  %1162 = vmatprep.subr.mxu0 0.0
  %1163 = vmatpush1.msra.mxu0 %v1137
  %1164 = vmatprep.subr.mxu0 0.0
  %1165 = vmatpush1.msra.mxu0 %v1138
  %1166 = vmatprep.subr.mxu0 0.0
  %1167 = vmatpush1.msra.mxu0 %v1139
  %1168 = vmatprep.subr.mxu0 0.0
  %1169 = vmatpush1.msra.mxu0 %v1140
  %1170 = vmatprep.subr.mxu0 0.0
  %1171 = vmatpush1.msra.mxu0 %v1141
  %1172 = vmatprep.subr.mxu0 0.0
  %1173 = vmatpush1.msra.mxu0 %v1142
  %1174 = vmatprep.subr.mxu0 0.0
  %1175 = vmatpush1.msra.mxu0 %v1143
  %1176 = vmatprep.subr.mxu0 0.0
  %1177 = vmatpush1.msra.mxu0 %v1144
  %1178 = vmatprep.subr.mxu0 0.0
  %1179 = vmatpush1.msra.mxu0 %v1145
  %1180 = vmatprep.subr.mxu0 0.0
  %1181 = vmatpush1.msra.mxu0 %v1146
  %1182 = vmatprep.subr.mxu0 0.0
  %1183 = vmatpush1.msra.mxu0 %v1147
  %1184 = vmatprep.subr.mxu0 0.0
  %1185 = vmatpush1.msra.mxu0 %v1148
  %1186 = vmatprep.subr.mxu0 0.0
  %1187 = vmatpush1.msra.mxu0 %v1149
  %1188 = vmatprep.subr.mxu0 0.0
  %1189 = vmatpush1.msra.mxu0 %v1150
  %1190 = vmatprep.subr.mxu0 0.0
  %1191 = vmatpush1.msra.mxu0 0.0
  %1192 = vmatprep.subr.mxu0 0.0
  %1193 = vmatpush1.msra.mxu0 0.0
  %1194 = vmatprep.subr.mxu0 0.0
  %1195 = vmatpush1.msra.mxu0 0.0
  %1196 = vmatprep.subr.mxu0 0.0
  %1197 = vmatpush1.msra.mxu0 0.0
  %1198 = vmatprep.subr.mxu0 0.0
  %1199 = vmatpush1.msra.mxu0 0.0
  %1200 = vmatprep.subr.mxu0 0.0
  %1201 = vmatpush1.msra.mxu0 0.0
  %1202 = vmatprep.subr.mxu0 0.0
  %1203 = vmatpush1.msra.mxu0 0.0
  %1204 = vmatprep.subr.mxu0 0.0
  %1205 = vmatpush1.msra.mxu0 0.0
  %1206 = vmatprep.subr.mxu0 0.0
  %1207 = vmatpush1.msra.mxu0 0.0
  %1208 = vmatprep.subr.mxu0 0.0
  %1209 = vmatpush1.msra.mxu0 0.0
  %1210 = vmatprep.subr.mxu0 0.0
  %1211 = vmatpush1.msra.mxu0 0.0
  %1212 = vmatprep.subr.mxu0 0.0
  %1213 = vmatpush1.msra.mxu0 0.0
  %1214 = vmatprep.subr.mxu0 0.0
  %1215 = vmatpush1.msra.mxu0 0.0
  %1216 = vmatprep.subr.mxu0 0.0
  %1217 = vmatpush1.msra.mxu0 0.0
  %1218 = vmatprep.subr.mxu0 0.0
  %1219 = vmatpush1.msra.mxu0 0.0
  %1220 = vmatprep.subr.mxu0 0.0
  %1221 = vmatpush1.msra.mxu0 0.0
  %1222 = vmatprep.mubr.f32.mxu0 0.0
  %1223 = vmatmul.mubr.f32.gmra.mrb[0].mxu0 %v1133
  %v1224 = vpop.f32.mrb[0].mxu0
  %v1225 = vadd.f32 %v1156, %v1224
  %v1226 = vpop.f32.mrb[0].mxu0
  %1227 = vmatprep.mubr.f32.mxu0 0.0
  %1228 = vmatmul.mubr.f32.gmra.mrb[0].mxu0 %v1134
  %v1229 = vpop.f32.mrb[0].mxu0
  %v1230 = vadd.f32 %v1156, %v1229
  %v1231 = vpop.f32.mrb[0].mxu0
  %1232 = vdwg.mxu0
  %v1233 = vadd.f32 %v1023, %v1225
  %v1234 = vadd.f32 %v1024, %v1230
  %v1235 = vld [vmem:[%s14] sm:$0x1]
  %v1236 = vld [vmem:[%s15] sm:$0x1]
  %v1237 = vsel %vm57, %v1233, 0.0
  %1238 = vadd.xlane.f32.xlu0 %v1237
  %v1239 = vpop.xlane.xlu0 %1238
  %v1240 = vsel %vm57, %v1234, 0.0
  %1241 = vadd.xlane.f32.xlu0 %v1240
  %v1242 = vpop.xlane.xlu0 %1241
  %v1243 = vmul.f32 %v1239, %v64
  %v1244 = vmul.f32 %v1242, %v64
  %v1245 = vsub.f32 %v1233, %v1243
  %v1246 = vsub.f32 %v1234, %v1244
  %v1247 = vmul.f32 %v1245, %v1245
  %v1248 = vmul.f32 %v1246, %v1246
  %v1249 = vsel %vm57, %v1247, 0.0
  %1250 = vadd.xlane.f32.xlu0 %v1249
  %v1251 = vpop.xlane.xlu0 %1250
  %v1252 = vsel %vm57, %v1248, 0.0
  %1253 = vadd.xlane.f32.xlu0 %v1252
  %v1254 = vpop.xlane.xlu0 %1253
  %v1255 = vmul.f32 %v1251, %v64
  %v1256 = vmul.f32 %v1254, %v64
  %v1257 = vadd.f32 %v1255, 1e-05
  %v1258 = vadd.f32 %v1256, 1e-05
  %v1259 = vrsqrt.pop %v1257
  %v1260 = vrsqrt.pop %v1258
  %v1261 = vmul.f32 %v1245, %v1259
  %v1262 = vmul.f32 %v1246, %v1260
  %v1264 = vlaneseq
  %v1265 = vshrl.u32 %v1264, 7
  %v1266 = vsub.s32 0, %v1265
  %v1267 = vrot.slane %v1235, %v1266
  %v1269 = vmul.f32 %v1261, %v1267
  %v1270 = vmul.f32 %v1262, %v1267
  %v1272 = vlaneseq
  %v1273 = vshrl.u32 %v1272, 7
  %v1274 = vsub.s32 0, %v1273
  %v1275 = vrot.slane %v1236, %v1274
  %v1277 = vadd.f32 %v1269, %v1275
  %v1278 = vadd.f32 %v1270, %v1275
  %1279 = vst.msk [vmem:[%s16] sm:$0xff] %vm57, %v1277
  %1280 = vst.msk [vmem:[%s16 + $0x8] sm:$0xff] %vm57, %v1278
  // Predicated region
  $region66: #{custom_model_forward.3} parent=0 // pred_check
    _
  $region67: #{custom_model_forward.3} parent=0 // pred_check_branch
    %1282 = sbr.rel (0) target = $region69
  $region68: #{custom_model_forward.3} parent=0 // pred_region
    _
  $region69: #{custom_model_forward.3} parent=0 // pred_fallthru
    _
  // Predicated region
  $region70: #{custom_model_forward.3} parent=0 // pred_check
    _
  $region71: #{custom_model_forward.3} parent=0 // pred_check_branch
    %1284 = sbr.rel (0) target = $region73
  $region72: #{custom_model_forward.3} parent=0 // pred_region
    _
  $region73: #{custom_model_forward.3} parent=0 // pred_fallthru
    _

// kernel: custom_model_forward.4
$region0: #{custom_model_forward.4}
  #allocation0 [shape = 'u32[]', space=smem, size = 0x4, offset = 0x4, fixed_abs, tag = 'smem constant byte address 0x4 - core index']
  #allocation1 [shape = 'u32[144,128]{1,0:T(1,128)}', space=vmem, size = 0x12000, scoped, tag = 'internal scratch']
  #allocation2 [shape = 'f32[16,32]{1,0:T(8,128)}', space=vmem, size = 0x2000, scoped, tag = 'scratch operand']
  %s0 = inlined_call_operand.smem [shape: u32[30], index: -1, kind: input, shape index: {}]
  %s1 = sld [smem:[%s0]]
  %s2 = scalar_lea.smem %s0, 1
  %s3 = sld [smem:[%s2]]
  %s4 = scalar_lea.smem %s0, 2
  %s5 = sld [smem:[%s4]]
  %s6 = scalar_lea.smem %s0, 3
  %s7 = sld [smem:[%s6]]
  %s8 = scalar_lea.smem %s0, 4
  %s9 = sld [smem:[%s8]]
  %s10 = scalar_lea.smem %s0, 5
  %s11 = sld [smem:[%s10]]
  %s12 = scalar_lea.smem %s0, 6
  %s13 = sld [smem:[%s12]]
  %s14 = scalar_lea.smem %s0, 7
  %s15 = sld [smem:[%s14]]
  %s16 = scalar_lea.smem %s0, 8
  %s17 = sld [smem:[%s16]]
  %s18 = scalar_lea.smem %s0, 9
  %s19 = sld [smem:[%s18]]
  %s20 = scalar_lea.smem %s0, 10
  %s21 = sld [smem:[%s20]]
  %s22 = scalar_lea.smem %s0, 11
  %s23 = sld [smem:[%s22]]
  %s24 = scalar_lea.smem %s0, 12
  %s25 = sld [smem:[%s24]]
  %s26 = scalar_lea.smem %s0, 13
  %s27 = sld [smem:[%s26]]
  %s28 = scalar_lea.smem %s0, 14
  %s29 = sld [smem:[%s28]]
  %s30 = scalar_lea.smem %s0, 15
  %s31 = sld [smem:[%s30]]
  %s32 = scalar_lea.smem %s0, 16
  %s33 = sld [smem:[%s32]]
  %s34 = scalar_lea.smem %s0, 17
  %s35 = sld [smem:[%s34]]
  %s36 = scalar_lea.smem %s0, 18
  %s37 = sld [smem:[%s36]]
  %s38 = scalar_lea.smem %s0, 19
  %s39 = sld [smem:[%s38]]
  %s40 = scalar_lea.smem %s0, 20
  %s41 = sld [smem:[%s40]]
  %s42 = scalar_lea.smem %s0, 21
  %s43 = sld [smem:[%s42]]
  %s44 = scalar_lea.smem %s0, 22
  %s45 = sld [smem:[%s44]]
  %s46 = scalar_lea.smem %s0, 23
  %s47 = sld [smem:[%s46]]
  %s48 = scalar_lea.smem %s0, 24
  %s49 = sld [smem:[%s48]]
  %s50 = scalar_lea.smem %s0, 25
  %s51 = sld [smem:[%s50]]
  %s52 = scalar_lea.smem %s0, 26
  %s53 = sld [smem:[%s52]]
  %s54 = scalar_lea.smem %s0, 27
  %s55 = sld [smem:[%s54]]
  %s56 = scalar_lea.smem %s0, 28
  %s57 = sld [smem:[%s56]]
  %s58 = scalar_lea.smem %s0, 29
  %s59 = sld [smem:[%s58]]
  %60 = xla_tuple %s57, %s59
  %s61 = sld [smem:[#allocation0]]
  $region130: #{custom_model_forward.4} parent=0
    _
  %s63 = ssub.s32 1, %s61
  %s64 = scalar_select 0, %s63, %s61
  $region1: #{custom_model_forward.4} parent=0
    #allocation3 [shape = 'u8[8192]{0}', space=vmem, size = 0x2000, scoped, tag = 'output window, operand 0, single buffered']
    #allocation4 [shape = 's32[1]{0}', space=sflag, size = 0x4, scoped, tag = 'scoped memory for custom_model_forward.4']
    #allocation5 [shape = 'u8[512]{0}', space=vmem, size = 0x400, scoped, tag = 'output window, operand 1, single buffered']
    #allocation6 [shape = 's32[1]{0}', space=sflag, size = 0x4, scoped, tag = 'scoped memory for custom_model_forward.4']
    %65 = vsyncpa [#allocation4], 0
    %66 = vsyncpa [#allocation6], 0
    // Predicated region
    $region2: #{custom_model_forward.4} parent=1 // pred_check
      _
    $region3: #{custom_model_forward.4} parent=1 // pred_check_branch
      %68 = sbr.rel (0) target = $region5
    $region4: #{custom_model_forward.4} parent=1 // pred_region
      _
    $region5: #{custom_model_forward.4} parent=1 // pred_fallthru
      _
    // Predicated region
    $region6: #{custom_model_forward.4} parent=1 // pred_check
      _
    $region7: #{custom_model_forward.4} parent=1 // pred_check_branch
      %70 = sbr.rel (0) target = $region9
    $region8: #{custom_model_forward.4} parent=1 // pred_region
      _
    $region9: #{custom_model_forward.4} parent=1 // pred_fallthru
      _
    // Predicated region
    $region10: #{custom_model_forward.4} parent=1 // pred_check
      _
    $region11: #{custom_model_forward.4} parent=1 // pred_check_branch
      %72 = sbr.rel (0) target = $region13
    $region12: #{custom_model_forward.4} parent=1 // pred_region
      _
    $region13: #{custom_model_forward.4} parent=1 // pred_fallthru
      _
    // Predicated region
    $region14: #{custom_model_forward.4} parent=1 // pred_check
      _
    $region15: #{custom_model_forward.4} parent=1 // pred_check_branch
      %74 = sbr.rel (0) target = $region17
    $region16: #{custom_model_forward.4} parent=1 // pred_region
      _
    $region17: #{custom_model_forward.4} parent=1 // pred_fallthru
      _
    // Predicated region
    $region18: #{custom_model_forward.4} parent=1 // pred_check
      _
    $region19: #{custom_model_forward.4} parent=1 // pred_check_branch
      %76 = sbr.rel (0) target = $region21
    $region20: #{custom_model_forward.4} parent=1 // pred_region
      _
    $region21: #{custom_model_forward.4} parent=1 // pred_fallthru
      _
    // Predicated region
    $region22: #{custom_model_forward.4} parent=1 // pred_check
      _
    $region23: #{custom_model_forward.4} parent=1 // pred_check_branch
      %78 = sbr.rel (0) target = $region25
    $region24: #{custom_model_forward.4} parent=1 // pred_region
      _
    $region25: #{custom_model_forward.4} parent=1 // pred_fallthru
      _
    // Predicated region
    $region26: #{custom_model_forward.4} parent=1 // pred_check
      _
    $region27: #{custom_model_forward.4} parent=1 // pred_check_branch
      %80 = sbr.rel (0) target = $region29
    $region28: #{custom_model_forward.4} parent=1 // pred_region
      _
    $region29: #{custom_model_forward.4} parent=1 // pred_fallthru
      _
    // Predicated region
    $region30: #{custom_model_forward.4} parent=1 // pred_check
      _
    $region31: #{custom_model_forward.4} parent=1 // pred_check_branch
      %82 = sbr.rel (0) target = $region33
    $region32: #{custom_model_forward.4} parent=1 // pred_region
      _
    $region33: #{custom_model_forward.4} parent=1 // pred_fallthru
      _
    // Predicated region
    $region34: #{custom_model_forward.4} parent=1 // pred_check
      _
    $region35: #{custom_model_forward.4} parent=1 // pred_check_branch
      %84 = sbr.rel (0) target = $region37
    $region36: #{custom_model_forward.4} parent=1 // pred_region
      _
    $region37: #{custom_model_forward.4} parent=1 // pred_fallthru
      _
    // Predicated region
    $region38: #{custom_model_forward.4} parent=1 // pred_check
      _
    $region39: #{custom_model_forward.4} parent=1 // pred_check_branch
      %86 = sbr.rel (0) target = $region41
    $region40: #{custom_model_forward.4} parent=1 // pred_region
      _
    $region41: #{custom_model_forward.4} parent=1 // pred_fallthru
      _
    // Predicated region
    $region42: #{custom_model_forward.4} parent=1 // pred_check
      _
    $region43: #{custom_model_forward.4} parent=1 // pred_check_branch
      %88 = sbr.rel (0) target = $region45
    $region44: #{custom_model_forward.4} parent=1 // pred_region
      _
    $region45: #{custom_model_forward.4} parent=1 // pred_fallthru
      _
    // Predicated region
    $region46: #{custom_model_forward.4} parent=1 // pred_check
      _
    $region47: #{custom_model_forward.4} parent=1 // pred_check_branch
      %90 = sbr.rel (0) target = $region49
    $region48: #{custom_model_forward.4} parent=1 // pred_region
      _
    $region49: #{custom_model_forward.4} parent=1 // pred_fallthru
      _
    // Predicated region
    $region50: #{custom_model_forward.4} parent=1 // pred_check
      _
    $region51: #{custom_model_forward.4} parent=1 // pred_check_branch
      %92 = sbr.rel (0) target = $region53
    $region52: #{custom_model_forward.4} parent=1 // pred_region
      _
    $region53: #{custom_model_forward.4} parent=1 // pred_fallthru
      _
    // Predicated region
    $region54: #{custom_model_forward.4} parent=1 // pred_check
      _
    $region55: #{custom_model_forward.4} parent=1 // pred_check_branch
      %94 = sbr.rel (0) target = $region57
    $region56: #{custom_model_forward.4} parent=1 // pred_region
      _
    $region57: #{custom_model_forward.4} parent=1 // pred_fallthru
      _
    // Predicated region
    $region58: #{custom_model_forward.4} parent=1 // pred_check
      _
    $region59: #{custom_model_forward.4} parent=1 // pred_check_branch
      %96 = sbr.rel (0) target = $region61
    $region60: #{custom_model_forward.4} parent=1 // pred_region
      _
    $region61: #{custom_model_forward.4} parent=1 // pred_fallthru
      _
    // Predicated region
    $region62: #{custom_model_forward.4} parent=1 // pred_check
      _
    $region63: #{custom_model_forward.4} parent=1 // pred_check_branch
      %98 = sbr.rel (0) target = $region65
    $region64: #{custom_model_forward.4} parent=1 // pred_region
      _
    $region65: #{custom_model_forward.4} parent=1 // pred_fallthru
      _
    // Predicated region
    $region66: #{custom_model_forward.4} parent=1 // pred_check
      _
    $region67: #{custom_model_forward.4} parent=1 // pred_check_branch
      %100 = sbr.rel (0) target = $region69
    $region68: #{custom_model_forward.4} parent=1 // pred_region
      _
    $region69: #{custom_model_forward.4} parent=1 // pred_fallthru
      _
    // Predicated region
    $region70: #{custom_model_forward.4} parent=1 // pred_check
      _
    $region71: #{custom_model_forward.4} parent=1 // pred_check_branch
      %102 = sbr.rel (0) target = $region73
    $region72: #{custom_model_forward.4} parent=1 // pred_region
      _
    $region73: #{custom_model_forward.4} parent=1 // pred_fallthru
      _
    // Predicated region
    $region74: #{custom_model_forward.4} parent=1 // pred_check
      _
    $region75: #{custom_model_forward.4} parent=1 // pred_check_branch
      %104 = sbr.rel (0) target = $region77
    $region76: #{custom_model_forward.4} parent=1 // pred_region
      _
    $region77: #{custom_model_forward.4} parent=1 // pred_fallthru
      _
    // Predicated region
    $region78: #{custom_model_forward.4} parent=1 // pred_check
      _
    $region79: #{custom_model_forward.4} parent=1 // pred_check_branch
      %106 = sbr.rel (0) target = $region81
    $region80: #{custom_model_forward.4} parent=1 // pred_region
      _
    $region81: #{custom_model_forward.4} parent=1 // pred_fallthru
      _
    // Predicated region
    $region82: #{custom_model_forward.4} parent=1 // pred_check
      _
    $region83: #{custom_model_forward.4} parent=1 // pred_check_branch
      %108 = sbr.rel (0) target = $region85
    $region84: #{custom_model_forward.4} parent=1 // pred_region
      _
    $region85: #{custom_model_forward.4} parent=1 // pred_fallthru
      _
    // Predicated region
    $region86: #{custom_model_forward.4} parent=1 // pred_check
      _
    $region87: #{custom_model_forward.4} parent=1 // pred_check_branch
      %110 = sbr.rel (0) target = $region89
    $region88: #{custom_model_forward.4} parent=1 // pred_region
      _
    $region89: #{custom_model_forward.4} parent=1 // pred_fallthru
      _
    // Predicated region
    $region90: #{custom_model_forward.4} parent=1 // pred_check
      _
    $region91: #{custom_model_forward.4} parent=1 // pred_check_branch
      %112 = sbr.rel (0) target = $region93
    $region92: #{custom_model_forward.4} parent=1 // pred_region
      _
    $region93: #{custom_model_forward.4} parent=1 // pred_fallthru
      _
    // Predicated region
    $region94: #{custom_model_forward.4} parent=1 // pred_check
      _
    $region95: #{custom_model_forward.4} parent=1 // pred_check_branch
      %114 = sbr.rel (0) target = $region97
    $region96: #{custom_model_forward.4} parent=1 // pred_region
      _
    $region97: #{custom_model_forward.4} parent=1 // pred_fallthru
      _
    // Predicated region
    $region98: #{custom_model_forward.4} parent=1 // pred_check
      _
    $region99: #{custom_model_forward.4} parent=1 // pred_check_branch
      %116 = sbr.rel (0) target = $region101
    $region100: #{custom_model_forward.4} parent=1 // pred_region
      _
    $region101: #{custom_model_forward.4} parent=1 // pred_fallthru
      _
    // Predicated region
    $region102: #{custom_model_forward.4} parent=1 // pred_check
      _
    $region103: #{custom_model_forward.4} parent=1 // pred_check_branch
      %118 = sbr.rel (0) target = $region105
    $region104: #{custom_model_forward.4} parent=1 // pred_region
      _
    $region105: #{custom_model_forward.4} parent=1 // pred_fallthru
      _
    // Predicated region
    $region106: #{custom_model_forward.4} parent=1 // pred_check
      _
    $region107: #{custom_model_forward.4} parent=1 // pred_check_branch
      %120 = sbr.rel (0) target = $region109
    $region108: #{custom_model_forward.4} parent=1 // pred_region
      _
    $region109: #{custom_model_forward.4} parent=1 // pred_fallthru
      _
    // Predicated region
    $region110: #{custom_model_forward.4} parent=1 // pred_check
      _
    $region111: #{custom_model_forward.4} parent=1 // pred_check_branch
      %122 = sbr.rel (0) target = $region113
    $region112: #{custom_model_forward.4} parent=1 // pred_region
      _
    $region113: #{custom_model_forward.4} parent=1 // pred_fallthru
      _
    %v123 = vld [vmem:[%s1] sm:$0xff]
    %v124 = vld [vmem:[%s1 + $0x8] sm:$0xff]
    %v125 = vld [vmem:[%s9] sm:$0x1]
    %v126 = vld [vmem:[%s11] sm:$0x1]
    %vm127 = vcmask 261120
    %v128 = vsel %vm127, %v123, 0.0
    %129 = vadd.xlane.f32.xlu0 %v128
    %v130 = vpop.xlane.xlu0 %129
    %v131 = vsel %vm127, %v124, 0.0
    %132 = vadd.xlane.f32.xlu0 %v131
    %v133 = vpop.xlane.xlu0 %132
    %v134 = vrcp.pop 32.0
    %v135 = vmul.f32 %v130, %v134
    %v136 = vmul.f32 %v133, %v134
    %v137 = vsub.f32 %v123, %v135
    %v138 = vsub.f32 %v124, %v136
    %v139 = vmul.f32 %v137, %v137
    %v140 = vmul.f32 %v138, %v138
    %v141 = vsel %vm127, %v139, 0.0
    %142 = vadd.xlane.f32.xlu0 %v141
    %v143 = vpop.xlane.xlu0 %142
    %v144 = vsel %vm127, %v140, 0.0
    %145 = vadd.xlane.f32.xlu0 %v144
    %v146 = vpop.xlane.xlu0 %145
    %v147 = vmul.f32 %v143, %v134
    %v148 = vmul.f32 %v146, %v134
    %v149 = vadd.f32 %v147, 1e-05
    %v150 = vadd.f32 %v148, 1e-05
    %v151 = vrsqrt.pop %v149
    %v152 = vrsqrt.pop %v150
    %v153 = vmul.f32 %v137, %v151
    %v154 = vmul.f32 %v138, %v152
    %v156 = vlaneseq
    %v157 = vshrl.u32 %v156, 7
    %v158 = vsub.s32 0, %v157
    %v159 = vrot.slane %v125, %v158
    %v161 = vmul.f32 %v153, %v159
    %v162 = vmul.f32 %v154, %v159
    %v164 = vlaneseq
    %v165 = vshrl.u32 %v164, 7
    %v166 = vsub.s32 0, %v165
    %v167 = vrot.slane %v126, %v166
    %v169 = vadd.f32 %v161, %v167
    %v170 = vadd.f32 %v162, %v167
    %v171 = vld [vmem:[%s13] sm:$0xff]
    %v172 = vld [vmem:[%s13 + $0x8] sm:$0xff]
    %v173 = vld [vmem:[%s13 + $0x10] sm:$0xff]
    %v174 = vld [vmem:[%s13 + $0x18] sm:$0xff]
    %v175 = vld [vmem:[%s15] sm:$0x1]
    %v177 = vlaneseq
    %v178 = vshrl.u32 %v177, 7
    %v179 = vsub.s32 0, %v178
    %v180 = vrot.slane %v175, %v179
    %v183 = vsel %vm127, %v169, 0
    %v186 = vsel %vm127, %v170, 0
    %188 = vmatprep.subr.mxu0 0.0
    %189 = vmatpush1.msra.mxu0 %v171
    %190 = vmatprep.subr.mxu0 0.0
    %191 = vmatpush1.msra.mxu0 %v172
    %192 = vmatprep.subr.mxu0 0.0
    %193 = vmatpush1.msra.mxu0 %v173
    %194 = vmatprep.subr.mxu0 0.0
    %195 = vmatpush1.msra.mxu0 %v174
    %196 = vmatprep.subr.mxu0 0.0
    %197 = vmatpush1.msra.mxu0 0.0
    %198 = vmatprep.subr.mxu0 0.0
    %199 = vmatpush1.msra.mxu0 0.0
    %200 = vmatprep.subr.mxu0 0.0
    %201 = vmatpush1.msra.mxu0 0.0
    %202 = vmatprep.subr.mxu0 0.0
    %203 = vmatpush1.msra.mxu0 0.0
    %204 = vmatprep.subr.mxu0 0.0
    %205 = vmatpush1.msra.mxu0 0.0
    %206 = vmatprep.subr.mxu0 0.0
    %207 = vmatpush1.msra.mxu0 0.0
    %208 = vmatprep.subr.mxu0 0.0
    %209 = vmatpush1.msra.mxu0 0.0
    %210 = vmatprep.subr.mxu0 0.0
    %211 = vmatpush1.msra.mxu0 0.0
    %212 = vmatprep.subr.mxu0 0.0
    %213 = vmatpush1.msra.mxu0 0.0
    %214 = vmatprep.subr.mxu0 0.0
    %215 = vmatpush1.msra.mxu0 0.0
    %216 = vmatprep.subr.mxu0 0.0
    %217 = vmatpush1.msra.mxu0 0.0
    %218 = vmatprep.subr.mxu0 0.0
    %219 = vmatpush1.msra.mxu0 0.0
    %220 = vmatprep.subr.mxu0 0.0
    %221 = vmatpush1.msra.mxu0 0.0
    %222 = vmatprep.subr.mxu0 0.0
    %223 = vmatpush1.msra.mxu0 0.0
    %224 = vmatprep.subr.mxu0 0.0
    %225 = vmatpush1.msra.mxu0 0.0
    %226 = vmatprep.subr.mxu0 0.0
    %227 = vmatpush1.msra.mxu0 0.0
    %228 = vmatprep.subr.mxu0 0.0
    %229 = vmatpush1.msra.mxu0 0.0
    %230 = vmatprep.subr.mxu0 0.0
    %231 = vmatpush1.msra.mxu0 0.0
    %232 = vmatprep.subr.mxu0 0.0
    %233 = vmatpush1.msra.mxu0 0.0
    %234 = vmatprep.subr.mxu0 0.0
    %235 = vmatpush1.msra.mxu0 0.0
    %236 = vmatprep.subr.mxu0 0.0
    %237 = vmatpush1.msra.mxu0 0.0
    %238 = vmatprep.subr.mxu0 0.0
    %239 = vmatpush1.msra.mxu0 0.0
    %240 = vmatprep.subr.mxu0 0.0
    %241 = vmatpush1.msra.mxu0 0.0
    %242 = vmatprep.subr.mxu0 0.0
    %243 = vmatpush1.msra.mxu0 0.0
    %244 = vmatprep.subr.mxu0 0.0
    %245 = vmatpush1.msra.mxu0 0.0
    %246 = vmatprep.subr.mxu0 0.0
    %247 = vmatpush1.msra.mxu0 0.0
    %248 = vmatprep.subr.mxu0 0.0
    %249 = vmatpush1.msra.mxu0 0.0
    %250 = vmatprep.subr.mxu0 0.0
    %251 = vmatpush1.msra.mxu0 0.0
    %252 = vmatprep.mubr.f32.mxu0 0.0
    %253 = vmatmul.mubr.f32.gmra.mrb[0].mxu0 %v183
    %v254 = vpop.f32.mrb[0].mxu0
    %v255 = vadd.f32 %v180, %v254
    %v256 = vpop.f32.mrb[0].mxu0
    %257 = vmatprep.mubr.f32.mxu0 0.0
    %258 = vmatmul.mubr.f32.gmra.mrb[0].mxu0 %v186
    %v259 = vpop.f32.mrb[0].mxu0
    %v260 = vadd.f32 %v180, %v259
    %v261 = vpop.f32.mrb[0].mxu0
    %262 = vdwg.mxu0
    %v263 = vld [vmem:[%s3] sm:$0x3]
    %v264 = vlaneseq
    %v265 = vshrl.u32 %v264, 7
    %v266 = vlaneseq
    %v267 = vand.u32 %v266, 127
    %vm268 = vcmp.le.s32.totalorder %v267, %v265
    %vm269 = vcmp.gt.f32.partialorder %v263, 0.5
    %v270 = vsel %vm269, 1, 0
    %v271 = vlaneseq
    %v272 = vshrl.u32 %v271, 7
    %v273 = vsub.s32 0, %v272
    %v274 = vrot.slane %v270, %v273
    %vm275 = vcmp.eq.s32.totalorder %v274, 1
    %vm276 = vmand %vm268, %vm275
    %v277 = vsel %vm276, 0.0, -1e+09
    %v278 = vlaneseq
    %v279 = vshrl.u32 %v278, 7
    %v280 = vsub.s32 1, %v279
    %v281 = vrot.slane %v270, %v280
    %vm282 = vcmp.eq.s32.totalorder %v281, 1
    %vm283 = vmand %vm268, %vm282
    %v284 = vsel %vm283, 0.0, -1e+09
    %v285 = vld [vmem:[%s17] sm:$0xff]
    %v286 = vld [vmem:[%s17 + $0x8] sm:$0xff]
    %v287 = vld [vmem:[%s17 + $0x10] sm:$0xff]
    %v288 = vld [vmem:[%s17 + $0x18] sm:$0xff]
    %v289 = vld [vmem:[%s19] sm:$0x1]
    %291 = vrot.lane.b32.xlu0 %v255, 96
    %v292 = vpop.permute.xlu0 %291
    %vm293 = vcmask 130048
    %v294 = vsel %vm293, %v255, 0
    %v296 = vsel %vm293, %v292, 0
    %298 = vmatprep.subr.mxu0 0.0
    %299 = vmatpush1.xpose.msra.mxu0 %v296
    %300 = vmatprep.subr.mxu0 0.0
    %301 = vmatpush1.xpose.msra.mxu0 0.0
    %302 = vmatprep.subr.mxu0 0.0
    %303 = vmatpush1.xpose.msra.mxu0 0.0
    %304 = vmatprep.subr.mxu0 0.0
    %305 = vmatpush1.xpose.msra.mxu0 0.0
    %306 = vmatprep.subr.mxu0 0.0
    %307 = vmatpush1.xpose.msra.mxu0 0.0
    %308 = vmatprep.subr.mxu0 0.0
    %309 = vmatpush1.xpose.msra.mxu0 0.0
    %310 = vmatprep.subr.mxu0 0.0
    %311 = vmatpush1.xpose.msra.mxu0 0.0
    %312 = vmatprep.subr.mxu0 0.0
    %313 = vmatpush1.xpose.msra.mxu0 0.0
    %314 = vmatprep.subr.mxu0 0.0
    %315 = vmatpush1.xpose.msra.mxu0 0.0
    %316 = vmatprep.subr.mxu0 0.0
    %317 = vmatpush1.xpose.msra.mxu0 0.0
    %318 = vmatprep.subr.mxu0 0.0
    %319 = vmatpush1.xpose.msra.mxu0 0.0
    %320 = vmatprep.subr.mxu0 0.0
    %321 = vmatpush1.xpose.msra.mxu0 0.0
    %322 = vmatprep.subr.mxu0 0.0
    %323 = vmatpush1.xpose.msra.mxu0 0.0
    %324 = vmatprep.subr.mxu0 0.0
    %325 = vmatpush1.xpose.msra.mxu0 0.0
    %326 = vmatprep.subr.mxu0 0.0
    %327 = vmatpush1.xpose.msra.mxu0 0.0
    %328 = vmatprep.subr.mxu0 0.0
    %329 = vmatpush1.xpose.msra.mxu0 0.0
    %330 = vmatprep.subr.mxu0 0.0
    %331 = vmatpush1.xpose.msra.mxu0 0.0
    %332 = vmatprep.subr.mxu0 0.0
    %333 = vmatpush1.xpose.msra.mxu0 0.0
    %334 = vmatprep.subr.mxu0 0.0
    %335 = vmatpush1.xpose.msra.mxu0 0.0
    %336 = vmatprep.subr.mxu0 0.0
    %337 = vmatpush1.xpose.msra.mxu0 0.0
    %338 = vmatprep.subr.mxu0 0.0
    %339 = vmatpush1.xpose.msra.mxu0 0.0
    %340 = vmatprep.subr.mxu0 0.0
    %341 = vmatpush1.xpose.msra.mxu0 0.0
    %342 = vmatprep.subr.mxu0 0.0
    %343 = vmatpush1.xpose.msra.mxu0 0.0
    %344 = vmatprep.subr.mxu0 0.0
    %345 = vmatpush1.xpose.msra.mxu0 0.0
    %346 = vmatprep.subr.mxu0 0.0
    %347 = vmatpush1.xpose.msra.mxu0 0.0
    %348 = vmatprep.subr.mxu0 0.0
    %349 = vmatpush1.xpose.msra.mxu0 0.0
    %350 = vmatprep.subr.mxu0 0.0
    %351 = vmatpush1.xpose.msra.mxu0 0.0
    %352 = vmatprep.subr.mxu0 0.0
    %353 = vmatpush1.xpose.msra.mxu0 0.0
    %354 = vmatprep.subr.mxu0 0.0
    %355 = vmatpush1.xpose.msra.mxu0 0.0
    %356 = vmatprep.subr.mxu0 0.0
    %357 = vmatpush1.xpose.msra.mxu0 0.0
    %358 = vmatprep.subr.mxu0 0.0
    %359 = vmatpush1.xpose.msra.mxu0 0.0
    %360 = vmatprep.subr.mxu0 0.0
    %361 = vmatpush1.xpose.msra.mxu0 0.0
    %362 = vmatprep.mubr.f32.mxu0 0.0
    %363 = vmatmul.mubr.f32.gmra.mrb[0].mxu0 %v294
    %v364 = vpop.f32.mrb[0].mxu0
    %v365 = vadd.f32 0.0, %v364
    %v366 = vpop.f32.mrb[0].mxu0
    %367 = vdwg.mxu0
    %v368 = vmul.f32 %v365, 0.25
    %v369 = vadd.f32 %v368, %v277
    %vm370 = vcmask 64512
    %v371 = vsel %vm370, %v369, -inf
    %372 = vmax.xlane.f32.xlu0 %v371
    %v373 = vpop.xlane.xlu0 %372
    %v374 = vsub.f32 %v369, %v373
    %v375 = vmul.f32 %v374, 1.442695
    %v376 = vpow.pop %v375
    %v377 = vsel %vm370, %v376, 0.0
    %378 = vadd.xlane.f32.xlu0 %v377
    %v379 = vpop.xlane.xlu0 %378
    %v380 = vrcp.pop %v379
    %v381 = vmul.f32 %v376, %v380
    %382 = vrot.lane.b32.xlu0 %v255, 64
    %v383 = vpop.permute.xlu0 %382
    %v386 = vsel %vm370, %v381, 0
    %388 = vmatprep.subr.mxu0 0.0
    %389 = vmatpush1.msra.mxu0 %v383
    %390 = vmatprep.subr.mxu0 0.0
    %391 = vmatpush1.msra.mxu0 0.0
    %392 = vmatprep.subr.mxu0 0.0
    %393 = vmatpush1.msra.mxu0 0.0
    %394 = vmatprep.subr.mxu0 0.0
    %395 = vmatpush1.msra.mxu0 0.0
    %396 = vmatprep.subr.mxu0 0.0
    %397 = vmatpush1.msra.mxu0 0.0
    %398 = vmatprep.subr.mxu0 0.0
    %399 = vmatpush1.msra.mxu0 0.0
    %400 = vmatprep.subr.mxu0 0.0
    %401 = vmatpush1.msra.mxu0 0.0
    %402 = vmatprep.subr.mxu0 0.0
    %403 = vmatpush1.msra.mxu0 0.0
    %404 = vmatprep.subr.mxu0 0.0
    %405 = vmatpush1.msra.mxu0 0.0
    %406 = vmatprep.subr.mxu0 0.0
    %407 = vmatpush1.msra.mxu0 0.0
    %408 = vmatprep.subr.mxu0 0.0
    %409 = vmatpush1.msra.mxu0 0.0
    %410 = vmatprep.subr.mxu0 0.0
    %411 = vmatpush1.msra.mxu0 0.0
    %412 = vmatprep.subr.mxu0 0.0
    %413 = vmatpush1.msra.mxu0 0.0
    %414 = vmatprep.subr.mxu0 0.0
    %415 = vmatpush1.msra.mxu0 0.0
    %416 = vmatprep.subr.mxu0 0.0
    %417 = vmatpush1.msra.mxu0 0.0
    %418 = vmatprep.subr.mxu0 0.0
    %419 = vmatpush1.msra.mxu0 0.0
    %420 = vmatprep.subr.mxu0 0.0
    %421 = vmatpush1.msra.mxu0 0.0
    %422 = vmatprep.subr.mxu0 0.0
    %423 = vmatpush1.msra.mxu0 0.0
    %424 = vmatprep.subr.mxu0 0.0
    %425 = vmatpush1.msra.mxu0 0.0
    %426 = vmatprep.subr.mxu0 0.0
    %427 = vmatpush1.msra.mxu0 0.0
    %428 = vmatprep.subr.mxu0 0.0
    %429 = vmatpush1.msra.mxu0 0.0
    %430 = vmatprep.subr.mxu0 0.0
    %431 = vmatpush1.msra.mxu0 0.0
    %432 = vmatprep.subr.mxu0 0.0
    %433 = vmatpush1.msra.mxu0 0.0
    %434 = vmatprep.subr.mxu0 0.0
    %435 = vmatpush1.msra.mxu0 0.0
    %436 = vmatprep.subr.mxu0 0.0
    %437 = vmatpush1.msra.mxu0 0.0
    %438 = vmatprep.subr.mxu0 0.0
    %439 = vmatpush1.msra.mxu0 0.0
    %440 = vmatprep.subr.mxu0 0.0
    %441 = vmatpush1.msra.mxu0 0.0
    %442 = vmatprep.subr.mxu0 0.0
    %443 = vmatpush1.msra.mxu0 0.0
    %444 = vmatprep.subr.mxu0 0.0
    %445 = vmatpush1.msra.mxu0 0.0
    %446 = vmatprep.subr.mxu0 0.0
    %447 = vmatpush1.msra.mxu0 0.0
    %448 = vmatprep.subr.mxu0 0.0
    %449 = vmatpush1.msra.mxu0 0.0
    %450 = vmatprep.subr.mxu0 0.0
    %451 = vmatpush1.msra.mxu0 0.0
    %452 = vmatprep.mubr.f32.mxu0 0.0
    %453 = vmatmul.mubr.f32.gmra.mrb[0].mxu0 %v386
    %v454 = vpop.f32.mrb[0].mxu0
    %v455 = vadd.f32 0.0, %v454
    %v456 = vpop.f32.mrb[0].mxu0
    %457 = vdwg.mxu0
    %458 = vst.msk [vmem:[#allocation2] sm:$0xff] %vm293, %v455
    %459 = vrot.lane.b32.xlu0 %v255, 112
    %v460 = vpop.permute.xlu0 %459
    %461 = vrot.lane.b32.xlu0 %v255, 80
    %v462 = vpop.permute.xlu0 %461
    %v463 = vsel %vm293, %v460, 0
    %v465 = vsel %vm293, %v462, 0
    %467 = vmatprep.subr.mxu0 0.0
    %468 = vmatpush1.xpose.msra.mxu0 %v465
    %469 = vmatprep.subr.mxu0 0.0
    %470 = vmatpush1.xpose.msra.mxu0 0.0
    %471 = vmatprep.subr.mxu0 0.0
    %472 = vmatpush1.xpose.msra.mxu0 0.0
    %473 = vmatprep.subr.mxu0 0.0
    %474 = vmatpush1.xpose.msra.mxu0 0.0
    %475 = vmatprep.subr.mxu0 0.0
    %476 = vmatpush1.xpose.msra.mxu0 0.0
    %477 = vmatprep.subr.mxu0 0.0
    %478 = vmatpush1.xpose.msra.mxu0 0.0
    %479 = vmatprep.subr.mxu0 0.0
    %480 = vmatpush1.xpose.msra.mxu0 0.0
    %481 = vmatprep.subr.mxu0 0.0
    %482 = vmatpush1.xpose.msra.mxu0 0.0
    %483 = vmatprep.subr.mxu0 0.0
    %484 = vmatpush1.xpose.msra.mxu0 0.0
    %485 = vmatprep.subr.mxu0 0.0
    %486 = vmatpush1.xpose.msra.mxu0 0.0
    %487 = vmatprep.subr.mxu0 0.0
    %488 = vmatpush1.xpose.msra.mxu0 0.0
    %489 = vmatprep.subr.mxu0 0.0
    %490 = vmatpush1.xpose.msra.mxu0 0.0
    %491 = vmatprep.subr.mxu0 0.0
    %492 = vmatpush1.xpose.msra.mxu0 0.0
    %493 = vmatprep.subr.mxu0 0.0
    %494 = vmatpush1.xpose.msra.mxu0 0.0
    %495 = vmatprep.subr.mxu0 0.0
    %496 = vmatpush1.xpose.msra.mxu0 0.0
    %497 = vmatprep.subr.mxu0 0.0
    %498 = vmatpush1.xpose.msra.mxu0 0.0
    %499 = vmatprep.subr.mxu0 0.0
    %500 = vmatpush1.xpose.msra.mxu0 0.0
    %501 = vmatprep.subr.mxu0 0.0
    %502 = vmatpush1.xpose.msra.mxu0 0.0
    %503 = vmatprep.subr.mxu0 0.0
    %504 = vmatpush1.xpose.msra.mxu0 0.0
    %505 = vmatprep.subr.mxu0 0.0
    %506 = vmatpush1.xpose.msra.mxu0 0.0
    %507 = vmatprep.subr.mxu0 0.0
    %508 = vmatpush1.xpose.msra.mxu0 0.0
    %509 = vmatprep.subr.mxu0 0.0
    %510 = vmatpush1.xpose.msra.mxu0 0.0
    %511 = vmatprep.subr.mxu0 0.0
    %512 = vmatpush1.xpose.msra.mxu0 0.0
    %513 = vmatprep.subr.mxu0 0.0
    %514 = vmatpush1.xpose.msra.mxu0 0.0
    %515 = vmatprep.subr.mxu0 0.0
    %516 = vmatpush1.xpose.msra.mxu0 0.0
    %517 = vmatprep.subr.mxu0 0.0
    %518 = vmatpush1.xpose.msra.mxu0 0.0
    %519 = vmatprep.subr.mxu0 0.0
    %520 = vmatpush1.xpose.msra.mxu0 0.0
    %521 = vmatprep.subr.mxu0 0.0
    %522 = vmatpush1.xpose.msra.mxu0 0.0
    %523 = vmatprep.subr.mxu0 0.0
    %524 = vmatpush1.xpose.msra.mxu0 0.0
    %525 = vmatprep.subr.mxu0 0.0
    %526 = vmatpush1.xpose.msra.mxu0 0.0
    %527 = vmatprep.subr.mxu0 0.0
    %528 = vmatpush1.xpose.msra.mxu0 0.0
    %529 = vmatprep.subr.mxu0 0.0
    %530 = vmatpush1.xpose.msra.mxu0 0.0
    %531 = vmatprep.mubr.f32.mxu0 0.0
    %532 = vmatmul.mubr.f32.gmra.mrb[0].mxu0 %v463
    %v533 = vpop.f32.mrb[0].mxu0
    %v534 = vadd.f32 0.0, %v533
    %v535 = vpop.f32.mrb[0].mxu0
    %536 = vdwg.mxu0
    %v537 = vmul.f32 %v534, 0.25
    %v538 = vadd.f32 %v537, %v277
    %v539 = vsel %vm370, %v538, -inf
    %540 = vmax.xlane.f32.xlu0 %v539
    %v541 = vpop.xlane.xlu0 %540
    %v542 = vsub.f32 %v538, %v541
    %v543 = vmul.f32 %v542, 1.442695
    %v544 = vpow.pop %v543
    %v545 = vsel %vm370, %v544, 0.0
    %546 = vadd.xlane.f32.xlu0 %v545
    %v547 = vpop.xlane.xlu0 %546
    %v548 = vrcp.pop %v547
    %v549 = vmul.f32 %v544, %v548
    %550 = vrot.lane.b32.xlu0 %v255, 48
    %v551 = vpop.permute.xlu0 %550
    %v554 = vsel %vm370, %v549, 0
    %556 = vmatprep.subr.mxu0 0.0
    %557 = vmatpush1.msra.mxu0 %v551
    %558 = vmatprep.subr.mxu0 0.0
    %559 = vmatpush1.msra.mxu0 0.0
    %560 = vmatprep.subr.mxu0 0.0
    %561 = vmatpush1.msra.mxu0 0.0
    %562 = vmatprep.subr.mxu0 0.0
    %563 = vmatpush1.msra.mxu0 0.0
    %564 = vmatprep.subr.mxu0 0.0
    %565 = vmatpush1.msra.mxu0 0.0
    %566 = vmatprep.subr.mxu0 0.0
    %567 = vmatpush1.msra.mxu0 0.0
    %568 = vmatprep.subr.mxu0 0.0
    %569 = vmatpush1.msra.mxu0 0.0
    %570 = vmatprep.subr.mxu0 0.0
    %571 = vmatpush1.msra.mxu0 0.0
    %572 = vmatprep.subr.mxu0 0.0
    %573 = vmatpush1.msra.mxu0 0.0
    %574 = vmatprep.subr.mxu0 0.0
    %575 = vmatpush1.msra.mxu0 0.0
    %576 = vmatprep.subr.mxu0 0.0
    %577 = vmatpush1.msra.mxu0 0.0
    %578 = vmatprep.subr.mxu0 0.0
    %579 = vmatpush1.msra.mxu0 0.0
    %580 = vmatprep.subr.mxu0 0.0
    %581 = vmatpush1.msra.mxu0 0.0
    %582 = vmatprep.subr.mxu0 0.0
    %583 = vmatpush1.msra.mxu0 0.0
    %584 = vmatprep.subr.mxu0 0.0
    %585 = vmatpush1.msra.mxu0 0.0
    %586 = vmatprep.subr.mxu0 0.0
    %587 = vmatpush1.msra.mxu0 0.0
    %588 = vmatprep.subr.mxu0 0.0
    %589 = vmatpush1.msra.mxu0 0.0
    %590 = vmatprep.subr.mxu0 0.0
    %591 = vmatpush1.msra.mxu0 0.0
    %592 = vmatprep.subr.mxu0 0.0
    %593 = vmatpush1.msra.mxu0 0.0
    %594 = vmatprep.subr.mxu0 0.0
    %595 = vmatpush1.msra.mxu0 0.0
    %596 = vmatprep.subr.mxu0 0.0
    %597 = vmatpush1.msra.mxu0 0.0
    %598 = vmatprep.subr.mxu0 0.0
    %599 = vmatpush1.msra.mxu0 0.0
    %600 = vmatprep.subr.mxu0 0.0
    %601 = vmatpush1.msra.mxu0 0.0
    %602 = vmatprep.subr.mxu0 0.0
    %603 = vmatpush1.msra.mxu0 0.0
    %604 = vmatprep.subr.mxu0 0.0
    %605 = vmatpush1.msra.mxu0 0.0
    %606 = vmatprep.subr.mxu0 0.0
    %607 = vmatpush1.msra.mxu0 0.0
    %608 = vmatprep.subr.mxu0 0.0
    %609 = vmatpush1.msra.mxu0 0.0
    %610 = vmatprep.subr.mxu0 0.0
    %611 = vmatpush1.msra.mxu0 0.0
    %612 = vmatprep.subr.mxu0 0.0
    %613 = vmatpush1.msra.mxu0 0.0
    %614 = vmatprep.subr.mxu0 0.0
    %615 = vmatpush1.msra.mxu0 0.0
    %616 = vmatprep.subr.mxu0 0.0
    %617 = vmatpush1.msra.mxu0 0.0
    %618 = vmatprep.subr.mxu0 0.0
    %619 = vmatpush1.msra.mxu0 0.0
    %620 = vmatprep.mubr.f32.mxu0 0.0
    %621 = vmatmul.mubr.f32.gmra.mrb[0].mxu0 %v554
    %v622 = vpop.f32.mrb[0].mxu0
    %v623 = vadd.f32 0.0, %v622
    %v624 = vpop.f32.mrb[0].mxu0
    %625 = vdwg.mxu0
    %627 = vrot.lane.b32.xlu0 %v623, 16
    %v628 = vpop.permute.xlu0 %627
    %vm630 = vcmask 261248
    %631 = vst.msk [vmem:[#allocation2] sm:$0xff] %vm630, %v628
    %633 = vrot.lane.b32.xlu0 %v260, 96
    %v634 = vpop.permute.xlu0 %633
    %v635 = vsel %vm293, %v260, 0
    %v637 = vsel %vm293, %v634, 0
    %639 = vmatprep.subr.mxu0 0.0
    %640 = vmatpush1.xpose.msra.mxu0 %v637
    %641 = vmatprep.subr.mxu0 0.0
    %642 = vmatpush1.xpose.msra.mxu0 0.0
    %643 = vmatprep.subr.mxu0 0.0
    %644 = vmatpush1.xpose.msra.mxu0 0.0
    %645 = vmatprep.subr.mxu0 0.0
    %646 = vmatpush1.xpose.msra.mxu0 0.0
    %647 = vmatprep.subr.mxu0 0.0
    %648 = vmatpush1.xpose.msra.mxu0 0.0
    %649 = vmatprep.subr.mxu0 0.0
    %650 = vmatpush1.xpose.msra.mxu0 0.0
    %651 = vmatprep.subr.mxu0 0.0
    %652 = vmatpush1.xpose.msra.mxu0 0.0
    %653 = vmatprep.subr.mxu0 0.0
    %654 = vmatpush1.xpose.msra.mxu0 0.0
    %655 = vmatprep.subr.mxu0 0.0
    %656 = vmatpush1.xpose.msra.mxu0 0.0
    %657 = vmatprep.subr.mxu0 0.0
    %658 = vmatpush1.xpose.msra.mxu0 0.0
    %659 = vmatprep.subr.mxu0 0.0
    %660 = vmatpush1.xpose.msra.mxu0 0.0
    %661 = vmatprep.subr.mxu0 0.0
    %662 = vmatpush1.xpose.msra.mxu0 0.0
    %663 = vmatprep.subr.mxu0 0.0
    %664 = vmatpush1.xpose.msra.mxu0 0.0
    %665 = vmatprep.subr.mxu0 0.0
    %666 = vmatpush1.xpose.msra.mxu0 0.0
    %667 = vmatprep.subr.mxu0 0.0
    %668 = vmatpush1.xpose.msra.mxu0 0.0
    %669 = vmatprep.subr.mxu0 0.0
    %670 = vmatpush1.xpose.msra.mxu0 0.0
    %671 = vmatprep.subr.mxu0 0.0
    %672 = vmatpush1.xpose.msra.mxu0 0.0
    %673 = vmatprep.subr.mxu0 0.0
    %674 = vmatpush1.xpose.msra.mxu0 0.0
    %675 = vmatprep.subr.mxu0 0.0
    %676 = vmatpush1.xpose.msra.mxu0 0.0
    %677 = vmatprep.subr.mxu0 0.0
    %678 = vmatpush1.xpose.msra.mxu0 0.0
    %679 = vmatprep.subr.mxu0 0.0
    %680 = vmatpush1.xpose.msra.mxu0 0.0
    %681 = vmatprep.subr.mxu0 0.0
    %682 = vmatpush1.xpose.msra.mxu0 0.0
    %683 = vmatprep.subr.mxu0 0.0
    %684 = vmatpush1.xpose.msra.mxu0 0.0
    %685 = vmatprep.subr.mxu0 0.0
    %686 = vmatpush1.xpose.msra.mxu0 0.0
    %687 = vmatprep.subr.mxu0 0.0
    %688 = vmatpush1.xpose.msra.mxu0 0.0
    %689 = vmatprep.subr.mxu0 0.0
    %690 = vmatpush1.xpose.msra.mxu0 0.0
    %691 = vmatprep.subr.mxu0 0.0
    %692 = vmatpush1.xpose.msra.mxu0 0.0
    %693 = vmatprep.subr.mxu0 0.0
    %694 = vmatpush1.xpose.msra.mxu0 0.0
    %695 = vmatprep.subr.mxu0 0.0
    %696 = vmatpush1.xpose.msra.mxu0 0.0
    %697 = vmatprep.subr.mxu0 0.0
    %698 = vmatpush1.xpose.msra.mxu0 0.0
    %699 = vmatprep.subr.mxu0 0.0
    %700 = vmatpush1.xpose.msra.mxu0 0.0
    %701 = vmatprep.subr.mxu0 0.0
    %702 = vmatpush1.xpose.msra.mxu0 0.0
    %703 = vmatprep.mubr.f32.mxu0 0.0
    %704 = vmatmul.mubr.f32.gmra.mrb[0].mxu0 %v635
    %v705 = vpop.f32.mrb[0].mxu0
    %v706 = vadd.f32 0.0, %v705
    %v707 = vpop.f32.mrb[0].mxu0
    %708 = vdwg.mxu0
    %v709 = vmul.f32 %v706, 0.25
    %v710 = vadd.f32 %v709, %v284
    %v711 = vsel %vm370, %v710, -inf
    %712 = vmax.xlane.f32.xlu0 %v711
    %v713 = vpop.xlane.xlu0 %712
    %v714 = vsub.f32 %v710, %v713
    %v715 = vmul.f32 %v714, 1.442695
    %v716 = vpow.pop %v715
    %v717 = vsel %vm370, %v716, 0.0
    %718 = vadd.xlane.f32.xlu0 %v717
    %v719 = vpop.xlane.xlu0 %718
    %v720 = vrcp.pop %v719
    %v721 = vmul.f32 %v716, %v720
    %722 = vrot.lane.b32.xlu0 %v260, 64
    %v723 = vpop.permute.xlu0 %722
    %v726 = vsel %vm370, %v721, 0
    %728 = vmatprep.subr.mxu0 0.0
    %729 = vmatpush1.msra.mxu0 %v723
    %730 = vmatprep.subr.mxu0 0.0
    %731 = vmatpush1.msra.mxu0 0.0
    %732 = vmatprep.subr.mxu0 0.0
    %733 = vmatpush1.msra.mxu0 0.0
    %734 = vmatprep.subr.mxu0 0.0
    %735 = vmatpush1.msra.mxu0 0.0
    %736 = vmatprep.subr.mxu0 0.0
    %737 = vmatpush1.msra.mxu0 0.0
    %738 = vmatprep.subr.mxu0 0.0
    %739 = vmatpush1.msra.mxu0 0.0
    %740 = vmatprep.subr.mxu0 0.0
    %741 = vmatpush1.msra.mxu0 0.0
    %742 = vmatprep.subr.mxu0 0.0
    %743 = vmatpush1.msra.mxu0 0.0
    %744 = vmatprep.subr.mxu0 0.0
    %745 = vmatpush1.msra.mxu0 0.0
    %746 = vmatprep.subr.mxu0 0.0
    %747 = vmatpush1.msra.mxu0 0.0
    %748 = vmatprep.subr.mxu0 0.0
    %749 = vmatpush1.msra.mxu0 0.0
    %750 = vmatprep.subr.mxu0 0.0
    %751 = vmatpush1.msra.mxu0 0.0
    %752 = vmatprep.subr.mxu0 0.0
    %753 = vmatpush1.msra.mxu0 0.0
    %754 = vmatprep.subr.mxu0 0.0
    %755 = vmatpush1.msra.mxu0 0.0
    %756 = vmatprep.subr.mxu0 0.0
    %757 = vmatpush1.msra.mxu0 0.0
    %758 = vmatprep.subr.mxu0 0.0
    %759 = vmatpush1.msra.mxu0 0.0
    %760 = vmatprep.subr.mxu0 0.0
    %761 = vmatpush1.msra.mxu0 0.0
    %762 = vmatprep.subr.mxu0 0.0
    %763 = vmatpush1.msra.mxu0 0.0
    %764 = vmatprep.subr.mxu0 0.0
    %765 = vmatpush1.msra.mxu0 0.0
    %766 = vmatprep.subr.mxu0 0.0
    %767 = vmatpush1.msra.mxu0 0.0
    %768 = vmatprep.subr.mxu0 0.0
    %769 = vmatpush1.msra.mxu0 0.0
    %770 = vmatprep.subr.mxu0 0.0
    %771 = vmatpush1.msra.mxu0 0.0
    %772 = vmatprep.subr.mxu0 0.0
    %773 = vmatpush1.msra.mxu0 0.0
    %774 = vmatprep.subr.mxu0 0.0
    %775 = vmatpush1.msra.mxu0 0.0
    %776 = vmatprep.subr.mxu0 0.0
    %777 = vmatpush1.msra.mxu0 0.0
    %778 = vmatprep.subr.mxu0 0.0
    %779 = vmatpush1.msra.mxu0 0.0
    %780 = vmatprep.subr.mxu0 0.0
    %781 = vmatpush1.msra.mxu0 0.0
    %782 = vmatprep.subr.mxu0 0.0
    %783 = vmatpush1.msra.mxu0 0.0
    %784 = vmatprep.subr.mxu0 0.0
    %785 = vmatpush1.msra.mxu0 0.0
    %786 = vmatprep.subr.mxu0 0.0
    %787 = vmatpush1.msra.mxu0 0.0
    %788 = vmatprep.subr.mxu0 0.0
    %789 = vmatpush1.msra.mxu0 0.0
    %790 = vmatprep.subr.mxu0 0.0
    %791 = vmatpush1.msra.mxu0 0.0
    %792 = vmatprep.mubr.f32.mxu0 0.0
    %793 = vmatmul.mubr.f32.gmra.mrb[0].mxu0 %v726
    %v794 = vpop.f32.mrb[0].mxu0
    %v795 = vadd.f32 0.0, %v794
    %v796 = vpop.f32.mrb[0].mxu0
    %797 = vdwg.mxu0
    %798 = vst.msk [vmem:[#allocation2 + $0x8] sm:$0xff] %vm293, %v795
    %799 = vrot.lane.b32.xlu0 %v260, 112
    %v800 = vpop.permute.xlu0 %799
    %801 = vrot.lane.b32.xlu0 %v260, 80
    %v802 = vpop.permute.xlu0 %801
    %v803 = vsel %vm293, %v800, 0
    %v805 = vsel %vm293, %v802, 0
    %807 = vmatprep.subr.mxu0 0.0
    %808 = vmatpush1.xpose.msra.mxu0 %v805
    %809 = vmatprep.subr.mxu0 0.0
    %810 = vmatpush1.xpose.msra.mxu0 0.0
    %811 = vmatprep.subr.mxu0 0.0
    %812 = vmatpush1.xpose.msra.mxu0 0.0
    %813 = vmatprep.subr.mxu0 0.0
    %814 = vmatpush1.xpose.msra.mxu0 0.0
    %815 = vmatprep.subr.mxu0 0.0
    %816 = vmatpush1.xpose.msra.mxu0 0.0
    %817 = vmatprep.subr.mxu0 0.0
    %818 = vmatpush1.xpose.msra.mxu0 0.0
    %819 = vmatprep.subr.mxu0 0.0
    %820 = vmatpush1.xpose.msra.mxu0 0.0
    %821 = vmatprep.subr.mxu0 0.0
    %822 = vmatpush1.xpose.msra.mxu0 0.0
    %823 = vmatprep.subr.mxu0 0.0
    %824 = vmatpush1.xpose.msra.mxu0 0.0
    %825 = vmatprep.subr.mxu0 0.0
    %826 = vmatpush1.xpose.msra.mxu0 0.0
    %827 = vmatprep.subr.mxu0 0.0
    %828 = vmatpush1.xpose.msra.mxu0 0.0
    %829 = vmatprep.subr.mxu0 0.0
    %830 = vmatpush1.xpose.msra.mxu0 0.0
    %831 = vmatprep.subr.mxu0 0.0
    %832 = vmatpush1.xpose.msra.mxu0 0.0
    %833 = vmatprep.subr.mxu0 0.0
    %834 = vmatpush1.xpose.msra.mxu0 0.0
    %835 = vmatprep.subr.mxu0 0.0
    %836 = vmatpush1.xpose.msra.mxu0 0.0
    %837 = vmatprep.subr.mxu0 0.0
    %838 = vmatpush1.xpose.msra.mxu0 0.0
    %839 = vmatprep.subr.mxu0 0.0
    %840 = vmatpush1.xpose.msra.mxu0 0.0
    %841 = vmatprep.subr.mxu0 0.0
    %842 = vmatpush1.xpose.msra.mxu0 0.0
    %843 = vmatprep.subr.mxu0 0.0
    %844 = vmatpush1.xpose.msra.mxu0 0.0
    %845 = vmatprep.subr.mxu0 0.0
    %846 = vmatpush1.xpose.msra.mxu0 0.0
    %847 = vmatprep.subr.mxu0 0.0
    %848 = vmatpush1.xpose.msra.mxu0 0.0
    %849 = vmatprep.subr.mxu0 0.0
    %850 = vmatpush1.xpose.msra.mxu0 0.0
    %851 = vmatprep.subr.mxu0 0.0
    %852 = vmatpush1.xpose.msra.mxu0 0.0
    %853 = vmatprep.subr.mxu0 0.0
    %854 = vmatpush1.xpose.msra.mxu0 0.0
    %855 = vmatprep.subr.mxu0 0.0
    %856 = vmatpush1.xpose.msra.mxu0 0.0
    %857 = vmatprep.subr.mxu0 0.0
    %858 = vmatpush1.xpose.msra.mxu0 0.0
    %859 = vmatprep.subr.mxu0 0.0
    %860 = vmatpush1.xpose.msra.mxu0 0.0
    %861 = vmatprep.subr.mxu0 0.0
    %862 = vmatpush1.xpose.msra.mxu0 0.0
    %863 = vmatprep.subr.mxu0 0.0
    %864 = vmatpush1.xpose.msra.mxu0 0.0
    %865 = vmatprep.subr.mxu0 0.0
    %866 = vmatpush1.xpose.msra.mxu0 0.0
    %867 = vmatprep.subr.mxu0 0.0
    %868 = vmatpush1.xpose.msra.mxu0 0.0
    %869 = vmatprep.subr.mxu0 0.0
    %870 = vmatpush1.xpose.msra.mxu0 0.0
    %871 = vmatprep.mubr.f32.mxu0 0.0
    %872 = vmatmul.mubr.f32.gmra.mrb[0].mxu0 %v803
    %v873 = vpop.f32.mrb[0].mxu0
    %v874 = vadd.f32 0.0, %v873
    %v875 = vpop.f32.mrb[0].mxu0
    %876 = vdwg.mxu0
    %v877 = vmul.f32 %v874, 0.25
    %v878 = vadd.f32 %v877, %v284
    %v879 = vsel %vm370, %v878, -inf
    %880 = vmax.xlane.f32.xlu0 %v879
    %v881 = vpop.xlane.xlu0 %880
    %v882 = vsub.f32 %v878, %v881
    %v883 = vmul.f32 %v882, 1.442695
    %v884 = vpow.pop %v883
    %v885 = vsel %vm370, %v884, 0.0
    %886 = vadd.xlane.f32.xlu0 %v885
    %v887 = vpop.xlane.xlu0 %886
    %v888 = vrcp.pop %v887
    %v889 = vmul.f32 %v884, %v888
    %890 = vrot.lane.b32.xlu0 %v260, 48
    %v891 = vpop.permute.xlu0 %890
    %v894 = vsel %vm370, %v889, 0
    %896 = vmatprep.subr.mxu0 0.0
    %897 = vmatpush1.msra.mxu0 %v891
    %898 = vmatprep.subr.mxu0 0.0
    %899 = vmatpush1.msra.mxu0 0.0
    %900 = vmatprep.subr.mxu0 0.0
    %901 = vmatpush1.msra.mxu0 0.0
    %902 = vmatprep.subr.mxu0 0.0
    %903 = vmatpush1.msra.mxu0 0.0
    %904 = vmatprep.subr.mxu0 0.0
    %905 = vmatpush1.msra.mxu0 0.0
    %906 = vmatprep.subr.mxu0 0.0
    %907 = vmatpush1.msra.mxu0 0.0
    %908 = vmatprep.subr.mxu0 0.0
    %909 = vmatpush1.msra.mxu0 0.0
    %910 = vmatprep.subr.mxu0 0.0
    %911 = vmatpush1.msra.mxu0 0.0
    %912 = vmatprep.subr.mxu0 0.0
    %913 = vmatpush1.msra.mxu0 0.0
    %914 = vmatprep.subr.mxu0 0.0
    %915 = vmatpush1.msra.mxu0 0.0
    %916 = vmatprep.subr.mxu0 0.0
    %917 = vmatpush1.msra.mxu0 0.0
    %918 = vmatprep.subr.mxu0 0.0
    %919 = vmatpush1.msra.mxu0 0.0
    %920 = vmatprep.subr.mxu0 0.0
    %921 = vmatpush1.msra.mxu0 0.0
    %922 = vmatprep.subr.mxu0 0.0
    %923 = vmatpush1.msra.mxu0 0.0
    %924 = vmatprep.subr.mxu0 0.0
    %925 = vmatpush1.msra.mxu0 0.0
    %926 = vmatprep.subr.mxu0 0.0
    %927 = vmatpush1.msra.mxu0 0.0
    %928 = vmatprep.subr.mxu0 0.0
    %929 = vmatpush1.msra.mxu0 0.0
    %930 = vmatprep.subr.mxu0 0.0
    %931 = vmatpush1.msra.mxu0 0.0
    %932 = vmatprep.subr.mxu0 0.0
    %933 = vmatpush1.msra.mxu0 0.0
    %934 = vmatprep.subr.mxu0 0.0
    %935 = vmatpush1.msra.mxu0 0.0
    %936 = vmatprep.subr.mxu0 0.0
    %937 = vmatpush1.msra.mxu0 0.0
    %938 = vmatprep.subr.mxu0 0.0
    %939 = vmatpush1.msra.mxu0 0.0
    %940 = vmatprep.subr.mxu0 0.0
    %941 = vmatpush1.msra.mxu0 0.0
    %942 = vmatprep.subr.mxu0 0.0
    %943 = vmatpush1.msra.mxu0 0.0
    %944 = vmatprep.subr.mxu0 0.0
    %945 = vmatpush1.msra.mxu0 0.0
    %946 = vmatprep.subr.mxu0 0.0
    %947 = vmatpush1.msra.mxu0 0.0
    %948 = vmatprep.subr.mxu0 0.0
    %949 = vmatpush1.msra.mxu0 0.0
    %950 = vmatprep.subr.mxu0 0.0
    %951 = vmatpush1.msra.mxu0 0.0
    %952 = vmatprep.subr.mxu0 0.0
    %953 = vmatpush1.msra.mxu0 0.0
    %954 = vmatprep.subr.mxu0 0.0
    %955 = vmatpush1.msra.mxu0 0.0
    %956 = vmatprep.subr.mxu0 0.0
    %957 = vmatpush1.msra.mxu0 0.0
    %958 = vmatprep.subr.mxu0 0.0
    %959 = vmatpush1.msra.mxu0 0.0
    %960 = vmatprep.mubr.f32.mxu0 0.0
    %961 = vmatmul.mubr.f32.gmra.mrb[0].mxu0 %v894
    %v962 = vpop.f32.mrb[0].mxu0
    %v963 = vadd.f32 0.0, %v962
    %v964 = vpop.f32.mrb[0].mxu0
    %965 = vdwg.mxu0
    %967 = vrot.lane.b32.xlu0 %v963, 16
    %v968 = vpop.permute.xlu0 %967
    %970 = vst.msk [vmem:[#allocation2 + $0x8] sm:$0xff] %vm630, %v968
    %v971 = vld [vmem:[#allocation2] sm:$0xff]
    %v972 = vld [vmem:[#allocation2 + $0x8] sm:$0xff]
    %v974 = vlaneseq
    %v975 = vshrl.u32 %v974, 7
    %v976 = vsub.s32 0, %v975
    %v977 = vrot.slane %v289, %v976
    %v980 = vsel %vm127, %v971, 0
    %v983 = vsel %vm127, %v972, 0
    %985 = vmatprep.subr.mxu0 0.0
    %986 = vmatpush1.msra.mxu0 %v285
    %987 = vmatprep.subr.mxu0 0.0
    %988 = vmatpush1.msra.mxu0 %v286
    %989 = vmatprep.subr.mxu0 0.0
    %990 = vmatpush1.msra.mxu0 %v287
    %991 = vmatprep.subr.mxu0 0.0
    %992 = vmatpush1.msra.mxu0 %v288
    %993 = vmatprep.subr.mxu0 0.0
    %994 = vmatpush1.msra.mxu0 0.0
    %995 = vmatprep.subr.mxu0 0.0
    %996 = vmatpush1.msra.mxu0 0.0
    %997 = vmatprep.subr.mxu0 0.0
    %998 = vmatpush1.msra.mxu0 0.0
    %999 = vmatprep.subr.mxu0 0.0
    %1000 = vmatpush1.msra.mxu0 0.0
    %1001 = vmatprep.subr.mxu0 0.0
    %1002 = vmatpush1.msra.mxu0 0.0
    %1003 = vmatprep.subr.mxu0 0.0
    %1004 = vmatpush1.msra.mxu0 0.0
    %1005 = vmatprep.subr.mxu0 0.0
    %1006 = vmatpush1.msra.mxu0 0.0
    %1007 = vmatprep.subr.mxu0 0.0
    %1008 = vmatpush1.msra.mxu0 0.0
    %1009 = vmatprep.subr.mxu0 0.0
    %1010 = vmatpush1.msra.mxu0 0.0
    %1011 = vmatprep.subr.mxu0 0.0
    %1012 = vmatpush1.msra.mxu0 0.0
    %1013 = vmatprep.subr.mxu0 0.0
    %1014 = vmatpush1.msra.mxu0 0.0
    %1015 = vmatprep.subr.mxu0 0.0
    %1016 = vmatpush1.msra.mxu0 0.0
    %1017 = vmatprep.subr.mxu0 0.0
    %1018 = vmatpush1.msra.mxu0 0.0
    %1019 = vmatprep.subr.mxu0 0.0
    %1020 = vmatpush1.msra.mxu0 0.0
    %1021 = vmatprep.subr.mxu0 0.0
    %1022 = vmatpush1.msra.mxu0 0.0
    %1023 = vmatprep.subr.mxu0 0.0
    %1024 = vmatpush1.msra.mxu0 0.0
    %1025 = vmatprep.subr.mxu0 0.0
    %1026 = vmatpush1.msra.mxu0 0.0
    %1027 = vmatprep.subr.mxu0 0.0
    %1028 = vmatpush1.msra.mxu0 0.0
    %1029 = vmatprep.subr.mxu0 0.0
    %1030 = vmatpush1.msra.mxu0 0.0
    %1031 = vmatprep.subr.mxu0 0.0
    %1032 = vmatpush1.msra.mxu0 0.0
    %1033 = vmatprep.subr.mxu0 0.0
    %1034 = vmatpush1.msra.mxu0 0.0
    %1035 = vmatprep.subr.mxu0 0.0
    %1036 = vmatpush1.msra.mxu0 0.0
    %1037 = vmatprep.subr.mxu0 0.0
    %1038 = vmatpush1.msra.mxu0 0.0
    %1039 = vmatprep.subr.mxu0 0.0
    %1040 = vmatpush1.msra.mxu0 0.0
    %1041 = vmatprep.subr.mxu0 0.0
    %1042 = vmatpush1.msra.mxu0 0.0
    %1043 = vmatprep.subr.mxu0 0.0
    %1044 = vmatpush1.msra.mxu0 0.0
    %1045 = vmatprep.subr.mxu0 0.0
    %1046 = vmatpush1.msra.mxu0 0.0
    %1047 = vmatprep.subr.mxu0 0.0
    %1048 = vmatpush1.msra.mxu0 0.0
    %1049 = vmatprep.mubr.f32.mxu0 0.0
    %1050 = vmatmul.mubr.f32.gmra.mrb[0].mxu0 %v980
    %v1051 = vpop.f32.mrb[0].mxu0
    %v1052 = vadd.f32 %v977, %v1051
    %v1053 = vpop.f32.mrb[0].mxu0
    %1054 = vmatprep.mubr.f32.mxu0 0.0
    %1055 = vmatmul.mubr.f32.gmra.mrb[0].mxu0 %v983
    %v1056 = vpop.f32.mrb[0].mxu0
    %v1057 = vadd.f32 %v977, %v1056
    %v1058 = vpop.f32.mrb[0].mxu0
    %1059 = vdwg.mxu0
    %v1060 = vadd.f32 %v123, %v1052
    %v1061 = vadd.f32 %v124, %v1057
    %v1062 = vld [vmem:[%s21] sm:$0x1]
    %v1063 = vld [vmem:[%s23] sm:$0x1]
    %v1064 = vsel %vm127, %v1060, 0.0
    %1065 = vadd.xlane.f32.xlu0 %v1064
    %v1066 = vpop.xlane.xlu0 %1065
    %v1067 = vsel %vm127, %v1061, 0.0
    %1068 = vadd.xlane.f32.xlu0 %v1067
    %v1069 = vpop.xlane.xlu0 %1068
    %v1070 = vmul.f32 %v1066, %v134
    %v1071 = vmul.f32 %v1069, %v134
    %v1072 = vsub.f32 %v1060, %v1070
    %v1073 = vsub.f32 %v1061, %v1071
    %v1074 = vmul.f32 %v1072, %v1072
    %v1075 = vmul.f32 %v1073, %v1073
    %v1076 = vsel %vm127, %v1074, 0.0
    %1077 = vadd.xlane.f32.xlu0 %v1076
    %v1078 = vpop.xlane.xlu0 %1077
    %v1079 = vsel %vm127, %v1075, 0.0
    %1080 = vadd.xlane.f32.xlu0 %v1079
    %v1081 = vpop.xlane.xlu0 %1080
    %v1082 = vmul.f32 %v1078, %v134
    %v1083 = vmul.f32 %v1081, %v134
    %v1084 = vadd.f32 %v1082, 1e-05
    %v1085 = vadd.f32 %v1083, 1e-05
    %v1086 = vrsqrt.pop %v1084
    %v1087 = vrsqrt.pop %v1085
    %v1088 = vmul.f32 %v1072, %v1086
    %v1089 = vmul.f32 %v1073, %v1087
    %v1091 = vlaneseq
    %v1092 = vshrl.u32 %v1091, 7
    %v1093 = vsub.s32 0, %v1092
    %v1094 = vrot.slane %v1062, %v1093
    %v1096 = vmul.f32 %v1088, %v1094
    %v1097 = vmul.f32 %v1089, %v1094
    %v1099 = vlaneseq
    %v1100 = vshrl.u32 %v1099, 7
    %v1101 = vsub.s32 0, %v1100
    %v1102 = vrot.slane %v1063, %v1101
    %v1104 = vadd.f32 %v1096, %v1102
    %v1105 = vadd.f32 %v1097, %v1102
    %v1106 = vld [vmem:[%s25] sm:$0xff]
    %v1107 = vld [vmem:[%s25 + $0x8] sm:$0xff]
    %v1108 = vld [vmem:[%s25 + $0x10] sm:$0xff]
    %v1109 = vld [vmem:[%s25 + $0x18] sm:$0xff]
    %v1110 = vld [vmem:[%s27] sm:$0x1]
    %v1112 = vlaneseq
    %v1113 = vshrl.u32 %v1112, 7
    %v1114 = vsub.s32 0, %v1113
    %v1115 = vrot.slane %v1110, %v1114
    %v1118 = vsel %vm127, %v1104, 0
    %v1121 = vsel %vm127, %v1105, 0
    %1123 = vmatprep.subr.mxu0 0.0
    %1124 = vmatpush1.msra.mxu0 %v1106
    %1125 = vmatprep.subr.mxu0 0.0
    %1126 = vmatpush1.msra.mxu0 %v1107
    %1127 = vmatprep.subr.mxu0 0.0
    %1128 = vmatpush1.msra.mxu0 %v1108
    %1129 = vmatprep.subr.mxu0 0.0
    %1130 = vmatpush1.msra.mxu0 %v1109
    %1131 = vmatprep.subr.mxu0 0.0
    %1132 = vmatpush1.msra.mxu0 0.0
    %1133 = vmatprep.subr.mxu0 0.0
    %1134 = vmatpush1.msra.mxu0 0.0
    %1135 = vmatprep.subr.mxu0 0.0
    %1136 = vmatpush1.msra.mxu0 0.0
    %1137 = vmatprep.subr.mxu0 0.0
    %1138 = vmatpush1.msra.mxu0 0.0
    %1139 = vmatprep.subr.mxu0 0.0
    %1140 = vmatpush1.msra.mxu0 0.0
    %1141 = vmatprep.subr.mxu0 0.0
    %1142 = vmatpush1.msra.mxu0 0.0
    %1143 = vmatprep.subr.mxu0 0.0
    %1144 = vmatpush1.msra.mxu0 0.0
    %1145 = vmatprep.subr.mxu0 0.0
    %1146 = vmatpush1.msra.mxu0 0.0
    %1147 = vmatprep.subr.mxu0 0.0
    %1148 = vmatpush1.msra.mxu0 0.0
    %1149 = vmatprep.subr.mxu0 0.0
    %1150 = vmatpush1.msra.mxu0 0.0
    %1151 = vmatprep.subr.mxu0 0.0
    %1152 = vmatpush1.msra.mxu0 0.0
    %1153 = vmatprep.subr.mxu0 0.0
    %1154 = vmatpush1.msra.mxu0 0.0
    %1155 = vmatprep.subr.mxu0 0.0
    %1156 = vmatpush1.msra.mxu0 0.0
    %1157 = vmatprep.subr.mxu0 0.0
    %1158 = vmatpush1.msra.mxu0 0.0
    %1159 = vmatprep.subr.mxu0 0.0
    %1160 = vmatpush1.msra.mxu0 0.0
    %1161 = vmatprep.subr.mxu0 0.0
    %1162 = vmatpush1.msra.mxu0 0.0
    %1163 = vmatprep.subr.mxu0 0.0
    %1164 = vmatpush1.msra.mxu0 0.0
    %1165 = vmatprep.subr.mxu0 0.0
    %1166 = vmatpush1.msra.mxu0 0.0
    %1167 = vmatprep.subr.mxu0 0.0
    %1168 = vmatpush1.msra.mxu0 0.0
    %1169 = vmatprep.subr.mxu0 0.0
    %1170 = vmatpush1.msra.mxu0 0.0
    %1171 = vmatprep.subr.mxu0 0.0
    %1172 = vmatpush1.msra.mxu0 0.0
    %1173 = vmatprep.subr.mxu0 0.0
    %1174 = vmatpush1.msra.mxu0 0.0
    %1175 = vmatprep.subr.mxu0 0.0
    %1176 = vmatpush1.msra.mxu0 0.0
    %1177 = vmatprep.subr.mxu0 0.0
    %1178 = vmatpush1.msra.mxu0 0.0
    %1179 = vmatprep.subr.mxu0 0.0
    %1180 = vmatpush1.msra.mxu0 0.0
    %1181 = vmatprep.subr.mxu0 0.0
    %1182 = vmatpush1.msra.mxu0 0.0
    %1183 = vmatprep.subr.mxu0 0.0
    %1184 = vmatpush1.msra.mxu0 0.0
    %1185 = vmatprep.subr.mxu0 0.0
    %1186 = vmatpush1.msra.mxu0 0.0
    %1187 = vmatprep.mubr.f32.mxu0 0.0
    %1188 = vmatmul.mubr.f32.gmra.mrb[0].mxu0 %v1118
    %v1189 = vpop.f32.mrb[0].mxu0
    %v1190 = vadd.f32 %v1115, %v1189
    %v1191 = vpop.f32.mrb[0].mxu0
    %1192 = vmatprep.mubr.f32.mxu0 0.0
    %1193 = vmatmul.mubr.f32.gmra.mrb[0].mxu0 %v1121
    %v1194 = vpop.f32.mrb[0].mxu0
    %v1195 = vadd.f32 %v1115, %v1194
    %v1196 = vpop.f32.mrb[0].mxu0
    %1197 = vdwg.mxu0
    %v1198 = vld [vmem:[%s5] sm:$0xff]
    %v1199 = vld [vmem:[%s5 + $0x8] sm:$0xff]
    %v1200 = vld [vmem:[%s29] sm:$0xff]
    %v1201 = vld [vmem:[%s29 + $0x8] sm:$0xff]
    %v1202 = vld [vmem:[%s29 + $0x10] sm:$0xff]
    %v1203 = vld [vmem:[%s29 + $0x18] sm:$0xff]
    %v1204 = vld [vmem:[%s31] sm:$0x1]
    %v1206 = vlaneseq
    %v1207 = vshrl.u32 %v1206, 7
    %v1208 = vsub.s32 0, %v1207
    %v1209 = vrot.slane %v1204, %v1208
    %v1212 = vsel %vm127, %v1198, 0
    %v1215 = vsel %vm127, %v1199, 0
    %1217 = vmatprep.subr.mxu0 0.0
    %1218 = vmatpush1.msra.mxu0 %v1200
    %1219 = vmatprep.subr.mxu0 0.0
    %1220 = vmatpush1.msra.mxu0 %v1201
    %1221 = vmatprep.subr.mxu0 0.0
    %1222 = vmatpush1.msra.mxu0 %v1202
    %1223 = vmatprep.subr.mxu0 0.0
    %1224 = vmatpush1.msra.mxu0 %v1203
    %1225 = vmatprep.subr.mxu0 0.0
    %1226 = vmatpush1.msra.mxu0 0.0
    %1227 = vmatprep.subr.mxu0 0.0
    %1228 = vmatpush1.msra.mxu0 0.0
    %1229 = vmatprep.subr.mxu0 0.0
    %1230 = vmatpush1.msra.mxu0 0.0
    %1231 = vmatprep.subr.mxu0 0.0
    %1232 = vmatpush1.msra.mxu0 0.0
    %1233 = vmatprep.subr.mxu0 0.0
    %1234 = vmatpush1.msra.mxu0 0.0
    %1235 = vmatprep.subr.mxu0 0.0
    %1236 = vmatpush1.msra.mxu0 0.0
    %1237 = vmatprep.subr.mxu0 0.0
    %1238 = vmatpush1.msra.mxu0 0.0
    %1239 = vmatprep.subr.mxu0 0.0
    %1240 = vmatpush1.msra.mxu0 0.0
    %1241 = vmatprep.subr.mxu0 0.0
    %1242 = vmatpush1.msra.mxu0 0.0
    %1243 = vmatprep.subr.mxu0 0.0
    %1244 = vmatpush1.msra.mxu0 0.0
    %1245 = vmatprep.subr.mxu0 0.0
    %1246 = vmatpush1.msra.mxu0 0.0
    %1247 = vmatprep.subr.mxu0 0.0
    %1248 = vmatpush1.msra.mxu0 0.0
    %1249 = vmatprep.subr.mxu0 0.0
    %1250 = vmatpush1.msra.mxu0 0.0
    %1251 = vmatprep.subr.mxu0 0.0
    %1252 = vmatpush1.msra.mxu0 0.0
    %1253 = vmatprep.subr.mxu0 0.0
    %1254 = vmatpush1.msra.mxu0 0.0
    %1255 = vmatprep.subr.mxu0 0.0
    %1256 = vmatpush1.msra.mxu0 0.0
    %1257 = vmatprep.subr.mxu0 0.0
    %1258 = vmatpush1.msra.mxu0 0.0
    %1259 = vmatprep.subr.mxu0 0.0
    %1260 = vmatpush1.msra.mxu0 0.0
    %1261 = vmatprep.subr.mxu0 0.0
    %1262 = vmatpush1.msra.mxu0 0.0
    %1263 = vmatprep.subr.mxu0 0.0
    %1264 = vmatpush1.msra.mxu0 0.0
    %1265 = vmatprep.subr.mxu0 0.0
    %1266 = vmatpush1.msra.mxu0 0.0
    %1267 = vmatprep.subr.mxu0 0.0
    %1268 = vmatpush1.msra.mxu0 0.0
    %1269 = vmatprep.subr.mxu0 0.0
    %1270 = vmatpush1.msra.mxu0 0.0
    %1271 = vmatprep.subr.mxu0 0.0
    %1272 = vmatpush1.msra.mxu0 0.0
    %1273 = vmatprep.subr.mxu0 0.0
    %1274 = vmatpush1.msra.mxu0 0.0
    %1275 = vmatprep.subr.mxu0 0.0
    %1276 = vmatpush1.msra.mxu0 0.0
    %1277 = vmatprep.subr.mxu0 0.0
    %1278 = vmatpush1.msra.mxu0 0.0
    %1279 = vmatprep.subr.mxu0 0.0
    %1280 = vmatpush1.msra.mxu0 0.0
    %1281 = vmatprep.mubr.f32.mxu0 0.0
    %1282 = vmatmul.mubr.f32.gmra.mrb[0].mxu0 %v1212
    %v1283 = vpop.f32.mrb[0].mxu0
    %v1284 = vadd.f32 %v1209, %v1283
    %v1285 = vpop.f32.mrb[0].mxu0
    %1286 = vmatprep.mubr.f32.mxu0 0.0
    %1287 = vmatmul.mubr.f32.gmra.mrb[0].mxu0 %v1215
    %v1288 = vpop.f32.mrb[0].mxu0
    %v1289 = vadd.f32 %v1209, %v1288
    %v1290 = vpop.f32.mrb[0].mxu0
    %1291 = vdwg.mxu0
    %v1292 = vld [vmem:[%s7] sm:$0x3]
    %v1293 = vsub.f32 1.0, %v1292
    %v1294 = vmul.f32 %v1293, -1e+09
    %v1295 = vld [vmem:[%s33] sm:$0xff]
    %v1296 = vld [vmem:[%s33 + $0x8] sm:$0xff]
    %v1297 = vld [vmem:[%s33 + $0x10] sm:$0xff]
    %v1298 = vld [vmem:[%s33 + $0x18] sm:$0xff]
    %v1299 = vld [vmem:[%s35] sm:$0x1]
    %v1301 = vsel %vm293, %v1190, 0
    %v1304 = vsel %vm293, %v1284, 0
    %1306 = vmatprep.subr.mxu0 0.0
    %1307 = vmatpush1.xpose.msra.mxu0 %v1304
    %1308 = vmatprep.subr.mxu0 0.0
    %1309 = vmatpush1.xpose.msra.mxu0 0.0
    %1310 = vmatprep.subr.mxu0 0.0
    %1311 = vmatpush1.xpose.msra.mxu0 0.0
    %1312 = vmatprep.subr.mxu0 0.0
    %1313 = vmatpush1.xpose.msra.mxu0 0.0
    %1314 = vmatprep.subr.mxu0 0.0
    %1315 = vmatpush1.xpose.msra.mxu0 0.0
    %1316 = vmatprep.subr.mxu0 0.0
    %1317 = vmatpush1.xpose.msra.mxu0 0.0
    %1318 = vmatprep.subr.mxu0 0.0
    %1319 = vmatpush1.xpose.msra.mxu0 0.0
    %1320 = vmatprep.subr.mxu0 0.0
    %1321 = vmatpush1.xpose.msra.mxu0 0.0
    %1322 = vmatprep.subr.mxu0 0.0
    %1323 = vmatpush1.xpose.msra.mxu0 0.0
    %1324 = vmatprep.subr.mxu0 0.0
    %1325 = vmatpush1.xpose.msra.mxu0 0.0
    %1326 = vmatprep.subr.mxu0 0.0
    %1327 = vmatpush1.xpose.msra.mxu0 0.0
    %1328 = vmatprep.subr.mxu0 0.0
    %1329 = vmatpush1.xpose.msra.mxu0 0.0
    %1330 = vmatprep.subr.mxu0 0.0
    %1331 = vmatpush1.xpose.msra.mxu0 0.0
    %1332 = vmatprep.subr.mxu0 0.0
    %1333 = vmatpush1.xpose.msra.mxu0 0.0
    %1334 = vmatprep.subr.mxu0 0.0
    %1335 = vmatpush1.xpose.msra.mxu0 0.0
    %1336 = vmatprep.subr.mxu0 0.0
    %1337 = vmatpush1.xpose.msra.mxu0 0.0
    %1338 = vmatprep.subr.mxu0 0.0
    %1339 = vmatpush1.xpose.msra.mxu0 0.0
    %1340 = vmatprep.subr.mxu0 0.0
    %1341 = vmatpush1.xpose.msra.mxu0 0.0
    %1342 = vmatprep.subr.mxu0 0.0
    %1343 = vmatpush1.xpose.msra.mxu0 0.0
    %1344 = vmatprep.subr.mxu0 0.0
    %1345 = vmatpush1.xpose.msra.mxu0 0.0
    %1346 = vmatprep.subr.mxu0 0.0
    %1347 = vmatpush1.xpose.msra.mxu0 0.0
    %1348 = vmatprep.subr.mxu0 0.0
    %1349 = vmatpush1.xpose.msra.mxu0 0.0
    %1350 = vmatprep.subr.mxu0 0.0
    %1351 = vmatpush1.xpose.msra.mxu0 0.0
    %1352 = vmatprep.subr.mxu0 0.0
    %1353 = vmatpush1.xpose.msra.mxu0 0.0
    %1354 = vmatprep.subr.mxu0 0.0
    %1355 = vmatpush1.xpose.msra.mxu0 0.0
    %1356 = vmatprep.subr.mxu0 0.0
    %1357 = vmatpush1.xpose.msra.mxu0 0.0
    %1358 = vmatprep.subr.mxu0 0.0
    %1359 = vmatpush1.xpose.msra.mxu0 0.0
    %1360 = vmatprep.subr.mxu0 0.0
    %1361 = vmatpush1.xpose.msra.mxu0 0.0
    %1362 = vmatprep.subr.mxu0 0.0
    %1363 = vmatpush1.xpose.msra.mxu0 0.0
    %1364 = vmatprep.subr.mxu0 0.0
    %1365 = vmatpush1.xpose.msra.mxu0 0.0
    %1366 = vmatprep.subr.mxu0 0.0
    %1367 = vmatpush1.xpose.msra.mxu0 0.0
    %1368 = vmatprep.subr.mxu0 0.0
    %1369 = vmatpush1.xpose.msra.mxu0 0.0
    %1370 = vmatprep.mubr.f32.mxu0 0.0
    %1371 = vmatmul.mubr.f32.gmra.mrb[0].mxu0 %v1301
    %v1372 = vpop.f32.mrb[0].mxu0
    %v1373 = vadd.f32 0.0, %v1372
    %v1374 = vpop.f32.mrb[0].mxu0
    %1375 = vdwg.mxu0
    %v1376 = vmul.f32 %v1373, 0.25
    %v1377 = vlaneseq
    %v1378 = vshrl.u32 %v1377, 7
    %v1379 = vsub.s32 0, %v1378
    %v1380 = vrot.slane %v1294, %v1379
    %v1381 = vadd.f32 %v1376, %v1380
    %v1382 = vsel %vm370, %v1381, -inf
    %1383 = vmax.xlane.f32.xlu0 %v1382
    %v1384 = vpop.xlane.xlu0 %1383
    %v1385 = vsub.f32 %v1381, %v1384
    %v1386 = vmul.f32 %v1385, 1.442695
    %v1387 = vpow.pop %v1386
    %v1388 = vsel %vm370, %v1387, 0.0
    %1389 = vadd.xlane.f32.xlu0 %v1388
    %v1390 = vpop.xlane.xlu0 %1389
    %v1391 = vrcp.pop %v1390
    %v1392 = vmul.f32 %v1387, %v1391
    %1393 = vrot.lane.b32.xlu0 %v1284, 96
    %v1394 = vpop.permute.xlu0 %1393
    %v1397 = vsel %vm370, %v1392, 0
    %1399 = vmatprep.subr.mxu0 0.0
    %1400 = vmatpush1.msra.mxu0 %v1394
    %1401 = vmatprep.subr.mxu0 0.0
    %1402 = vmatpush1.msra.mxu0 0.0
    %1403 = vmatprep.subr.mxu0 0.0
    %1404 = vmatpush1.msra.mxu0 0.0
    %1405 = vmatprep.subr.mxu0 0.0
    %1406 = vmatpush1.msra.mxu0 0.0
    %1407 = vmatprep.subr.mxu0 0.0
    %1408 = vmatpush1.msra.mxu0 0.0
    %1409 = vmatprep.subr.mxu0 0.0
    %1410 = vmatpush1.msra.mxu0 0.0
    %1411 = vmatprep.subr.mxu0 0.0
    %1412 = vmatpush1.msra.mxu0 0.0
    %1413 = vmatprep.subr.mxu0 0.0
    %1414 = vmatpush1.msra.mxu0 0.0
    %1415 = vmatprep.subr.mxu0 0.0
    %1416 = vmatpush1.msra.mxu0 0.0
    %1417 = vmatprep.subr.mxu0 0.0
    %1418 = vmatpush1.msra.mxu0 0.0
    %1419 = vmatprep.subr.mxu0 0.0
    %1420 = vmatpush1.msra.mxu0 0.0
    %1421 = vmatprep.subr.mxu0 0.0
    %1422 = vmatpush1.msra.mxu0 0.0
    %1423 = vmatprep.subr.mxu0 0.0
    %1424 = vmatpush1.msra.mxu0 0.0
    %1425 = vmatprep.subr.mxu0 0.0
    %1426 = vmatpush1.msra.mxu0 0.0
    %1427 = vmatprep.subr.mxu0 0.0
    %1428 = vmatpush1.msra.mxu0 0.0
    %1429 = vmatprep.subr.mxu0 0.0
    %1430 = vmatpush1.msra.mxu0 0.0
    %1431 = vmatprep.subr.mxu0 0.0
    %1432 = vmatpush1.msra.mxu0 0.0
    %1433 = vmatprep.subr.mxu0 0.0
    %1434 = vmatpush1.msra.mxu0 0.0
    %1435 = vmatprep.subr.mxu0 0.0
    %1436 = vmatpush1.msra.mxu0 0.0
    %1437 = vmatprep.subr.mxu0 0.0
    %1438 = vmatpush1.msra.mxu0 0.0
    %1439 = vmatprep.subr.mxu0 0.0
    %1440 = vmatpush1.msra.mxu0 0.0
    %1441 = vmatprep.subr.mxu0 0.0
    %1442 = vmatpush1.msra.mxu0 0.0
    %1443 = vmatprep.subr.mxu0 0.0
    %1444 = vmatpush1.msra.mxu0 0.0
    %1445 = vmatprep.subr.mxu0 0.0
    %1446 = vmatpush1.msra.mxu0 0.0
    %1447 = vmatprep.subr.mxu0 0.0
    %1448 = vmatpush1.msra.mxu0 0.0
    %1449 = vmatprep.subr.mxu0 0.0
    %1450 = vmatpush1.msra.mxu0 0.0
    %1451 = vmatprep.subr.mxu0 0.0
    %1452 = vmatpush1.msra.mxu0 0.0
    %1453 = vmatprep.subr.mxu0 0.0
    %1454 = vmatpush1.msra.mxu0 0.0
    %1455 = vmatprep.subr.mxu0 0.0
    %1456 = vmatpush1.msra.mxu0 0.0
    %1457 = vmatprep.subr.mxu0 0.0
    %1458 = vmatpush1.msra.mxu0 0.0
    %1459 = vmatprep.subr.mxu0 0.0
    %1460 = vmatpush1.msra.mxu0 0.0
    %1461 = vmatprep.subr.mxu0 0.0
    %1462 = vmatpush1.msra.mxu0 0.0
    %1463 = vmatprep.mubr.f32.mxu0 0.0
    %1464 = vmatmul.mubr.f32.gmra.mrb[0].mxu0 %v1397
    %v1465 = vpop.f32.mrb[0].mxu0
    %v1466 = vadd.f32 0.0, %v1465
    %v1467 = vpop.f32.mrb[0].mxu0
    %1468 = vdwg.mxu0
    %1469 = vst.msk [vmem:[#allocation2] sm:$0xff] %vm293, %v1466
    %1470 = vrot.lane.b32.xlu0 %v1190, 112
    %v1471 = vpop.permute.xlu0 %1470
    %1472 = vrot.lane.b32.xlu0 %v1284, 112
    %v1473 = vpop.permute.xlu0 %1472
    %v1474 = vsel %vm293, %v1471, 0
    %v1476 = vsel %vm293, %v1473, 0
    %1478 = vmatprep.subr.mxu0 0.0
    %1479 = vmatpush1.xpose.msra.mxu0 %v1476
    %1480 = vmatprep.subr.mxu0 0.0
    %1481 = vmatpush1.xpose.msra.mxu0 0.0
    %1482 = vmatprep.subr.mxu0 0.0
    %1483 = vmatpush1.xpose.msra.mxu0 0.0
    %1484 = vmatprep.subr.mxu0 0.0
    %1485 = vmatpush1.xpose.msra.mxu0 0.0
    %1486 = vmatprep.subr.mxu0 0.0
    %1487 = vmatpush1.xpose.msra.mxu0 0.0
    %1488 = vmatprep.subr.mxu0 0.0
    %1489 = vmatpush1.xpose.msra.mxu0 0.0
    %1490 = vmatprep.subr.mxu0 0.0
    %1491 = vmatpush1.xpose.msra.mxu0 0.0
    %1492 = vmatprep.subr.mxu0 0.0
    %1493 = vmatpush1.xpose.msra.mxu0 0.0
    %1494 = vmatprep.subr.mxu0 0.0
    %1495 = vmatpush1.xpose.msra.mxu0 0.0
    %1496 = vmatprep.subr.mxu0 0.0
    %1497 = vmatpush1.xpose.msra.mxu0 0.0
    %1498 = vmatprep.subr.mxu0 0.0
    %1499 = vmatpush1.xpose.msra.mxu0 0.0
    %1500 = vmatprep.subr.mxu0 0.0
    %1501 = vmatpush1.xpose.msra.mxu0 0.0
    %1502 = vmatprep.subr.mxu0 0.0
    %1503 = vmatpush1.xpose.msra.mxu0 0.0
    %1504 = vmatprep.subr.mxu0 0.0
    %1505 = vmatpush1.xpose.msra.mxu0 0.0
    %1506 = vmatprep.subr.mxu0 0.0
    %1507 = vmatpush1.xpose.msra.mxu0 0.0
    %1508 = vmatprep.subr.mxu0 0.0
    %1509 = vmatpush1.xpose.msra.mxu0 0.0
    %1510 = vmatprep.subr.mxu0 0.0
    %1511 = vmatpush1.xpose.msra.mxu0 0.0
    %1512 = vmatprep.subr.mxu0 0.0
    %1513 = vmatpush1.xpose.msra.mxu0 0.0
    %1514 = vmatprep.subr.mxu0 0.0
    %1515 = vmatpush1.xpose.msra.mxu0 0.0
    %1516 = vmatprep.subr.mxu0 0.0
    %1517 = vmatpush1.xpose.msra.mxu0 0.0
    %1518 = vmatprep.subr.mxu0 0.0
    %1519 = vmatpush1.xpose.msra.mxu0 0.0
    %1520 = vmatprep.subr.mxu0 0.0
    %1521 = vmatpush1.xpose.msra.mxu0 0.0
    %1522 = vmatprep.subr.mxu0 0.0
    %1523 = vmatpush1.xpose.msra.mxu0 0.0
    %1524 = vmatprep.subr.mxu0 0.0
    %1525 = vmatpush1.xpose.msra.mxu0 0.0
    %1526 = vmatprep.subr.mxu0 0.0
    %1527 = vmatpush1.xpose.msra.mxu0 0.0
    %1528 = vmatprep.subr.mxu0 0.0
    %1529 = vmatpush1.xpose.msra.mxu0 0.0
    %1530 = vmatprep.subr.mxu0 0.0
    %1531 = vmatpush1.xpose.msra.mxu0 0.0
    %1532 = vmatprep.subr.mxu0 0.0
    %1533 = vmatpush1.xpose.msra.mxu0 0.0
    %1534 = vmatprep.subr.mxu0 0.0
    %1535 = vmatpush1.xpose.msra.mxu0 0.0
    %1536 = vmatprep.subr.mxu0 0.0
    %1537 = vmatpush1.xpose.msra.mxu0 0.0
    %1538 = vmatprep.subr.mxu0 0.0
    %1539 = vmatpush1.xpose.msra.mxu0 0.0
    %1540 = vmatprep.subr.mxu0 0.0
    %1541 = vmatpush1.xpose.msra.mxu0 0.0
    %1542 = vmatprep.mubr.f32.mxu0 0.0
    %1543 = vmatmul.mubr.f32.gmra.mrb[0].mxu0 %v1474
    %v1544 = vpop.f32.mrb[0].mxu0
    %v1545 = vadd.f32 0.0, %v1544
    %v1546 = vpop.f32.mrb[0].mxu0
    %1547 = vdwg.mxu0
    %v1548 = vmul.f32 %v1545, 0.25
    %v1549 = vadd.f32 %v1548, %v1380
    %v1550 = vsel %vm370, %v1549, -inf
    %1551 = vmax.xlane.f32.xlu0 %v1550
    %v1552 = vpop.xlane.xlu0 %1551
    %v1553 = vsub.f32 %v1549, %v1552
    %v1554 = vmul.f32 %v1553, 1.442695
    %v1555 = vpow.pop %v1554
    %v1556 = vsel %vm370, %v1555, 0.0
    %1557 = vadd.xlane.f32.xlu0 %v1556
    %v1558 = vpop.xlane.xlu0 %1557
    %v1559 = vrcp.pop %v1558
    %v1560 = vmul.f32 %v1555, %v1559
    %1561 = vrot.lane.b32.xlu0 %v1284, 80
    %v1562 = vpop.permute.xlu0 %1561
    %v1565 = vsel %vm370, %v1560, 0
    %1567 = vmatprep.subr.mxu0 0.0
    %1568 = vmatpush1.msra.mxu0 %v1562
    %1569 = vmatprep.subr.mxu0 0.0
    %1570 = vmatpush1.msra.mxu0 0.0
    %1571 = vmatprep.subr.mxu0 0.0
    %1572 = vmatpush1.msra.mxu0 0.0
    %1573 = vmatprep.subr.mxu0 0.0
    %1574 = vmatpush1.msra.mxu0 0.0
    %1575 = vmatprep.subr.mxu0 0.0
    %1576 = vmatpush1.msra.mxu0 0.0
    %1577 = vmatprep.subr.mxu0 0.0
    %1578 = vmatpush1.msra.mxu0 0.0
    %1579 = vmatprep.subr.mxu0 0.0
    %1580 = vmatpush1.msra.mxu0 0.0
    %1581 = vmatprep.subr.mxu0 0.0
    %1582 = vmatpush1.msra.mxu0 0.0
    %1583 = vmatprep.subr.mxu0 0.0
    %1584 = vmatpush1.msra.mxu0 0.0
    %1585 = vmatprep.subr.mxu0 0.0
    %1586 = vmatpush1.msra.mxu0 0.0
    %1587 = vmatprep.subr.mxu0 0.0
    %1588 = vmatpush1.msra.mxu0 0.0
    %1589 = vmatprep.subr.mxu0 0.0
    %1590 = vmatpush1.msra.mxu0 0.0
    %1591 = vmatprep.subr.mxu0 0.0
    %1592 = vmatpush1.msra.mxu0 0.0
    %1593 = vmatprep.subr.mxu0 0.0
    %1594 = vmatpush1.msra.mxu0 0.0
    %1595 = vmatprep.subr.mxu0 0.0
    %1596 = vmatpush1.msra.mxu0 0.0
    %1597 = vmatprep.subr.mxu0 0.0
    %1598 = vmatpush1.msra.mxu0 0.0
    %1599 = vmatprep.subr.mxu0 0.0
    %1600 = vmatpush1.msra.mxu0 0.0
    %1601 = vmatprep.subr.mxu0 0.0
    %1602 = vmatpush1.msra.mxu0 0.0
    %1603 = vmatprep.subr.mxu0 0.0
    %1604 = vmatpush1.msra.mxu0 0.0
    %1605 = vmatprep.subr.mxu0 0.0
    %1606 = vmatpush1.msra.mxu0 0.0
    %1607 = vmatprep.subr.mxu0 0.0
    %1608 = vmatpush1.msra.mxu0 0.0
    %1609 = vmatprep.subr.mxu0 0.0
    %1610 = vmatpush1.msra.mxu0 0.0
    %1611 = vmatprep.subr.mxu0 0.0
    %1612 = vmatpush1.msra.mxu0 0.0
    %1613 = vmatprep.subr.mxu0 0.0
    %1614 = vmatpush1.msra.mxu0 0.0
    %1615 = vmatprep.subr.mxu0 0.0
    %1616 = vmatpush1.msra.mxu0 0.0
    %1617 = vmatprep.subr.mxu0 0.0
    %1618 = vmatpush1.msra.mxu0 0.0
    %1619 = vmatprep.subr.mxu0 0.0
    %1620 = vmatpush1.msra.mxu0 0.0
    %1621 = vmatprep.subr.mxu0 0.0
    %1622 = vmatpush1.msra.mxu0 0.0
    %1623 = vmatprep.subr.mxu0 0.0
    %1624 = vmatpush1.msra.mxu0 0.0
    %1625 = vmatprep.subr.mxu0 0.0
    %1626 = vmatpush1.msra.mxu0 0.0
    %1627 = vmatprep.subr.mxu0 0.0
    %1628 = vmatpush1.msra.mxu0 0.0
    %1629 = vmatprep.subr.mxu0 0.0
    %1630 = vmatpush1.msra.mxu0 0.0
    %1631 = vmatprep.mubr.f32.mxu0 0.0
    %1632 = vmatmul.mubr.f32.gmra.mrb[0].mxu0 %v1565
    %v1633 = vpop.f32.mrb[0].mxu0
    %v1634 = vadd.f32 0.0, %v1633
    %v1635 = vpop.f32.mrb[0].mxu0
    %1636 = vdwg.mxu0
    %1638 = vrot.lane.b32.xlu0 %v1634, 16
    %v1639 = vpop.permute.xlu0 %1638
    %1641 = vst.msk [vmem:[#allocation2] sm:$0xff] %vm630, %v1639
    %v1643 = vsel %vm293, %v1195, 0
    %v1646 = vsel %vm293, %v1289, 0
    %1648 = vmatprep.subr.mxu0 0.0
    %1649 = vmatpush1.xpose.msra.mxu0 %v1646
    %1650 = vmatprep.subr.mxu0 0.0
    %1651 = vmatpush1.xpose.msra.mxu0 0.0
    %1652 = vmatprep.subr.mxu0 0.0
    %1653 = vmatpush1.xpose.msra.mxu0 0.0
    %1654 = vmatprep.subr.mxu0 0.0
    %1655 = vmatpush1.xpose.msra.mxu0 0.0
    %1656 = vmatprep.subr.mxu0 0.0
    %1657 = vmatpush1.xpose.msra.mxu0 0.0
    %1658 = vmatprep.subr.mxu0 0.0
    %1659 = vmatpush1.xpose.msra.mxu0 0.0
    %1660 = vmatprep.subr.mxu0 0.0
    %1661 = vmatpush1.xpose.msra.mxu0 0.0
    %1662 = vmatprep.subr.mxu0 0.0
    %1663 = vmatpush1.xpose.msra.mxu0 0.0
    %1664 = vmatprep.subr.mxu0 0.0
    %1665 = vmatpush1.xpose.msra.mxu0 0.0
    %1666 = vmatprep.subr.mxu0 0.0
    %1667 = vmatpush1.xpose.msra.mxu0 0.0
    %1668 = vmatprep.subr.mxu0 0.0
    %1669 = vmatpush1.xpose.msra.mxu0 0.0
    %1670 = vmatprep.subr.mxu0 0.0
    %1671 = vmatpush1.xpose.msra.mxu0 0.0
    %1672 = vmatprep.subr.mxu0 0.0
    %1673 = vmatpush1.xpose.msra.mxu0 0.0
    %1674 = vmatprep.subr.mxu0 0.0
    %1675 = vmatpush1.xpose.msra.mxu0 0.0
    %1676 = vmatprep.subr.mxu0 0.0
    %1677 = vmatpush1.xpose.msra.mxu0 0.0
    %1678 = vmatprep.subr.mxu0 0.0
    %1679 = vmatpush1.xpose.msra.mxu0 0.0
    %1680 = vmatprep.subr.mxu0 0.0
    %1681 = vmatpush1.xpose.msra.mxu0 0.0
    %1682 = vmatprep.subr.mxu0 0.0
    %1683 = vmatpush1.xpose.msra.mxu0 0.0
    %1684 = vmatprep.subr.mxu0 0.0
    %1685 = vmatpush1.xpose.msra.mxu0 0.0
    %1686 = vmatprep.subr.mxu0 0.0
    %1687 = vmatpush1.xpose.msra.mxu0 0.0
    %1688 = vmatprep.subr.mxu0 0.0
    %1689 = vmatpush1.xpose.msra.mxu0 0.0
    %1690 = vmatprep.subr.mxu0 0.0
    %1691 = vmatpush1.xpose.msra.mxu0 0.0
    %1692 = vmatprep.subr.mxu0 0.0
    %1693 = vmatpush1.xpose.msra.mxu0 0.0
    %1694 = vmatprep.subr.mxu0 0.0
    %1695 = vmatpush1.xpose.msra.mxu0 0.0
    %1696 = vmatprep.subr.mxu0 0.0
    %1697 = vmatpush1.xpose.msra.mxu0 0.0
    %1698 = vmatprep.subr.mxu0 0.0
    %1699 = vmatpush1.xpose.msra.mxu0 0.0
    %1700 = vmatprep.subr.mxu0 0.0
    %1701 = vmatpush1.xpose.msra.mxu0 0.0
    %1702 = vmatprep.subr.mxu0 0.0
    %1703 = vmatpush1.xpose.msra.mxu0 0.0
    %1704 = vmatprep.subr.mxu0 0.0
    %1705 = vmatpush1.xpose.msra.mxu0 0.0
    %1706 = vmatprep.subr.mxu0 0.0
    %1707 = vmatpush1.xpose.msra.mxu0 0.0
    %1708 = vmatprep.subr.mxu0 0.0
    %1709 = vmatpush1.xpose.msra.mxu0 0.0
    %1710 = vmatprep.subr.mxu0 0.0
    %1711 = vmatpush1.xpose.msra.mxu0 0.0
    %1712 = vmatprep.mubr.f32.mxu0 0.0
    %1713 = vmatmul.mubr.f32.gmra.mrb[0].mxu0 %v1643
    %v1714 = vpop.f32.mrb[0].mxu0
    %v1715 = vadd.f32 0.0, %v1714
    %v1716 = vpop.f32.mrb[0].mxu0
    %1717 = vdwg.mxu0
    %v1718 = vmul.f32 %v1715, 0.25
    %v1719 = vlaneseq
    %v1720 = vshrl.u32 %v1719, 7
    %v1721 = vsub.s32 1, %v1720
    %v1722 = vrot.slane %v1294, %v1721
    %v1723 = vadd.f32 %v1718, %v1722
    %v1724 = vsel %vm370, %v1723, -inf
    %1725 = vmax.xlane.f32.xlu0 %v1724
    %v1726 = vpop.xlane.xlu0 %1725
    %v1727 = vsub.f32 %v1723, %v1726
    %v1728 = vmul.f32 %v1727, 1.442695
    %v1729 = vpow.pop %v1728
    %v1730 = vsel %vm370, %v1729, 0.0
    %1731 = vadd.xlane.f32.xlu0 %v1730
    %v1732 = vpop.xlane.xlu0 %1731
    %v1733 = vrcp.pop %v1732
    %v1734 = vmul.f32 %v1729, %v1733
    %1735 = vrot.lane.b32.xlu0 %v1289, 96
    %v1736 = vpop.permute.xlu0 %1735
    %v1739 = vsel %vm370, %v1734, 0
    %1741 = vmatprep.subr.mxu0 0.0
    %1742 = vmatpush1.msra.mxu0 %v1736
    %1743 = vmatprep.subr.mxu0 0.0
    %1744 = vmatpush1.msra.mxu0 0.0
    %1745 = vmatprep.subr.mxu0 0.0
    %1746 = vmatpush1.msra.mxu0 0.0
    %1747 = vmatprep.subr.mxu0 0.0
    %1748 = vmatpush1.msra.mxu0 0.0
    %1749 = vmatprep.subr.mxu0 0.0
    %1750 = vmatpush1.msra.mxu0 0.0
    %1751 = vmatprep.subr.mxu0 0.0
    %1752 = vmatpush1.msra.mxu0 0.0
    %1753 = vmatprep.subr.mxu0 0.0
    %1754 = vmatpush1.msra.mxu0 0.0
    %1755 = vmatprep.subr.mxu0 0.0
    %1756 = vmatpush1.msra.mxu0 0.0
    %1757 = vmatprep.subr.mxu0 0.0
    %1758 = vmatpush1.msra.mxu0 0.0
    %1759 = vmatprep.subr.mxu0 0.0
    %1760 = vmatpush1.msra.mxu0 0.0
    %1761 = vmatprep.subr.mxu0 0.0
    %1762 = vmatpush1.msra.mxu0 0.0
    %1763 = vmatprep.subr.mxu0 0.0
    %1764 = vmatpush1.msra.mxu0 0.0
    %1765 = vmatprep.subr.mxu0 0.0
    %1766 = vmatpush1.msra.mxu0 0.0
    %1767 = vmatprep.subr.mxu0 0.0
    %1768 = vmatpush1.msra.mxu0 0.0
    %1769 = vmatprep.subr.mxu0 0.0
    %1770 = vmatpush1.msra.mxu0 0.0
    %1771 = vmatprep.subr.mxu0 0.0
    %1772 = vmatpush1.msra.mxu0 0.0
    %1773 = vmatprep.subr.mxu0 0.0
    %1774 = vmatpush1.msra.mxu0 0.0
    %1775 = vmatprep.subr.mxu0 0.0
    %1776 = vmatpush1.msra.mxu0 0.0
    %1777 = vmatprep.subr.mxu0 0.0
    %1778 = vmatpush1.msra.mxu0 0.0
    %1779 = vmatprep.subr.mxu0 0.0
    %1780 = vmatpush1.msra.mxu0 0.0
    %1781 = vmatprep.subr.mxu0 0.0
    %1782 = vmatpush1.msra.mxu0 0.0
    %1783 = vmatprep.subr.mxu0 0.0
    %1784 = vmatpush1.msra.mxu0 0.0
    %1785 = vmatprep.subr.mxu0 0.0
    %1786 = vmatpush1.msra.mxu0 0.0
    %1787 = vmatprep.subr.mxu0 0.0
    %1788 = vmatpush1.msra.mxu0 0.0
    %1789 = vmatprep.subr.mxu0 0.0
    %1790 = vmatpush1.msra.mxu0 0.0
    %1791 = vmatprep.subr.mxu0 0.0
    %1792 = vmatpush1.msra.mxu0 0.0
    %1793 = vmatprep.subr.mxu0 0.0
    %1794 = vmatpush1.msra.mxu0 0.0
    %1795 = vmatprep.subr.mxu0 0.0
    %1796 = vmatpush1.msra.mxu0 0.0
    %1797 = vmatprep.subr.mxu0 0.0
    %1798 = vmatpush1.msra.mxu0 0.0
    %1799 = vmatprep.subr.mxu0 0.0
    %1800 = vmatpush1.msra.mxu0 0.0
    %1801 = vmatprep.subr.mxu0 0.0
    %1802 = vmatpush1.msra.mxu0 0.0
    %1803 = vmatprep.subr.mxu0 0.0
    %1804 = vmatpush1.msra.mxu0 0.0
    %1805 = vmatprep.mubr.f32.mxu0 0.0
    %1806 = vmatmul.mubr.f32.gmra.mrb[0].mxu0 %v1739
    %v1807 = vpop.f32.mrb[0].mxu0
    %v1808 = vadd.f32 0.0, %v1807
    %v1809 = vpop.f32.mrb[0].mxu0
    %1810 = vdwg.mxu0
    %1811 = vst.msk [vmem:[#allocation2 + $0x8] sm:$0xff] %vm293, %v1808
    %1812 = vrot.lane.b32.xlu0 %v1195, 112
    %v1813 = vpop.permute.xlu0 %1812
    %1814 = vrot.lane.b32.xlu0 %v1289, 112
    %v1815 = vpop.permute.xlu0 %1814
    %v1816 = vsel %vm293, %v1813, 0
    %v1818 = vsel %vm293, %v1815, 0
    %1820 = vmatprep.subr.mxu0 0.0
    %1821 = vmatpush1.xpose.msra.mxu0 %v1818
    %1822 = vmatprep.subr.mxu0 0.0
    %1823 = vmatpush1.xpose.msra.mxu0 0.0
    %1824 = vmatprep.subr.mxu0 0.0
    %1825 = vmatpush1.xpose.msra.mxu0 0.0
    %1826 = vmatprep.subr.mxu0 0.0
    %1827 = vmatpush1.xpose.msra.mxu0 0.0
    %1828 = vmatprep.subr.mxu0 0.0
    %1829 = vmatpush1.xpose.msra.mxu0 0.0
    %1830 = vmatprep.subr.mxu0 0.0
    %1831 = vmatpush1.xpose.msra.mxu0 0.0
    %1832 = vmatprep.subr.mxu0 0.0
    %1833 = vmatpush1.xpose.msra.mxu0 0.0
    %1834 = vmatprep.subr.mxu0 0.0
    %1835 = vmatpush1.xpose.msra.mxu0 0.0
    %1836 = vmatprep.subr.mxu0 0.0
    %1837 = vmatpush1.xpose.msra.mxu0 0.0
    %1838 = vmatprep.subr.mxu0 0.0
    %1839 = vmatpush1.xpose.msra.mxu0 0.0
    %1840 = vmatprep.subr.mxu0 0.0
    %1841 = vmatpush1.xpose.msra.mxu0 0.0
    %1842 = vmatprep.subr.mxu0 0.0
    %1843 = vmatpush1.xpose.msra.mxu0 0.0
    %1844 = vmatprep.subr.mxu0 0.0
    %1845 = vmatpush1.xpose.msra.mxu0 0.0
    %1846 = vmatprep.subr.mxu0 0.0
    %1847 = vmatpush1.xpose.msra.mxu0 0.0
    %1848 = vmatprep.subr.mxu0 0.0
    %1849 = vmatpush1.xpose.msra.mxu0 0.0
    %1850 = vmatprep.subr.mxu0 0.0
    %1851 = vmatpush1.xpose.msra.mxu0 0.0
    %1852 = vmatprep.subr.mxu0 0.0
    %1853 = vmatpush1.xpose.msra.mxu0 0.0
    %1854 = vmatprep.subr.mxu0 0.0
    %1855 = vmatpush1.xpose.msra.mxu0 0.0
    %1856 = vmatprep.subr.mxu0 0.0
    %1857 = vmatpush1.xpose.msra.mxu0 0.0
    %1858 = vmatprep.subr.mxu0 0.0
    %1859 = vmatpush1.xpose.msra.mxu0 0.0
    %1860 = vmatprep.subr.mxu0 0.0
    %1861 = vmatpush1.xpose.msra.mxu0 0.0
    %1862 = vmatprep.subr.mxu0 0.0
    %1863 = vmatpush1.xpose.msra.mxu0 0.0
    %1864 = vmatprep.subr.mxu0 0.0
    %1865 = vmatpush1.xpose.msra.mxu0 0.0
    %1866 = vmatprep.subr.mxu0 0.0
    %1867 = vmatpush1.xpose.msra.mxu0 0.0
    %1868 = vmatprep.subr.mxu0 0.0
    %1869 = vmatpush1.xpose.msra.mxu0 0.0
    %1870 = vmatprep.subr.mxu0 0.0
    %1871 = vmatpush1.xpose.msra.mxu0 0.0
    %1872 = vmatprep.subr.mxu0 0.0
    %1873 = vmatpush1.xpose.msra.mxu0 0.0
    %1874 = vmatprep.subr.mxu0 0.0
    %1875 = vmatpush1.xpose.msra.mxu0 0.0
    %1876 = vmatprep.subr.mxu0 0.0
    %1877 = vmatpush1.xpose.msra.mxu0 0.0
    %1878 = vmatprep.subr.mxu0 0.0
    %1879 = vmatpush1.xpose.msra.mxu0 0.0
    %1880 = vmatprep.subr.mxu0 0.0
    %1881 = vmatpush1.xpose.msra.mxu0 0.0
    %1882 = vmatprep.subr.mxu0 0.0
    %1883 = vmatpush1.xpose.msra.mxu0 0.0
    %1884 = vmatprep.mubr.f32.mxu0 0.0
    %1885 = vmatmul.mubr.f32.gmra.mrb[0].mxu0 %v1816
    %v1886 = vpop.f32.mrb[0].mxu0
    %v1887 = vadd.f32 0.0, %v1886
    %v1888 = vpop.f32.mrb[0].mxu0
    %1889 = vdwg.mxu0
    %v1890 = vmul.f32 %v1887, 0.25
    %v1891 = vadd.f32 %v1890, %v1722
    %v1892 = vsel %vm370, %v1891, -inf
    %1893 = vmax.xlane.f32.xlu0 %v1892
    %v1894 = vpop.xlane.xlu0 %1893
    %v1895 = vsub.f32 %v1891, %v1894
    %v1896 = vmul.f32 %v1895, 1.442695
    %v1897 = vpow.pop %v1896
    %v1898 = vsel %vm370, %v1897, 0.0
    %1899 = vadd.xlane.f32.xlu0 %v1898
    %v1900 = vpop.xlane.xlu0 %1899
    %v1901 = vrcp.pop %v1900
    %v1902 = vmul.f32 %v1897, %v1901
    %1903 = vrot.lane.b32.xlu0 %v1289, 80
    %v1904 = vpop.permute.xlu0 %1903
    %v1907 = vsel %vm370, %v1902, 0
    %1909 = vmatprep.subr.mxu0 0.0
    %1910 = vmatpush1.msra.mxu0 %v1904
    %1911 = vmatprep.subr.mxu0 0.0
    %1912 = vmatpush1.msra.mxu0 0.0
    %1913 = vmatprep.subr.mxu0 0.0
    %1914 = vmatpush1.msra.mxu0 0.0
    %1915 = vmatprep.subr.mxu0 0.0
    %1916 = vmatpush1.msra.mxu0 0.0
    %1917 = vmatprep.subr.mxu0 0.0
    %1918 = vmatpush1.msra.mxu0 0.0
    %1919 = vmatprep.subr.mxu0 0.0
    %1920 = vmatpush1.msra.mxu0 0.0
    %1921 = vmatprep.subr.mxu0 0.0
    %1922 = vmatpush1.msra.mxu0 0.0
    %1923 = vmatprep.subr.mxu0 0.0
    %1924 = vmatpush1.msra.mxu0 0.0
    %1925 = vmatprep.subr.mxu0 0.0
    %1926 = vmatpush1.msra.mxu0 0.0
    %1927 = vmatprep.subr.mxu0 0.0
    %1928 = vmatpush1.msra.mxu0 0.0
    %1929 = vmatprep.subr.mxu0 0.0
    %1930 = vmatpush1.msra.mxu0 0.0
    %1931 = vmatprep.subr.mxu0 0.0
    %1932 = vmatpush1.msra.mxu0 0.0
    %1933 = vmatprep.subr.mxu0 0.0
    %1934 = vmatpush1.msra.mxu0 0.0
    %1935 = vmatprep.subr.mxu0 0.0
    %1936 = vmatpush1.msra.mxu0 0.0
    %1937 = vmatprep.subr.mxu0 0.0
    %1938 = vmatpush1.msra.mxu0 0.0
    %1939 = vmatprep.subr.mxu0 0.0
    %1940 = vmatpush1.msra.mxu0 0.0
    %1941 = vmatprep.subr.mxu0 0.0
    %1942 = vmatpush1.msra.mxu0 0.0
    %1943 = vmatprep.subr.mxu0 0.0
    %1944 = vmatpush1.msra.mxu0 0.0
    %1945 = vmatprep.subr.mxu0 0.0
    %1946 = vmatpush1.msra.mxu0 0.0
    %1947 = vmatprep.subr.mxu0 0.0
    %1948 = vmatpush1.msra.mxu0 0.0
    %1949 = vmatprep.subr.mxu0 0.0
    %1950 = vmatpush1.msra.mxu0 0.0
    %1951 = vmatprep.subr.mxu0 0.0
    %1952 = vmatpush1.msra.mxu0 0.0
    %1953 = vmatprep.subr.mxu0 0.0
    %1954 = vmatpush1.msra.mxu0 0.0
    %1955 = vmatprep.subr.mxu0 0.0
    %1956 = vmatpush1.msra.mxu0 0.0
    %1957 = vmatprep.subr.mxu0 0.0
    %1958 = vmatpush1.msra.mxu0 0.0
    %1959 = vmatprep.subr.mxu0 0.0
    %1960 = vmatpush1.msra.mxu0 0.0
    %1961 = vmatprep.subr.mxu0 0.0
    %1962 = vmatpush1.msra.mxu0 0.0
    %1963 = vmatprep.subr.mxu0 0.0
    %1964 = vmatpush1.msra.mxu0 0.0
    %1965 = vmatprep.subr.mxu0 0.0
    %1966 = vmatpush1.msra.mxu0 0.0
    %1967 = vmatprep.subr.mxu0 0.0
    %1968 = vmatpush1.msra.mxu0 0.0
    %1969 = vmatprep.subr.mxu0 0.0
    %1970 = vmatpush1.msra.mxu0 0.0
    %1971 = vmatprep.subr.mxu0 0.0
    %1972 = vmatpush1.msra.mxu0 0.0
    %1973 = vmatprep.mubr.f32.mxu0 0.0
    %1974 = vmatmul.mubr.f32.gmra.mrb[0].mxu0 %v1907
    %v1975 = vpop.f32.mrb[0].mxu0
    %v1976 = vadd.f32 0.0, %v1975
    %v1977 = vpop.f32.mrb[0].mxu0
    %1978 = vdwg.mxu0
    %1980 = vrot.lane.b32.xlu0 %v1976, 16
    %v1981 = vpop.permute.xlu0 %1980
    %1983 = vst.msk [vmem:[#allocation2 + $0x8] sm:$0xff] %vm630, %v1981
    %v1984 = vld [vmem:[#allocation2] sm:$0xff]
    %v1985 = vld [vmem:[#allocation2 + $0x8] sm:$0xff]
    %v1987 = vlaneseq
    %v1988 = vshrl.u32 %v1987, 7
    %v1989 = vsub.s32 0, %v1988
    %v1990 = vrot.slane %v1299, %v1989
    %v1993 = vsel %vm127, %v1984, 0
    %v1996 = vsel %vm127, %v1985, 0
    %1998 = vmatprep.subr.mxu0 0.0
    %1999 = vmatpush1.msra.mxu0 %v1295
    %2000 = vmatprep.subr.mxu0 0.0
    %2001 = vmatpush1.msra.mxu0 %v1296
    %2002 = vmatprep.subr.mxu0 0.0
    %2003 = vmatpush1.msra.mxu0 %v1297
    %2004 = vmatprep.subr.mxu0 0.0
    %2005 = vmatpush1.msra.mxu0 %v1298
    %2006 = vmatprep.subr.mxu0 0.0
    %2007 = vmatpush1.msra.mxu0 0.0
    %2008 = vmatprep.subr.mxu0 0.0
    %2009 = vmatpush1.msra.mxu0 0.0
    %2010 = vmatprep.subr.mxu0 0.0
    %2011 = vmatpush1.msra.mxu0 0.0
    %2012 = vmatprep.subr.mxu0 0.0
    %2013 = vmatpush1.msra.mxu0 0.0
    %2014 = vmatprep.subr.mxu0 0.0
    %2015 = vmatpush1.msra.mxu0 0.0
    %2016 = vmatprep.subr.mxu0 0.0
    %2017 = vmatpush1.msra.mxu0 0.0
    %2018 = vmatprep.subr.mxu0 0.0
    %2019 = vmatpush1.msra.mxu0 0.0
    %2020 = vmatprep.subr.mxu0 0.0
    %2021 = vmatpush1.msra.mxu0 0.0
    %2022 = vmatprep.subr.mxu0 0.0
    %2023 = vmatpush1.msra.mxu0 0.0
    %2024 = vmatprep.subr.mxu0 0.0
    %2025 = vmatpush1.msra.mxu0 0.0
    %2026 = vmatprep.subr.mxu0 0.0
    %2027 = vmatpush1.msra.mxu0 0.0
    %2028 = vmatprep.subr.mxu0 0.0
    %2029 = vmatpush1.msra.mxu0 0.0
    %2030 = vmatprep.subr.mxu0 0.0
    %2031 = vmatpush1.msra.mxu0 0.0
    %2032 = vmatprep.subr.mxu0 0.0
    %2033 = vmatpush1.msra.mxu0 0.0
    %2034 = vmatprep.subr.mxu0 0.0
    %2035 = vmatpush1.msra.mxu0 0.0
    %2036 = vmatprep.subr.mxu0 0.0
    %2037 = vmatpush1.msra.mxu0 0.0
    %2038 = vmatprep.subr.mxu0 0.0
    %2039 = vmatpush1.msra.mxu0 0.0
    %2040 = vmatprep.subr.mxu0 0.0
    %2041 = vmatpush1.msra.mxu0 0.0
    %2042 = vmatprep.subr.mxu0 0.0
    %2043 = vmatpush1.msra.mxu0 0.0
    %2044 = vmatprep.subr.mxu0 0.0
    %2045 = vmatpush1.msra.mxu0 0.0
    %2046 = vmatprep.subr.mxu0 0.0
    %2047 = vmatpush1.msra.mxu0 0.0
    %2048 = vmatprep.subr.mxu0 0.0
    %2049 = vmatpush1.msra.mxu0 0.0
    %2050 = vmatprep.subr.mxu0 0.0
    %2051 = vmatpush1.msra.mxu0 0.0
    %2052 = vmatprep.subr.mxu0 0.0
    %2053 = vmatpush1.msra.mxu0 0.0
    %2054 = vmatprep.subr.mxu0 0.0
    %2055 = vmatpush1.msra.mxu0 0.0
    %2056 = vmatprep.subr.mxu0 0.0
    %2057 = vmatpush1.msra.mxu0 0.0
    %2058 = vmatprep.subr.mxu0 0.0
    %2059 = vmatpush1.msra.mxu0 0.0
    %2060 = vmatprep.subr.mxu0 0.0
    %2061 = vmatpush1.msra.mxu0 0.0
    %2062 = vmatprep.mubr.f32.mxu0 0.0
    %2063 = vmatmul.mubr.f32.gmra.mrb[0].mxu0 %v1993
    %v2064 = vpop.f32.mrb[0].mxu0
    %v2065 = vadd.f32 %v1990, %v2064
    %v2066 = vpop.f32.mrb[0].mxu0
    %2067 = vmatprep.mubr.f32.mxu0 0.0
    %2068 = vmatmul.mubr.f32.gmra.mrb[0].mxu0 %v1996
    %v2069 = vpop.f32.mrb[0].mxu0
    %v2070 = vadd.f32 %v1990, %v2069
    %v2071 = vpop.f32.mrb[0].mxu0
    %2072 = vdwg.mxu0
    %v2073 = vadd.f32 %v1060, %v2065
    %v2074 = vadd.f32 %v1061, %v2070
    %v2075 = vld [vmem:[%s37] sm:$0x1]
    %v2076 = vld [vmem:[%s39] sm:$0x1]
    %v2077 = vsel %vm127, %v2073, 0.0
    %2078 = vadd.xlane.f32.xlu0 %v2077
    %v2079 = vpop.xlane.xlu0 %2078
    %v2080 = vsel %vm127, %v2074, 0.0
    %2081 = vadd.xlane.f32.xlu0 %v2080
    %v2082 = vpop.xlane.xlu0 %2081
    %v2083 = vmul.f32 %v2079, %v134
    %v2084 = vmul.f32 %v2082, %v134
    %v2085 = vsub.f32 %v2073, %v2083
    %v2086 = vsub.f32 %v2074, %v2084
    %v2087 = vmul.f32 %v2085, %v2085
    %v2088 = vmul.f32 %v2086, %v2086
    %v2089 = vsel %vm127, %v2087, 0.0
    %2090 = vadd.xlane.f32.xlu0 %v2089
    %v2091 = vpop.xlane.xlu0 %2090
    %v2092 = vsel %vm127, %v2088, 0.0
    %2093 = vadd.xlane.f32.xlu0 %v2092
    %v2094 = vpop.xlane.xlu0 %2093
    %v2095 = vmul.f32 %v2091, %v134
    %v2096 = vmul.f32 %v2094, %v134
    %v2097 = vadd.f32 %v2095, 1e-05
    %v2098 = vadd.f32 %v2096, 1e-05
    %v2099 = vrsqrt.pop %v2097
    %v2100 = vrsqrt.pop %v2098
    %v2101 = vmul.f32 %v2085, %v2099
    %v2102 = vmul.f32 %v2086, %v2100
    %v2104 = vlaneseq
    %v2105 = vshrl.u32 %v2104, 7
    %v2106 = vsub.s32 0, %v2105
    %v2107 = vrot.slane %v2075, %v2106
    %v2109 = vmul.f32 %v2101, %v2107
    %v2110 = vmul.f32 %v2102, %v2107
    %v2112 = vlaneseq
    %v2113 = vshrl.u32 %v2112, 7
    %v2114 = vsub.s32 0, %v2113
    %v2115 = vrot.slane %v2076, %v2114
    %v2117 = vadd.f32 %v2109, %v2115
    %v2118 = vadd.f32 %v2110, %v2115
    %v2119 = vld [vmem:[%s41] sm:$0xff]
    %v2120 = vld [vmem:[%s41 + $0x8] sm:$0xff]
    %v2121 = vld [vmem:[%s41 + $0x10] sm:$0xff]
    %v2122 = vld [vmem:[%s41 + $0x18] sm:$0xff]
    %v2123 = vld [vmem:[%s43] sm:$0x1]
    %v2125 = vlaneseq
    %v2126 = vshrl.u32 %v2125, 7
    %v2127 = vsub.s32 0, %v2126
    %v2128 = vrot.slane %v2123, %v2127
    %v2131 = vsel %vm127, %v2117, 0
    %v2134 = vsel %vm127, %v2118, 0
    %2136 = vmatprep.subr.mxu0 0.0
    %2137 = vmatpush1.msra.mxu0 %v2119
    %2138 = vmatprep.subr.mxu0 0.0
    %2139 = vmatpush1.msra.mxu0 %v2120
    %2140 = vmatprep.subr.mxu0 0.0
    %2141 = vmatpush1.msra.mxu0 %v2121
    %2142 = vmatprep.subr.mxu0 0.0
    %2143 = vmatpush1.msra.mxu0 %v2122
    %2144 = vmatprep.subr.mxu0 0.0
    %2145 = vmatpush1.msra.mxu0 0.0
    %2146 = vmatprep.subr.mxu0 0.0
    %2147 = vmatpush1.msra.mxu0 0.0
    %2148 = vmatprep.subr.mxu0 0.0
    %2149 = vmatpush1.msra.mxu0 0.0
    %2150 = vmatprep.subr.mxu0 0.0
    %2151 = vmatpush1.msra.mxu0 0.0
    %2152 = vmatprep.subr.mxu0 0.0
    %2153 = vmatpush1.msra.mxu0 0.0
    %2154 = vmatprep.subr.mxu0 0.0
    %2155 = vmatpush1.msra.mxu0 0.0
    %2156 = vmatprep.subr.mxu0 0.0
    %2157 = vmatpush1.msra.mxu0 0.0
    %2158 = vmatprep.subr.mxu0 0.0
    %2159 = vmatpush1.msra.mxu0 0.0
    %2160 = vmatprep.subr.mxu0 0.0
    %2161 = vmatpush1.msra.mxu0 0.0
    %2162 = vmatprep.subr.mxu0 0.0
    %2163 = vmatpush1.msra.mxu0 0.0
    %2164 = vmatprep.subr.mxu0 0.0
    %2165 = vmatpush1.msra.mxu0 0.0
    %2166 = vmatprep.subr.mxu0 0.0
    %2167 = vmatpush1.msra.mxu0 0.0
    %2168 = vmatprep.subr.mxu0 0.0
    %2169 = vmatpush1.msra.mxu0 0.0
    %2170 = vmatprep.subr.mxu0 0.0
    %2171 = vmatpush1.msra.mxu0 0.0
    %2172 = vmatprep.subr.mxu0 0.0
    %2173 = vmatpush1.msra.mxu0 0.0
    %2174 = vmatprep.subr.mxu0 0.0
    %2175 = vmatpush1.msra.mxu0 0.0
    %2176 = vmatprep.subr.mxu0 0.0
    %2177 = vmatpush1.msra.mxu0 0.0
    %2178 = vmatprep.subr.mxu0 0.0
    %2179 = vmatpush1.msra.mxu0 0.0
    %2180 = vmatprep.subr.mxu0 0.0
    %2181 = vmatpush1.msra.mxu0 0.0
    %2182 = vmatprep.subr.mxu0 0.0
    %2183 = vmatpush1.msra.mxu0 0.0
    %2184 = vmatprep.subr.mxu0 0.0
    %2185 = vmatpush1.msra.mxu0 0.0
    %2186 = vmatprep.subr.mxu0 0.0
    %2187 = vmatpush1.msra.mxu0 0.0
    %2188 = vmatprep.subr.mxu0 0.0
    %2189 = vmatpush1.msra.mxu0 0.0
    %2190 = vmatprep.subr.mxu0 0.0
    %2191 = vmatpush1.msra.mxu0 0.0
    %2192 = vmatprep.subr.mxu0 0.0
    %2193 = vmatpush1.msra.mxu0 0.0
    %2194 = vmatprep.subr.mxu0 0.0
    %2195 = vmatpush1.msra.mxu0 0.0
    %2196 = vmatprep.subr.mxu0 0.0
    %2197 = vmatpush1.msra.mxu0 0.0
    %2198 = vmatprep.subr.mxu0 0.0
    %2199 = vmatpush1.msra.mxu0 0.0
    %2200 = vmatprep.mubr.f32.mxu0 0.0
    %2201 = vmatmul.mubr.f32.gmra.mrb[0].mxu0 %v2131
    %v2202 = vpop.f32.mrb[0].mxu0
    %v2203 = vadd.f32 %v2128, %v2202
    %v2204 = vpop.f32.mrb[0].mxu0
    %2205 = vmatprep.mubr.f32.mxu0 0.0
    %2206 = vmatmul.mubr.f32.gmra.mrb[0].mxu0 %v2134
    %v2207 = vpop.f32.mrb[0].mxu0
    %v2208 = vadd.f32 %v2128, %v2207
    %v2209 = vpop.f32.mrb[0].mxu0
    %2210 = vdwg.mxu0
    %v2211 = vmul.f32 %v2203, %v2203
    %v2212 = vmul.f32 %v2208, %v2208
    %v2213 = vmul.f32 %v2203, %v2211
    %v2214 = vmul.f32 %v2208, %v2212
    %v2215 = vmul.f32 %v2213, 0.044715
    %v2216 = vmul.f32 %v2214, 0.044715
    %v2217 = vadd.f32 %v2203, %v2215
    %v2218 = vadd.f32 %v2208, %v2216
    %v2219 = vmul.f32 %v2217, 0.7978846
    %v2220 = vmul.f32 %v2218, 0.7978846
    %v2221 = vtanh.pop %v2219
    %v2222 = vtanh.pop %v2220
    %v2223 = vadd.f32 %v2221, 1.0
    %v2224 = vadd.f32 %v2222, 1.0
    %v2225 = vmul.f32 %v2223, 0.5
    %v2226 = vmul.f32 %v2224, 0.5
    %v2227 = vmul.f32 %v2203, %v2225
    %v2228 = vmul.f32 %v2208, %v2226
    %v2229 = vld [vmem:[%s45] sm:$0xff]
    %v2230 = vld [vmem:[%s45 + $0x8] sm:$0xff]
    %v2231 = vld [vmem:[%s45 + $0x10] sm:$0xff]
    %v2232 = vld [vmem:[%s45 + $0x18] sm:$0xff]
    %v2233 = vld [vmem:[%s45 + $0x20] sm:$0xff]
    %v2234 = vld [vmem:[%s45 + $0x28] sm:$0xff]
    %v2235 = vld [vmem:[%s45 + $0x30] sm:$0xff]
    %v2236 = vld [vmem:[%s45 + $0x38] sm:$0xff]
    %v2237 = vld [vmem:[%s45 + $0x40] sm:$0xff]
    %v2238 = vld [vmem:[%s45 + $0x48] sm:$0xff]
    %v2239 = vld [vmem:[%s45 + $0x50] sm:$0xff]
    %v2240 = vld [vmem:[%s45 + $0x58] sm:$0xff]
    %v2241 = vld [vmem:[%s45 + $0x60] sm:$0xff]
    %v2242 = vld [vmem:[%s45 + $0x68] sm:$0xff]
    %v2243 = vld [vmem:[%s45 + $0x70] sm:$0xff]
    %v2244 = vld [vmem:[%s45 + $0x78] sm:$0xff]
    %2245 = vmatprep.subr.mxu0 0.0
    %2246 = vmatpush1.msra.mxu0 %v2229
    %2247 = vmatprep.subr.mxu0 0.0
    %2248 = vmatpush1.msra.mxu0 %v2230
    %2249 = vmatprep.subr.mxu0 0.0
    %2250 = vmatpush1.msra.mxu0 %v2231
    %2251 = vmatprep.subr.mxu0 0.0
    %2252 = vmatpush1.msra.mxu0 %v2232
    %2253 = vmatprep.subr.mxu0 0.0
    %2254 = vmatpush1.msra.mxu0 %v2233
    %2255 = vmatprep.subr.mxu0 0.0
    %2256 = vmatpush1.msra.mxu0 %v2234
    %2257 = vmatprep.subr.mxu0 0.0
    %2258 = vmatpush1.msra.mxu0 %v2235
    %2259 = vmatprep.subr.mxu0 0.0
    %2260 = vmatpush1.msra.mxu0 %v2236
    %2261 = vmatprep.subr.mxu0 0.0
    %2262 = vmatpush1.msra.mxu0 %v2237
    %2263 = vmatprep.subr.mxu0 0.0
    %2264 = vmatpush1.msra.mxu0 %v2238
    %2265 = vmatprep.subr.mxu0 0.0
    %2266 = vmatpush1.msra.mxu0 %v2239
    %2267 = vmatprep.subr.mxu0 0.0
    %2268 = vmatpush1.msra.mxu0 %v2240
    %2269 = vmatprep.subr.mxu0 0.0
    %2270 = vmatpush1.msra.mxu0 %v2241
    %2271 = vmatprep.subr.mxu0 0.0
    %2272 = vmatpush1.msra.mxu0 %v2242
    %2273 = vmatprep.subr.mxu0 0.0
    %2274 = vmatpush1.msra.mxu0 %v2243
    %2275 = vmatprep.subr.mxu0 0.0
    %2276 = vmatpush1.msra.mxu0 %v2244
    %2277 = vmatprep.subr.mxu0 0.0
    %2278 = vmatpush1.msra.mxu0 0.0
    %2279 = vmatprep.subr.mxu0 0.0
    %2280 = vmatpush1.msra.mxu0 0.0
    %2281 = vmatprep.subr.mxu0 0.0
    %2282 = vmatpush1.msra.mxu0 0.0
    %2283 = vmatprep.subr.mxu0 0.0
    %2284 = vmatpush1.msra.mxu0 0.0
    %2285 = vmatprep.subr.mxu0 0.0
    %2286 = vmatpush1.msra.mxu0 0.0
    %2287 = vmatprep.subr.mxu0 0.0
    %2288 = vmatpush1.msra.mxu0 0.0
    %2289 = vmatprep.subr.mxu0 0.0
    %2290 = vmatpush1.msra.mxu0 0.0
    %2291 = vmatprep.subr.mxu0 0.0
    %2292 = vmatpush1.msra.mxu0 0.0
    %2293 = vmatprep.subr.mxu0 0.0
    %2294 = vmatpush1.msra.mxu0 0.0
    %2295 = vmatprep.subr.mxu0 0.0
    %2296 = vmatpush1.msra.mxu0 0.0
    %2297 = vmatprep.subr.mxu0 0.0
    %2298 = vmatpush1.msra.mxu0 0.0
    %2299 = vmatprep.subr.mxu0 0.0
    %2300 = vmatpush1.msra.mxu0 0.0
    %2301 = vmatprep.subr.mxu0 0.0
    %2302 = vmatpush1.msra.mxu0 0.0
    %2303 = vmatprep.subr.mxu0 0.0
    %2304 = vmatpush1.msra.mxu0 0.0
    %2305 = vmatprep.subr.mxu0 0.0
    %2306 = vmatpush1.msra.mxu0 0.0
    %2307 = vmatprep.subr.mxu0 0.0
    %2308 = vmatpush1.msra.mxu0 0.0
    %2309 = vmatprep.mubr.f32.mxu0 0.0
    %2310 = vmatmul.mubr.f32.gmra.mrb[0].mxu0 %v2227
    %v2311 = vpop.f32.mrb[0].mxu0
    %v2312 = vadd.f32 0.0, %v2311
    %v2313 = vpop.f32.mrb[0].mxu0
    %2314 = vmatprep.mubr.f32.mxu0 0.0
    %2315 = vmatmul.mubr.f32.gmra.mrb[0].mxu0 %v2228
    %v2316 = vpop.f32.mrb[0].mxu0
    %v2317 = vadd.f32 0.0, %v2316
    %v2318 = vpop.f32.mrb[0].mxu0
    %2319 = vdwg.mxu0
    %v2320 = vadd.f32 %v2073, %v2312
    %v2321 = vadd.f32 %v2074, %v2317
    %v2322 = vld [vmem:[%s47] sm:$0x1]
    %v2324 = vlaneseq
    %v2325 = vshrl.u32 %v2324, 7
    %v2326 = vsub.s32 0, %v2325
    %v2327 = vrot.slane %v2322, %v2326
    %v2329 = vadd.f32 %v2320, %v2327
    %v2330 = vadd.f32 %v2321, %v2327
    %v2331 = vld [vmem:[%s49] sm:$0x1]
    %v2332 = vld [vmem:[%s51] sm:$0x1]
    %v2333 = vsel %vm127, %v2329, 0.0
    %2334 = vadd.xlane.f32.xlu0 %v2333
    %v2335 = vpop.xlane.xlu0 %2334
    %v2336 = vsel %vm127, %v2330, 0.0
    %2337 = vadd.xlane.f32.xlu0 %v2336
    %v2338 = vpop.xlane.xlu0 %2337
    %v2339 = vmul.f32 %v2335, %v134
    %v2340 = vmul.f32 %v2338, %v134
    %v2341 = vsub.f32 %v2329, %v2339
    %v2342 = vsub.f32 %v2330, %v2340
    %v2343 = vmul.f32 %v2341, %v2341
    %v2344 = vmul.f32 %v2342, %v2342
    %v2345 = vsel %vm127, %v2343, 0.0
    %2346 = vadd.xlane.f32.xlu0 %v2345
    %v2347 = vpop.xlane.xlu0 %2346
    %v2348 = vsel %vm127, %v2344, 0.0
    %2349 = vadd.xlane.f32.xlu0 %v2348
    %v2350 = vpop.xlane.xlu0 %2349
    %v2351 = vmul.f32 %v2347, %v134
    %v2352 = vmul.f32 %v2350, %v134
    %v2353 = vadd.f32 %v2351, 1e-05
    %v2354 = vadd.f32 %v2352, 1e-05
    %v2355 = vrsqrt.pop %v2353
    %v2356 = vrsqrt.pop %v2354
    %v2357 = vmul.f32 %v2341, %v2355
    %v2358 = vmul.f32 %v2342, %v2356
    %v2360 = vlaneseq
    %v2361 = vshrl.u32 %v2360, 7
    %v2362 = vsub.s32 0, %v2361
    %v2363 = vrot.slane %v2331, %v2362
    %v2365 = vmul.f32 %v2357, %v2363
    %v2366 = vmul.f32 %v2358, %v2363
    %v2368 = vlaneseq
    %v2369 = vshrl.u32 %v2368, 7
    %v2370 = vsub.s32 0, %v2369
    %v2371 = vrot.slane %v2332, %v2370
    %v2373 = vadd.f32 %v2365, %v2371
    %v2374 = vadd.f32 %v2366, %v2371
    %v2375 = vld [vmem:[%s53] sm:$0xff]
    %v2376 = vld [vmem:[%s53 + $0x8] sm:$0xff]
    %v2377 = vld [vmem:[%s53 + $0x10] sm:$0xff]
    %v2378 = vld [vmem:[%s53 + $0x18] sm:$0xff]
    %v2379 = vld [vmem:[%s53 + $0x20] sm:$0xff]
    %v2380 = vld [vmem:[%s53 + $0x28] sm:$0xff]
    %v2381 = vld [vmem:[%s53 + $0x30] sm:$0xff]
    %v2382 = vld [vmem:[%s53 + $0x38] sm:$0xff]
    %v2384 = vsel %vm127, %v2373, 0
    %v2387 = vsel %vm127, %v2374, 0
    %v2390 = vsel %vm127, %v2375, 0
    %v2393 = vsel %vm127, %v2376, 0
    %v2396 = vsel %vm127, %v2377, 0
    %v2399 = vsel %vm127, %v2378, 0
    %v2402 = vsel %vm127, %v2379, 0
    %v2405 = vsel %vm127, %v2380, 0
    %v2408 = vsel %vm127, %v2381, 0
    %v2411 = vsel %vm127, %v2382, 0
    %2413 = vmatprep.subr.mxu0 0.0
    %2414 = vmatpush1.xpose.msra.mxu0 %v2390
    %2415 = vmatprep.subr.mxu0 0.0
    %2416 = vmatpush1.xpose.msra.mxu0 %v2393
    %2417 = vmatprep.subr.mxu0 0.0
    %2418 = vmatpush1.xpose.msra.mxu0 %v2396
    %2419 = vmatprep.subr.mxu0 0.0
    %2420 = vmatpush1.xpose.msra.mxu0 %v2399
    %2421 = vmatprep.subr.mxu0 0.0
    %2422 = vmatpush1.xpose.msra.mxu0 %v2402
    %2423 = vmatprep.subr.mxu0 0.0
    %2424 = vmatpush1.xpose.msra.mxu0 %v2405
    %2425 = vmatprep.subr.mxu0 0.0
    %2426 = vmatpush1.xpose.msra.mxu0 %v2408
    %2427 = vmatprep.subr.mxu0 0.0
    %2428 = vmatpush1.xpose.msra.mxu0 %v2411
    %2429 = vmatprep.subr.mxu0 0.0
    %2430 = vmatpush1.xpose.msra.mxu0 0.0
    %2431 = vmatprep.subr.mxu0 0.0
    %2432 = vmatpush1.xpose.msra.mxu0 0.0
    %2433 = vmatprep.subr.mxu0 0.0
    %2434 = vmatpush1.xpose.msra.mxu0 0.0
    %2435 = vmatprep.subr.mxu0 0.0
    %2436 = vmatpush1.xpose.msra.mxu0 0.0
    %2437 = vmatprep.subr.mxu0 0.0
    %2438 = vmatpush1.xpose.msra.mxu0 0.0
    %2439 = vmatprep.subr.mxu0 0.0
    %2440 = vmatpush1.xpose.msra.mxu0 0.0
    %2441 = vmatprep.subr.mxu0 0.0
    %2442 = vmatpush1.xpose.msra.mxu0 0.0
    %2443 = vmatprep.subr.mxu0 0.0
    %2444 = vmatpush1.xpose.msra.mxu0 0.0
    %2445 = vmatprep.subr.mxu0 0.0
    %2446 = vmatpush1.xpose.msra.mxu0 0.0
    %2447 = vmatprep.subr.mxu0 0.0
    %2448 = vmatpush1.xpose.msra.mxu0 0.0
    %2449 = vmatprep.subr.mxu0 0.0
    %2450 = vmatpush1.xpose.msra.mxu0 0.0
    %2451 = vmatprep.subr.mxu0 0.0
    %2452 = vmatpush1.xpose.msra.mxu0 0.0
    %2453 = vmatprep.subr.mxu0 0.0
    %2454 = vmatpush1.xpose.msra.mxu0 0.0
    %2455 = vmatprep.subr.mxu0 0.0
    %2456 = vmatpush1.xpose.msra.mxu0 0.0
    %2457 = vmatprep.subr.mxu0 0.0
    %2458 = vmatpush1.xpose.msra.mxu0 0.0
    %2459 = vmatprep.subr.mxu0 0.0
    %2460 = vmatpush1.xpose.msra.mxu0 0.0
    %2461 = vmatprep.subr.mxu0 0.0
    %2462 = vmatpush1.xpose.msra.mxu0 0.0
    %2463 = vmatprep.subr.mxu0 0.0
    %2464 = vmatpush1.xpose.msra.mxu0 0.0
    %2465 = vmatprep.subr.mxu0 0.0
    %2466 = vmatpush1.xpose.msra.mxu0 0.0
    %2467 = vmatprep.subr.mxu0 0.0
    %2468 = vmatpush1.xpose.msra.mxu0 0.0
    %2469 = vmatprep.subr.mxu0 0.0
    %2470 = vmatpush1.xpose.msra.mxu0 0.0
    %2471 = vmatprep.subr.mxu0 0.0
    %2472 = vmatpush1.xpose.msra.mxu0 0.0
    %2473 = vmatprep.subr.mxu0 0.0
    %2474 = vmatpush1.xpose.msra.mxu0 0.0
    %2475 = vmatprep.subr.mxu0 0.0
    %2476 = vmatpush1.xpose.msra.mxu0 0.0
    %2477 = vmatprep.mubr.f32.mxu0 0.0
    %2478 = vmatmul.mubr.f32.gmra.mrb[0].mxu0 %v2384
    %v2479 = vpop.f32.mrb[0].mxu0
    %v2480 = vadd.f32 0.0, %v2479
    %v2481 = vpop.f32.mrb[0].mxu0
    %2482 = vmatprep.mubr.f32.mxu0 0.0
    %2483 = vmatmul.mubr.f32.gmra.mrb[0].mxu0 %v2387
    %v2484 = vpop.f32.mrb[0].mxu0
    %v2485 = vadd.f32 0.0, %v2484
    %v2486 = vpop.f32.mrb[0].mxu0
    %2487 = vdwg.mxu0
    %vm2488 = vcmask 523264
    %2489 = vst.msk [vmem:[#allocation3] sm:$0xff] %vm2488, %v2480
    %2490 = vst.msk [vmem:[#allocation3 + $0x8] sm:$0xff] %vm2488, %v2485
    %v2491 = vsel %vm2488, %v2480, -inf
    %2492 = vmax.xlane.f32.xlu0 %v2491
    %v2493 = vpop.xlane.xlu0 %2492
    %v2494 = vsel %vm2488, %v2485, -inf
    %2495 = vmax.xlane.f32.xlu0 %v2494
    %v2496 = vpop.xlane.xlu0 %2495
    %v2497 = vsub.f32 %v2480, %v2493
    %v2498 = vsub.f32 %v2485, %v2496
    %v2499 = vmul.f32 %v2497, 1.442695
    %v2500 = vpow.pop %v2499
    %v2501 = vmul.f32 %v2498, 1.442695
    %v2502 = vpow.pop %v2501
    %v2503 = vsel %vm2488, %v2500, 0.0
    %2504 = vadd.xlane.f32.xlu0 %v2503
    %v2505 = vpop.xlane.xlu0 %2504
    %v2506 = vsel %vm2488, %v2502, 0.0
    %2507 = vadd.xlane.f32.xlu0 %v2506
    %v2508 = vpop.xlane.xlu0 %2507
    %v2509 = vlog2.pop %v2505
    %v2510 = vmul.f32 %v2509, 0.6931472
    %v2511 = vlog2.pop %v2508
    %v2512 = vmul.f32 %v2511, 0.6931472
    %v2513 = vadd.f32 %v2510, %v2493
    %v2514 = vadd.f32 %v2512, %v2496
    %v2515 = vsub.f32 %v2480, %v2513
    %v2516 = vsub.f32 %v2485, %v2514
    %v2517 = vld [vmem:[%s55] sm:$0xff]
    %v2518 = vld [vmem:[%s55 + $0x8] sm:$0xff]
    %2519 = vset.pattern.permute.xlu0 0
    %2520 = vperm.xlu0 %2519, %v2517
    %v2521 = vpop.permute.xlu0 %2520
    %2522 = vset.pattern.permute.xlu0 0
    %2523 = vperm.xlu0 %2522, %v2518
    %v2524 = vpop.permute.xlu0 %2523
    %vm2525 = vcmp.eq.s32.totalorder %v267, %v2521
    %vm2526 = vcmp.eq.s32.totalorder %v267, %v2524
    %vm2527 = vcmp.ge.s32.totalorder %v2517, 0
    %vm2528 = vcmp.ge.s32.totalorder %v2518, 0
    %v2529 = vsel %vm2527, 1, 0
    %v2530 = vsel %vm2528, 1, 0
    %2531 = vset.pattern.permute.xlu0 0
    %2532 = vperm.xlu0 %2531, %v2529
    %v2533 = vpop.permute.xlu0 %2532
    %2534 = vset.pattern.permute.xlu0 0
    %2535 = vperm.xlu0 %2534, %v2530
    %v2536 = vpop.permute.xlu0 %2535
    %vm2537 = vcmp.eq.s32.totalorder %v2533, 1
    %vm2538 = vcmp.eq.s32.totalorder %v2536, 1
    %vm2539 = vmand %vm2525, %vm2537
    %vm2540 = vmand %vm2526, %vm2538
    %v2541 = vsel %vm2539, 1.0, 0.0
    %v2542 = vsel %vm2540, 1.0, 0.0
    %v2543 = vsub.f32 0.0, %v2515
    %v2544 = vsub.f32 0.0, %v2516
    %v2545 = vmul.f32 %v2541, %v2543
    %v2546 = vmul.f32 %v2542, %v2544
    %v2547 = vsel %vm2488, %v2545, 0.0
    %v2548 = vsel %vm2488, %v2546, 0.0
    %v2549 = vadd.f32 %v2547, %v2548
    %2550 = vadd.xlane.f32.xlu0 %v2549
    %v2551 = vpop.xlane.xlu0 %2550
    %v2552 = vrot.slane %v2551, 4
    %v2553 = vadd.f32 %v2551, %v2552
    %v2554 = vrot.slane %v2553, 2
    %v2555 = vadd.f32 %v2553, %v2554
    %v2556 = vrot.slane %v2555, 1
    %v2557 = vadd.f32 %v2555, %v2556
    %s2558 = vtos %v2557
    %v2559 = vrcp.pop 14.0
    %s2560 = vtos %v2559
    %s2561 = smul.f32 %s2558, %s2560
    %v2562 = vstv %s2561
    %vm2563 = vcmask 0
    %2564 = vst.msk [vmem:[#allocation5] sm:$0x1] %vm2563, %v2562
    // Predicated region
    $region114: #{custom_model_forward.4} parent=1 // pred_check
      _
    $region115: #{custom_model_forward.4} parent=1 // pred_check_branch
      %2566 = sbr.rel (0) target = $region117
    $region116: #{custom_model_forward.4} parent=1 // pred_region
      %s2568 = ssub.s32 256, 256
      %2569 = vsyncadd [#allocation4], %s2568
      %s2570 = sshll.u32 [#allocation3], 4
      %s2571 = int_to_ptr.vmem [resolvable:$true] %s2570
      %2576 = dma.vmem_to_hbm [thread:$0]  %s2571, 256, %s57, [#allocation4], 128, 128, 8
    $region117: #{custom_model_forward.4} parent=1 // pred_fallthru
      _
    // Predicated region
    $region118: #{custom_model_forward.4} parent=1 // pred_check
      _
    $region119: #{custom_model_forward.4} parent=1 // pred_check_branch
      %2578 = sbr.rel (0) target = $region121
    $region120: #{custom_model_forward.4} parent=1 // pred_region
      %s2580 = ssub.s32 16, 16
      %2581 = vsyncadd [#allocation6], %s2580
      %s2583 = sshll.u32 [#allocation5], 4
      %s2584 = int_to_ptr.vmem [resolvable:$true] %s2583
      %2586 = dma.vmem_to_hbm [thread:$0]  %s2584, 16, %s59, [#allocation6]
    $region121: #{custom_model_forward.4} parent=1 // pred_fallthru
      _
    // Predicated region
    $region122: #{custom_model_forward.4} parent=1 // pred_check
      _
    $region123: #{custom_model_forward.4} parent=1 // pred_check_branch
      %2588 = sbr.rel (0) target = $region125
    $region124: #{custom_model_forward.4} parent=1 // pred_region
      %2589 = dma.done [#allocation4], 256
    $region125: #{custom_model_forward.4} parent=1 // pred_fallthru
      _
    // Predicated region
    $region126: #{custom_model_forward.4} parent=1 // pred_check
      _
    $region127: #{custom_model_forward.4} parent=1 // pred_check_branch
      %2591 = sbr.rel (0) target = $region129
    $region128: #{custom_model_forward.4} parent=1 // pred_region
      %2592 = dma.done [#allocation6], 16
    $region129: #{custom_model_forward.4} parent=1 // pred_fallthru
      _
    %2593 = vsyncpa [#allocation4], 1
    %2594 = vsyncpa [#allocation6], 1

</llo_original>
